<compile_context>
chip_gen: v7x
topology: tpu7x:2x2x1
jax: 0.10.0
libtpu: 0.0.40
codegen_flags: <defaults>
</compile_context>

<pallas_src>
import functools
import math

import jax
import jax.numpy as jnp
from jax.experimental import pallas as pl
from jax.experimental.pallas import tpu as pltpu


# --------------------------------------------------------------------------- #
# Kernel
# --------------------------------------------------------------------------- #
def _band_values(x, num_bands, use_double_angle):
    """Yield (sin(2^k*pi*x), cos(2^k*pi*x)) for k in range(num_bands).

    Double-angle path: exact sin/cos every 4 bands (re-seed), VPU recurrence
    s' = 2sc, c' = c^2 - s^2 in between -> 2*ceil(nb/4) transcendentals/elem.
    """
    s = c = None
    for k in range(num_bands):
        if (not use_double_angle) or (k % 4 == 0):
            fx = (float(2.0 ** k) * math.pi) * x
            s, c = jnp.sin(fx), jnp.cos(fx)
        else:
            s, c = 2.0 * s * c, c * c - s * s
        yield s, c


def _fourier_kernel(x_ref, o_ref, *, num_bands, use_double_angle, lane_dense_pack):
    """One (tile_b, F) input block -> one (tile_b, F*(1+2*num_bands)) output block."""
    F = x_ref.shape[-1]
    # Compute in f32 regardless of storage dtype (v5e EUP/VPU have no bf16 path).
    x = x_ref[...].astype(jnp.float32)

    if lane_dense_pack:
        # F is not a multiple of 128: per-band slice stores would be masked
        # sub-128-lane vst's.  Assemble one lane-dense slab (XLU lane concat)
        # and issue a single dense full-block store instead.
        parts = [x]
        for s, c in _band_values(x, num_bands, use_double_angle):
            parts.append(s)
            parts.append(c)
        o_ref[...] = jnp.concatenate(parts, axis=-1).astype(o_ref.dtype)
    else:
        # F % 128 == 0: every band slice is lane-aligned and dense already.
        o_ref[:, 0:F] = x.astype(o_ref.dtype)
        for k, (s, c) in enumerate(_band_values(x, num_bands, use_double_angle)):
            o_ref[:, (1 + 2 * k) * F:(2 + 2 * k) * F] = s.astype(o_ref.dtype)
            o_ref[:, (2 + 2 * k) * F:(3 + 2 * k) * F] = c.astype(o_ref.dtype)


# --------------------------------------------------------------------------- #
# Sizing helpers
# --------------------------------------------------------------------------- #
def _round_up(n, m):
    return ((n + m - 1) // m) * m


def _chip_config():
    """(vmem_capacity_bytes, num_tensorcores) — heuristic, perf-only."""
    vmem_bytes = None
    try:
        vmem_bytes = int(pltpu.get_tpu_info().vmem_capacity_bytes)
    except Exception:
        vmem_bytes = None
    kind = ""
    try:
        kind = jax.devices()[0].device_kind.lower()
    except Exception:
        pass
    two_tc = "v7" in kind
    if vmem_bytes is None:
        vmem_bytes = (64 << 20) if two_tc else (128 << 20)
    if not kind and vmem_bytes <= (64 << 20):
        two_tc = True  # 64 MiB/TC VMEM -> assume v7x-class (2 TCs)
    return vmem_bytes, (2 if two_tc else 1)


def _per_row_bytes(F, out_f, itemsize, lane_dense_pack):
    """VMEM bytes per batch row: double-buffered in/out blocks + f32 temps."""
    lane_pad = lambda n: _round_up(max(n, 1), 128)
    per_row = (2 * lane_pad(F) * itemsize          # double-buffered input block
               + 2 * lane_pad(out_f) * itemsize    # double-buffered output block
               + 3 * lane_pad(F) * 4)              # f32 x, sin, cos intermediates
    if lane_dense_pack:
        per_row += 2 * lane_pad(out_f) * 4         # f32 concat slab + band temps
    else:
        per_row += lane_pad(F) * 4
    return per_row


def _default_tile_b(B, F, out_f, itemsize, num_tc, vmem_capacity):
    """Batch tile: as big as the per-chip VMEM budget allows; only split for
    multi-TensorCore chips, and then deep enough to keep both cores pipelined."""
    mult = 16 if itemsize < 4 else 8
    lane_dense_pack = (F % 128) != 0
    per_row = _per_row_bytes(F, out_f, itemsize, lane_dense_pack)

    vmem_target = (vmem_capacity * 3) // 4          # ~48 MiB on v7x, ~96 MiB on v5e/v6e
    block_budget = (vmem_target * 2) // 3           # leave headroom for compiler scratch
    tb = max(mult, (block_budget // max(per_row, 1)) // mult * mult)

    B8 = _round_up(max(B, 1), mult)
    tb = min(tb, B8)

    if num_tc >= 2 and B8 >= 2 * mult:
        # v7x: the "parallel" grid axis is sharded across 2 TCs.  Prefer >=4
        # steps per core (8 total) when blocks stay >=512 rows; otherwise just
        # split the batch evenly in two so both cores have work.
        deep = _round_up(pl.cdiv(B8, 8), mult)
        if deep >= 512:
            tb = min(tb, deep)
        else:
            tb = min(tb, _round_up(pl.cdiv(B8, 2), mult))

    return max(mult, tb)


# --------------------------------------------------------------------------- #
# Public wrapper
# --------------------------------------------------------------------------- #
def fourier_encoding(x: jax.Array,
                     num_bands: int = 4,
                     tile_b: int | None = None,
                     use_double_angle: bool = True) -> jax.Array:
    """Pallas implementation of _FourierEncoding.forward for (*batch, F) inputs."""
    *batch_dims, F = x.shape
    B = int(math.prod(batch_dims)) if batch_dims else 1
    out_mult = 1 + 2 * num_bands
    out_f = F * out_mult
    itemsize = jnp.dtype(x.dtype).itemsize
    mult = 16 if itemsize < 4 else 8
    lane_dense_pack = (F % 128) != 0

    vmem_capacity, num_tc = _chip_config()
    if tile_b is None:
        tile_b = _default_tile_b(B, F, out_f, itemsize, num_tc, vmem_capacity)
    assert tile_b % mult == 0, (
        f"tile_b must be a multiple of {mult} for dtype {x.dtype} "
        f"(sublane packing granularity)")

    x2 = x.reshape(B, F)
    grid = (pl.cdiv(B, tile_b),)  # ragged final block: reads padded, writes masked

    per_row = _per_row_bytes(F, out_f, itemsize, lane_dense_pack)
    vmem_need = tile_b * per_row + (4 << 20)              # + compiler headroom
    vmem_limit = int(min((vmem_capacity * 3) // 4, max(32 << 20, vmem_need)))

    n_transc = 2 * ((num_bands + 3) // 4 if use_double_angle else num_bands)
    cost = pl.CostEstimate(
        flops=B * F * (6 * num_bands + 1),
        transcendentals=B * F * n_transc,
        bytes_accessed=itemsize * B * F * (1 + out_mult),
    )

    kernel = functools.partial(
        _fourier_kernel,
        num_bands=num_bands,
        use_double_angle=use_double_angle,
        lane_dense_pack=lane_dense_pack,
    )

    out = pl.pallas_call(
        kernel,
        out_shape=jax.ShapeDtypeStruct((B, out_f), x.dtype),
        grid=grid,
        # Full feature dim per block (equals array dim -> (8,128) rule satisfied);
        # tile only over the flattened batch dim.
        in_specs=[pl.BlockSpec((tile_b, F), lambda i: (i, 0))],
        out_specs=pl.BlockSpec((tile_b, out_f), lambda i: (i, 0)),
        compiler_params=pltpu.CompilerParams(
            dimension_semantics=("parallel",),
            vmem_limit_bytes=vmem_limit,
        ),
        cost_estimate=cost,
    )(x2)

    return out.reshape(*batch_dims, out_f)


def fourier_encoding_ref(x: jax.Array, num_bands: int = 4) -> jax.Array:
    """Pure-JAX reference (mirrors the PyTorch forward exactly)."""
    freqs = (2.0 ** jnp.arange(num_bands).astype(jnp.float32)) * jnp.pi
    enc = [x]
    for k in range(num_bands):
        enc.append(jnp.sin(freqs[k] * x))
        enc.append(jnp.cos(freqs[k] * x))
    return jnp.concatenate(enc, axis=-1)


# --------------------------------------------------------------------------- #
# Self-test
# --------------------------------------------------------------------------- #
if __name__ == "__main__":
    key = jax.random.PRNGKey(0)
    batch_shape = (2, 64)   # (*batch, features) -> 128 flattened rows
    F = 32
    num_bands = 4

    x = jax.random.normal(key, (*batch_shape, F), dtype=jnp.float32)

    # Default (double-angle, lane-dense pack since F=32) path.
    out = jax.block_until_ready(fourier_encoding(x, num_bands=num_bands))
    ref = fourier_encoding_ref(x, num_bands=num_bands)
    assert out.shape == (*batch_shape, F * (1 + 2 * num_bands)), out.shape
    assert out.dtype == x.dtype
    assert jnp.allclose(out, ref, atol=2e-4, rtol=1e-4), "mismatch (double-angle path)"

    # Exact sin/cos path at tight tolerance.
    out_exact = jax.block_until_ready(
        fourier_encoding(x, num_bands=num_bands, use_double_angle=False)
    )
    assert jnp.allclose(out_exact, ref, atol=1e-5, rtol=1e-5), "mismatch (exact path)"

    # Non-divisible batch exercises the ragged final block (no pad / no slice).
    x_odd = jax.random.normal(jax.random.PRNGKey(1), (37, F), dtype=jnp.float32)
    out_odd = jax.block_until_ready(
        fourier_encoding(x_odd, num_bands=num_bands, tile_b=16)
    )
    ref_odd = fourier_encoding_ref(x_odd, num_bands=num_bands)
    assert out_odd.shape == (37, F * (1 + 2 * num_bands))
    assert jnp.allclose(out_odd, ref_odd, atol=2e-4, rtol=1e-4), "mismatch (ragged batch)"

    # F multiple of 128 exercises the per-band dense-slice store path.
    x_wide = jax.random.normal(jax.random.PRNGKey(2), (24, 128), dtype=jnp.float32)
    out_wide = jax.block_until_ready(fourier_encoding(x_wide, num_bands=num_bands))
    ref_wide = fourier_encoding_ref(x_wide, num_bands=num_bands)
    assert out_wide.shape == (24, 128 * (1 + 2 * num_bands))
    assert jnp.allclose(out_wide, ref_wide, atol=2e-4, rtol=1e-4), "mismatch (F%128==0 path)"

    print("KERNEL_OK")
</pallas_src>

<mosaic_0001>
module attributes {stable_mosaic.version = 11 : i64} {
  func.func @_fourier_kernel(%arg0: i32, %arg1: memref<128x32xf32, #tpu.memory_space<vmem>>, %arg2: memref<128x288xf32, #tpu.memory_space<vmem>>) attributes {dimension_semantics = [#tpu.dimension_semantics<parallel>], iteration_bounds = array<i64: 1>, scalar_prefetch = 0 : i64, scratch_operands = 0 : i64, tpu.core_type = #tpu.core_type<tc>, window_params = [{transform_indices = @transform_0, window_bounds = array<i64: 128, 32>}, {transform_indices = @transform_1, window_bounds = array<i64: 128, 288>}]} {
    %c0 = arith.constant 0 : index
    %c0_0 = arith.constant 0 : index
    %0 = vector.load %arg1[%c0, %c0_0] : memref<128x32xf32, #tpu.memory_space<vmem>>, vector<128x32xf32>
    %cst = arith.constant 3.14159274 : f32
    %1 = vector.broadcast %cst : f32 to vector<128x32xf32>
    %2 = arith.mulf %1, %0 : vector<128x32xf32>
    %3 = math.sin %2 : vector<128x32xf32>
    %4 = math.cos %2 : vector<128x32xf32>
    %cst_1 = arith.constant 2.000000e+00 : f32
    %5 = vector.broadcast %cst_1 : f32 to vector<128x32xf32>
    %6 = arith.mulf %5, %3 : vector<128x32xf32>
    %7 = arith.mulf %6, %4 : vector<128x32xf32>
    %8 = arith.mulf %4, %4 : vector<128x32xf32>
    %9 = arith.mulf %3, %3 : vector<128x32xf32>
    %10 = arith.subf %8, %9 : vector<128x32xf32>
    %cst_2 = arith.constant 2.000000e+00 : f32
    %11 = vector.broadcast %cst_2 : f32 to vector<128x32xf32>
    %12 = arith.mulf %11, %7 : vector<128x32xf32>
    %13 = arith.mulf %12, %10 : vector<128x32xf32>
    %14 = arith.mulf %10, %10 : vector<128x32xf32>
    %15 = arith.mulf %7, %7 : vector<128x32xf32>
    %16 = arith.subf %14, %15 : vector<128x32xf32>
    %cst_3 = arith.constant 2.000000e+00 : f32
    %17 = vector.broadcast %cst_3 : f32 to vector<128x32xf32>
    %18 = arith.mulf %17, %13 : vector<128x32xf32>
    %19 = arith.mulf %18, %16 : vector<128x32xf32>
    %20 = arith.mulf %16, %16 : vector<128x32xf32>
    %21 = arith.mulf %13, %13 : vector<128x32xf32>
    %22 = arith.subf %20, %21 : vector<128x32xf32>
    %23 = tpu.concatenate %0, %3, %4, %7, %10, %13, %16, %19, %22 in 1 : vector<128x32xf32>, vector<128x32xf32>, vector<128x32xf32>, vector<128x32xf32>, vector<128x32xf32>, vector<128x32xf32>, vector<128x32xf32>, vector<128x32xf32>, vector<128x32xf32> -> vector<128x288xf32>
    %c0_4 = arith.constant 0 : index
    %c0_5 = arith.constant 0 : index
    %24 = vector.load %arg2[%c0_4, %c0_5] : memref<128x288xf32, #tpu.memory_space<vmem>>, vector<128x288xf32>
    tpu.vector_store %arg2[%c0_4, %c0_5], %23 {strides = array<i32>} : memref<128x288xf32, #tpu.memory_space<vmem>>, vector<128x288xf32>,
    return
  }
  func.func @transform_0(%arg0: i32) -> (i32, i32) {
    %c0_i32 = arith.constant 0 : i32
    %c0_i32_0 = arith.constant 0 : i32
    return %arg0, %c0_i32 : i32, i32
  }
  func.func @transform_1(%arg0: i32) -> (i32, i32) {
    %c0_i32 = arith.constant 0 : i32
    %c0_i32_0 = arith.constant 0 : i32
    return %arg0, %c0_i32 : i32, i32
  }
}

</mosaic_0001>

<llo_original>
// kernel: tpu_custom_call.1
$region0: #{tpu_custom_call.1}
  #allocation0 [shape = 'u32[]', space=smem, size = 0x4, offset = 0x4, fixed_abs, tag = 'smem constant byte address 0x4 - core index']
  #allocation1 [shape = 'u32[144,128]{1,0:T(1,128)}', space=vmem, size = 0x12000, scoped, tag = 'internal scratch']
  %s0 = inlined_call_operand.vmem [shape: f32[128,32], index: 0, kind: input, shape index: {}]
  %s1 = inlined_call_operand.vmem [shape: f32[128,288], index: 1, kind: output, shape index: {}]
  %s2 = sld [smem:[#allocation0]]
  $region14: #{tpu_custom_call.1} parent=0
    _
  %s4 = ssub.s32 1, %s2
  %s5 = scalar_select 0, %s4, %s2
  // Predicated region
  $region2: #{tpu_custom_call.1} parent=0 // pred_check
    _
  $region3: #{tpu_custom_call.1} parent=0 // pred_check_branch
    %7 = sbr.rel (0) target = $region5
  $region4: #{tpu_custom_call.1} parent=0 // pred_region
    _
  $region5: #{tpu_custom_call.1} parent=0 // pred_fallthru
    _
  %v8 = vld [vmem:[%s0] sm:$0xff]
  %v9 = vld [vmem:[%s0 + $0x8] sm:$0xff]
  %v10 = vld [vmem:[%s0 + $0x10] sm:$0xff]
  %v11 = vld [vmem:[%s0 + $0x18] sm:$0xff]
  %v12 = vld [vmem:[%s0 + $0x20] sm:$0xff]
  %v13 = vld [vmem:[%s0 + $0x28] sm:$0xff]
  %v14 = vld [vmem:[%s0 + $0x30] sm:$0xff]
  %v15 = vld [vmem:[%s0 + $0x38] sm:$0xff]
  %v16 = vld [vmem:[%s0 + $0x40] sm:$0xff]
  %v17 = vld [vmem:[%s0 + $0x48] sm:$0xff]
  %v18 = vld [vmem:[%s0 + $0x50] sm:$0xff]
  %v19 = vld [vmem:[%s0 + $0x58] sm:$0xff]
  %v20 = vld [vmem:[%s0 + $0x60] sm:$0xff]
  %v21 = vld [vmem:[%s0 + $0x68] sm:$0xff]
  %v22 = vld [vmem:[%s0 + $0x70] sm:$0xff]
  %v23 = vld [vmem:[%s0 + $0x78] sm:$0xff]
  %v24 = vmul.f32 %v8, 3.1415927
  %v25 = vmul.f32 %v9, 3.1415927
  %v26 = vmul.f32 %v10, 3.1415927
  %v27 = vmul.f32 %v11, 3.1415927
  %v28 = vmul.f32 %v12, 3.1415927
  %v29 = vmul.f32 %v13, 3.1415927
  %v30 = vmul.f32 %v14, 3.1415927
  %v31 = vmul.f32 %v15, 3.1415927
  %v32 = vmul.f32 %v16, 3.1415927
  %v33 = vmul.f32 %v17, 3.1415927
  %v34 = vmul.f32 %v18, 3.1415927
  %v35 = vmul.f32 %v19, 3.1415927
  %v36 = vmul.f32 %v20, 3.1415927
  %v37 = vmul.f32 %v21, 3.1415927
  %v38 = vmul.f32 %v22, 3.1415927
  %v39 = vmul.f32 %v23, 3.1415927
  %v40 = vand.u32 2147483647, %v24
  %vm41 = vcmp.le.f32.partialorder %v40, 0.7853982
  %vm42 = vcmp.lt.s32.totalorder %v24, 0
  %v43 = vand.u32 %v24, 2139095040
  %v44 = vshrl.u32 %v43, 23
  %v45 = vsub.s32 %v44, 127
  %v46 = vand.u32 2147483647, %v24
  %v47 = vand.u32 %v46, 8388607
  %v48 = vor.u32 %v47, 8388608
  %v49 = vsub.s32 0, %v48
  %v50 = vadd.s32 %v45, 1
  %vm51 = vcmp.gt.s32.totalorder %v50, 0
  %v52 = vsel %vm51, %v50, 0
  %v53 = vshrl.u32 %v52, 5
  %v54 = vand.u32 %v52, 31
  %v55 = vsub.s32 32, %v54
  %v56 = vshrl.u32 683565275, %v55
  %v57 = vshll.u32 683565275, %v54
  %v58 = vshrl.u32 2475754826, %v55
  %v59 = vor.u32 %v57, %v58
  %v60 = vshll.u32 2475754826, %v54
  %v61 = vshrl.u32 2131351028, %v55
  %v62 = vor.u32 %v60, %v61
  %v63 = vshll.u32 2131351028, %v54
  %v64 = vshrl.u32 2102212464, %v55
  %v65 = vor.u32 %v63, %v64
  %v66 = vshll.u32 2102212464, %v54
  %v67 = vshrl.u32 920167782, %v55
  %v68 = vor.u32 %v66, %v67
  %v69 = vshll.u32 920167782, %v54
  %v70 = vshrl.u32 1326507024, %v55
  %v71 = vor.u32 %v69, %v70
  %vm72 = vcmp.lt.s32.totalorder %v53, 1
  %vm73 = vcmp.lt.s32.totalorder %v53, 2
  %vm74 = vcmp.lt.s32.totalorder %v53, 3
  %vm75 = vcmp.lt.s32.totalorder %v53, 4
  %v76 = vsel %vm72, %v56, %v59
  %v77 = vsel %vm75, %v65, 2102212464
  %v78 = vsel %vm74, %v62, %v77
  %v79 = vsel %vm73, %v76, %v78
  %v80 = vsel %vm72, %v59, %v62
  %v81 = vsel %vm75, %v68, 920167782
  %v82 = vsel %vm74, %v65, %v81
  %v83 = vsel %vm73, %v80, %v82
  %v84 = vsel %vm72, %v62, %v65
  %v85 = vsel %vm75, %v71, 1326507024
  %v86 = vsel %vm74, %v68, %v85
  %v87 = vsel %vm73, %v84, %v86
  %v88 = vshll.u32 %v48, 8
  %v89 = vmul.u32.u64.compose %v88, %v87
  %v90 = vextract.low.u32 %v89
  %v91 = vextract.high.u32 %v89
  %v92 = vmul.u32.u64.compose %v88, %v83
  %v93 = vextract.low.u32 %v92
  %v94 = vextract.high.u32 %v92
  %v95 = vmul.u32 %v88, %v79
  %v96 = vadd.s32 %v91, %v93
  %vm97 = vc.u32 %v91, %v93
  %v98 = vadd.s32 %v94, 1
  %v99 = vsel %vm97, %v98, %v94
  %v100 = vadd.s32 %v95, %v99
  %v101 = vadd.s32 %v100, 536870912
  %v102 = vshrl.u32 %v101, 30
  %v103 = vshll.u32 %v102, 30
  %v104 = vsub.s32 %v100, %v103
  %vm105 = vcmp.lt.s32.totalorder %v104, 0
  %v106 = vsub.s32 0, %v104
  %v107 = vsel %vm105, %v106, %v104
  %v108 = vclz %v107
  %v109 = vsub.s32 %v108, 2
  %vm110 = vcmp.gt.s32.totalorder 0, %v109
  %v111 = vsel %vm110, 0, %v109
  %v112 = vsub.s32 32, %v111
  %v113 = vshll.u32 %v104, %v111
  %v114 = vshrl.u32 %v96, %v112
  %v115 = vor.u32 %v113, %v114
  %v116 = vsub.s32 4294967266, %v111
  %v117 = vadd.s32 %v116, 127
  %v118 = vshll.u32 %v117, 23
  %v119 = vor.u32 4788187, %v118
  %v120 = vand.u32 2147483647, %v119
  %v122 = vcvt.s32.f32 %v115
  %v123 = vmul.f32 %v122, %v120
  %v124 = vxor.u32 %v123, 2147483648
  %v125 = vsel %vm42, %v124, %v123
  %v126 = vsub.s32 4, %v102
  %v127 = vsel %vm42, %v126, %v102
  %v128 = vsel %vm41, %v24, %v125
  %v129 = vsel %vm41, 0, %v127
  %v130 = vcosq.f32.pop %v128
  %v131 = vsinq.f32.pop %v128
  %vm132 = vweird.f32 %v24
  %v133 = vadd.s32 %v129, 3
  %v134 = vand.u32 %v133, 3
  %vm135 = vcmp.lt.s32.totalorder %v134, 2
  %vm136 = vcmp.eq.s32.totalorder %v134, 0
  %v137 = vxor.u32 %v131, 2147483648
  %v138 = vsel %vm136, %v130, %v137
  %vm139 = vcmp.eq.s32.totalorder %v134, 2
  %v140 = vxor.u32 %v130, 2147483648
  %v141 = vsel %vm139, %v140, %v131
  %v142 = vsel %vm135, %v138, %v141
  %v143 = vsel %vm132, nan, %v142
  %v144 = vand.u32 2147483647, %v25
  %vm145 = vcmp.le.f32.partialorder %v144, 0.7853982
  %vm146 = vcmp.lt.s32.totalorder %v25, 0
  %v147 = vand.u32 %v25, 2139095040
  %v148 = vshrl.u32 %v147, 23
  %v149 = vsub.s32 %v148, 127
  %v150 = vand.u32 2147483647, %v25
  %v151 = vand.u32 %v150, 8388607
  %v152 = vor.u32 %v151, 8388608
  %v153 = vsub.s32 0, %v152
  %v154 = vadd.s32 %v149, 1
  %vm155 = vcmp.gt.s32.totalorder %v154, 0
  %v156 = vsel %vm155, %v154, 0
  %v157 = vshrl.u32 %v156, 5
  %v158 = vand.u32 %v156, 31
  %v159 = vsub.s32 32, %v158
  %v160 = vshrl.u32 683565275, %v159
  %v161 = vshll.u32 683565275, %v158
  %v162 = vshrl.u32 2475754826, %v159
  %v163 = vor.u32 %v161, %v162
  %v164 = vshll.u32 2475754826, %v158
  %v165 = vshrl.u32 2131351028, %v159
  %v166 = vor.u32 %v164, %v165
  %v167 = vshll.u32 2131351028, %v158
  %v168 = vshrl.u32 2102212464, %v159
  %v169 = vor.u32 %v167, %v168
  %v170 = vshll.u32 2102212464, %v158
  %v171 = vshrl.u32 920167782, %v159
  %v172 = vor.u32 %v170, %v171
  %v173 = vshll.u32 920167782, %v158
  %v174 = vshrl.u32 1326507024, %v159
  %v175 = vor.u32 %v173, %v174
  %vm176 = vcmp.lt.s32.totalorder %v157, 1
  %vm177 = vcmp.lt.s32.totalorder %v157, 2
  %vm178 = vcmp.lt.s32.totalorder %v157, 3
  %vm179 = vcmp.lt.s32.totalorder %v157, 4
  %v180 = vsel %vm176, %v160, %v163
  %v181 = vsel %vm179, %v169, 2102212464
  %v182 = vsel %vm178, %v166, %v181
  %v183 = vsel %vm177, %v180, %v182
  %v184 = vsel %vm176, %v163, %v166
  %v185 = vsel %vm179, %v172, 920167782
  %v186 = vsel %vm178, %v169, %v185
  %v187 = vsel %vm177, %v184, %v186
  %v188 = vsel %vm176, %v166, %v169
  %v189 = vsel %vm179, %v175, 1326507024
  %v190 = vsel %vm178, %v172, %v189
  %v191 = vsel %vm177, %v188, %v190
  %v192 = vshll.u32 %v152, 8
  %v193 = vmul.u32.u64.compose %v192, %v191
  %v194 = vextract.low.u32 %v193
  %v195 = vextract.high.u32 %v193
  %v196 = vmul.u32.u64.compose %v192, %v187
  %v197 = vextract.low.u32 %v196
  %v198 = vextract.high.u32 %v196
  %v199 = vmul.u32 %v192, %v183
  %v200 = vadd.s32 %v195, %v197
  %vm201 = vc.u32 %v195, %v197
  %v202 = vadd.s32 %v198, 1
  %v203 = vsel %vm201, %v202, %v198
  %v204 = vadd.s32 %v199, %v203
  %v205 = vadd.s32 %v204, 536870912
  %v206 = vshrl.u32 %v205, 30
  %v207 = vshll.u32 %v206, 30
  %v208 = vsub.s32 %v204, %v207
  %vm209 = vcmp.lt.s32.totalorder %v208, 0
  %v210 = vsub.s32 0, %v208
  %v211 = vsel %vm209, %v210, %v208
  %v212 = vclz %v211
  %v213 = vsub.s32 %v212, 2
  %vm214 = vcmp.gt.s32.totalorder 0, %v213
  %v215 = vsel %vm214, 0, %v213
  %v216 = vsub.s32 32, %v215
  %v217 = vshll.u32 %v208, %v215
  %v218 = vshrl.u32 %v200, %v216
  %v219 = vor.u32 %v217, %v218
  %v220 = vsub.s32 4294967266, %v215
  %v221 = vadd.s32 %v220, 127
  %v222 = vshll.u32 %v221, 23
  %v223 = vor.u32 4788187, %v222
  %v224 = vand.u32 2147483647, %v223
  %v226 = vcvt.s32.f32 %v219
  %v227 = vmul.f32 %v226, %v224
  %v228 = vxor.u32 %v227, 2147483648
  %v229 = vsel %vm146, %v228, %v227
  %v230 = vsub.s32 4, %v206
  %v231 = vsel %vm146, %v230, %v206
  %v232 = vsel %vm145, %v25, %v229
  %v233 = vsel %vm145, 0, %v231
  %v234 = vcosq.f32.pop %v232
  %v235 = vsinq.f32.pop %v232
  %vm236 = vweird.f32 %v25
  %v237 = vadd.s32 %v233, 3
  %v238 = vand.u32 %v237, 3
  %vm239 = vcmp.lt.s32.totalorder %v238, 2
  %vm240 = vcmp.eq.s32.totalorder %v238, 0
  %v241 = vxor.u32 %v235, 2147483648
  %v242 = vsel %vm240, %v234, %v241
  %vm243 = vcmp.eq.s32.totalorder %v238, 2
  %v244 = vxor.u32 %v234, 2147483648
  %v245 = vsel %vm243, %v244, %v235
  %v246 = vsel %vm239, %v242, %v245
  %v247 = vsel %vm236, nan, %v246
  %v248 = vand.u32 2147483647, %v26
  %vm249 = vcmp.le.f32.partialorder %v248, 0.7853982
  %vm250 = vcmp.lt.s32.totalorder %v26, 0
  %v251 = vand.u32 %v26, 2139095040
  %v252 = vshrl.u32 %v251, 23
  %v253 = vsub.s32 %v252, 127
  %v254 = vand.u32 2147483647, %v26
  %v255 = vand.u32 %v254, 8388607
  %v256 = vor.u32 %v255, 8388608
  %v257 = vsub.s32 0, %v256
  %v258 = vadd.s32 %v253, 1
  %vm259 = vcmp.gt.s32.totalorder %v258, 0
  %v260 = vsel %vm259, %v258, 0
  %v261 = vshrl.u32 %v260, 5
  %v262 = vand.u32 %v260, 31
  %v263 = vsub.s32 32, %v262
  %v264 = vshrl.u32 683565275, %v263
  %v265 = vshll.u32 683565275, %v262
  %v266 = vshrl.u32 2475754826, %v263
  %v267 = vor.u32 %v265, %v266
  %v268 = vshll.u32 2475754826, %v262
  %v269 = vshrl.u32 2131351028, %v263
  %v270 = vor.u32 %v268, %v269
  %v271 = vshll.u32 2131351028, %v262
  %v272 = vshrl.u32 2102212464, %v263
  %v273 = vor.u32 %v271, %v272
  %v274 = vshll.u32 2102212464, %v262
  %v275 = vshrl.u32 920167782, %v263
  %v276 = vor.u32 %v274, %v275
  %v277 = vshll.u32 920167782, %v262
  %v278 = vshrl.u32 1326507024, %v263
  %v279 = vor.u32 %v277, %v278
  %vm280 = vcmp.lt.s32.totalorder %v261, 1
  %vm281 = vcmp.lt.s32.totalorder %v261, 2
  %vm282 = vcmp.lt.s32.totalorder %v261, 3
  %vm283 = vcmp.lt.s32.totalorder %v261, 4
  %v284 = vsel %vm280, %v264, %v267
  %v285 = vsel %vm283, %v273, 2102212464
  %v286 = vsel %vm282, %v270, %v285
  %v287 = vsel %vm281, %v284, %v286
  %v288 = vsel %vm280, %v267, %v270
  %v289 = vsel %vm283, %v276, 920167782
  %v290 = vsel %vm282, %v273, %v289
  %v291 = vsel %vm281, %v288, %v290
  %v292 = vsel %vm280, %v270, %v273
  %v293 = vsel %vm283, %v279, 1326507024
  %v294 = vsel %vm282, %v276, %v293
  %v295 = vsel %vm281, %v292, %v294
  %v296 = vshll.u32 %v256, 8
  %v297 = vmul.u32.u64.compose %v296, %v295
  %v298 = vextract.low.u32 %v297
  %v299 = vextract.high.u32 %v297
  %v300 = vmul.u32.u64.compose %v296, %v291
  %v301 = vextract.low.u32 %v300
  %v302 = vextract.high.u32 %v300
  %v303 = vmul.u32 %v296, %v287
  %v304 = vadd.s32 %v299, %v301
  %vm305 = vc.u32 %v299, %v301
  %v306 = vadd.s32 %v302, 1
  %v307 = vsel %vm305, %v306, %v302
  %v308 = vadd.s32 %v303, %v307
  %v309 = vadd.s32 %v308, 536870912
  %v310 = vshrl.u32 %v309, 30
  %v311 = vshll.u32 %v310, 30
  %v312 = vsub.s32 %v308, %v311
  %vm313 = vcmp.lt.s32.totalorder %v312, 0
  %v314 = vsub.s32 0, %v312
  %v315 = vsel %vm313, %v314, %v312
  %v316 = vclz %v315
  %v317 = vsub.s32 %v316, 2
  %vm318 = vcmp.gt.s32.totalorder 0, %v317
  %v319 = vsel %vm318, 0, %v317
  %v320 = vsub.s32 32, %v319
  %v321 = vshll.u32 %v312, %v319
  %v322 = vshrl.u32 %v304, %v320
  %v323 = vor.u32 %v321, %v322
  %v324 = vsub.s32 4294967266, %v319
  %v325 = vadd.s32 %v324, 127
  %v326 = vshll.u32 %v325, 23
  %v327 = vor.u32 4788187, %v326
  %v328 = vand.u32 2147483647, %v327
  %v330 = vcvt.s32.f32 %v323
  %v331 = vmul.f32 %v330, %v328
  %v332 = vxor.u32 %v331, 2147483648
  %v333 = vsel %vm250, %v332, %v331
  %v334 = vsub.s32 4, %v310
  %v335 = vsel %vm250, %v334, %v310
  %v336 = vsel %vm249, %v26, %v333
  %v337 = vsel %vm249, 0, %v335
  %v338 = vcosq.f32.pop %v336
  %v339 = vsinq.f32.pop %v336
  %vm340 = vweird.f32 %v26
  %v341 = vadd.s32 %v337, 3
  %v342 = vand.u32 %v341, 3
  %vm343 = vcmp.lt.s32.totalorder %v342, 2
  %vm344 = vcmp.eq.s32.totalorder %v342, 0
  %v345 = vxor.u32 %v339, 2147483648
  %v346 = vsel %vm344, %v338, %v345
  %vm347 = vcmp.eq.s32.totalorder %v342, 2
  %v348 = vxor.u32 %v338, 2147483648
  %v349 = vsel %vm347, %v348, %v339
  %v350 = vsel %vm343, %v346, %v349
  %v351 = vsel %vm340, nan, %v350
  %v352 = vand.u32 2147483647, %v27
  %vm353 = vcmp.le.f32.partialorder %v352, 0.7853982
  %vm354 = vcmp.lt.s32.totalorder %v27, 0
  %v355 = vand.u32 %v27, 2139095040
  %v356 = vshrl.u32 %v355, 23
  %v357 = vsub.s32 %v356, 127
  %v358 = vand.u32 2147483647, %v27
  %v359 = vand.u32 %v358, 8388607
  %v360 = vor.u32 %v359, 8388608
  %v361 = vsub.s32 0, %v360
  %v362 = vadd.s32 %v357, 1
  %vm363 = vcmp.gt.s32.totalorder %v362, 0
  %v364 = vsel %vm363, %v362, 0
  %v365 = vshrl.u32 %v364, 5
  %v366 = vand.u32 %v364, 31
  %v367 = vsub.s32 32, %v366
  %v368 = vshrl.u32 683565275, %v367
  %v369 = vshll.u32 683565275, %v366
  %v370 = vshrl.u32 2475754826, %v367
  %v371 = vor.u32 %v369, %v370
  %v372 = vshll.u32 2475754826, %v366
  %v373 = vshrl.u32 2131351028, %v367
  %v374 = vor.u32 %v372, %v373
  %v375 = vshll.u32 2131351028, %v366
  %v376 = vshrl.u32 2102212464, %v367
  %v377 = vor.u32 %v375, %v376
  %v378 = vshll.u32 2102212464, %v366
  %v379 = vshrl.u32 920167782, %v367
  %v380 = vor.u32 %v378, %v379
  %v381 = vshll.u32 920167782, %v366
  %v382 = vshrl.u32 1326507024, %v367
  %v383 = vor.u32 %v381, %v382
  %vm384 = vcmp.lt.s32.totalorder %v365, 1
  %vm385 = vcmp.lt.s32.totalorder %v365, 2
  %vm386 = vcmp.lt.s32.totalorder %v365, 3
  %vm387 = vcmp.lt.s32.totalorder %v365, 4
  %v388 = vsel %vm384, %v368, %v371
  %v389 = vsel %vm387, %v377, 2102212464
  %v390 = vsel %vm386, %v374, %v389
  %v391 = vsel %vm385, %v388, %v390
  %v392 = vsel %vm384, %v371, %v374
  %v393 = vsel %vm387, %v380, 920167782
  %v394 = vsel %vm386, %v377, %v393
  %v395 = vsel %vm385, %v392, %v394
  %v396 = vsel %vm384, %v374, %v377
  %v397 = vsel %vm387, %v383, 1326507024
  %v398 = vsel %vm386, %v380, %v397
  %v399 = vsel %vm385, %v396, %v398
  %v400 = vshll.u32 %v360, 8
  %v401 = vmul.u32.u64.compose %v400, %v399
  %v402 = vextract.low.u32 %v401
  %v403 = vextract.high.u32 %v401
  %v404 = vmul.u32.u64.compose %v400, %v395
  %v405 = vextract.low.u32 %v404
  %v406 = vextract.high.u32 %v404
  %v407 = vmul.u32 %v400, %v391
  %v408 = vadd.s32 %v403, %v405
  %vm409 = vc.u32 %v403, %v405
  %v410 = vadd.s32 %v406, 1
  %v411 = vsel %vm409, %v410, %v406
  %v412 = vadd.s32 %v407, %v411
  %v413 = vadd.s32 %v412, 536870912
  %v414 = vshrl.u32 %v413, 30
  %v415 = vshll.u32 %v414, 30
  %v416 = vsub.s32 %v412, %v415
  %vm417 = vcmp.lt.s32.totalorder %v416, 0
  %v418 = vsub.s32 0, %v416
  %v419 = vsel %vm417, %v418, %v416
  %v420 = vclz %v419
  %v421 = vsub.s32 %v420, 2
  %vm422 = vcmp.gt.s32.totalorder 0, %v421
  %v423 = vsel %vm422, 0, %v421
  %v424 = vsub.s32 32, %v423
  %v425 = vshll.u32 %v416, %v423
  %v426 = vshrl.u32 %v408, %v424
  %v427 = vor.u32 %v425, %v426
  %v428 = vsub.s32 4294967266, %v423
  %v429 = vadd.s32 %v428, 127
  %v430 = vshll.u32 %v429, 23
  %v431 = vor.u32 4788187, %v430
  %v432 = vand.u32 2147483647, %v431
  %v434 = vcvt.s32.f32 %v427
  %v435 = vmul.f32 %v434, %v432
  %v436 = vxor.u32 %v435, 2147483648
  %v437 = vsel %vm354, %v436, %v435
  %v438 = vsub.s32 4, %v414
  %v439 = vsel %vm354, %v438, %v414
  %v440 = vsel %vm353, %v27, %v437
  %v441 = vsel %vm353, 0, %v439
  %v442 = vcosq.f32.pop %v440
  %v443 = vsinq.f32.pop %v440
  %vm444 = vweird.f32 %v27
  %v445 = vadd.s32 %v441, 3
  %v446 = vand.u32 %v445, 3
  %vm447 = vcmp.lt.s32.totalorder %v446, 2
  %vm448 = vcmp.eq.s32.totalorder %v446, 0
  %v449 = vxor.u32 %v443, 2147483648
  %v450 = vsel %vm448, %v442, %v449
  %vm451 = vcmp.eq.s32.totalorder %v446, 2
  %v452 = vxor.u32 %v442, 2147483648
  %v453 = vsel %vm451, %v452, %v443
  %v454 = vsel %vm447, %v450, %v453
  %v455 = vsel %vm444, nan, %v454
  %v456 = vand.u32 2147483647, %v28
  %vm457 = vcmp.le.f32.partialorder %v456, 0.7853982
  %vm458 = vcmp.lt.s32.totalorder %v28, 0
  %v459 = vand.u32 %v28, 2139095040
  %v460 = vshrl.u32 %v459, 23
  %v461 = vsub.s32 %v460, 127
  %v462 = vand.u32 2147483647, %v28
  %v463 = vand.u32 %v462, 8388607
  %v464 = vor.u32 %v463, 8388608
  %v465 = vsub.s32 0, %v464
  %v466 = vadd.s32 %v461, 1
  %vm467 = vcmp.gt.s32.totalorder %v466, 0
  %v468 = vsel %vm467, %v466, 0
  %v469 = vshrl.u32 %v468, 5
  %v470 = vand.u32 %v468, 31
  %v471 = vsub.s32 32, %v470
  %v472 = vshrl.u32 683565275, %v471
  %v473 = vshll.u32 683565275, %v470
  %v474 = vshrl.u32 2475754826, %v471
  %v475 = vor.u32 %v473, %v474
  %v476 = vshll.u32 2475754826, %v470
  %v477 = vshrl.u32 2131351028, %v471
  %v478 = vor.u32 %v476, %v477
  %v479 = vshll.u32 2131351028, %v470
  %v480 = vshrl.u32 2102212464, %v471
  %v481 = vor.u32 %v479, %v480
  %v482 = vshll.u32 2102212464, %v470
  %v483 = vshrl.u32 920167782, %v471
  %v484 = vor.u32 %v482, %v483
  %v485 = vshll.u32 920167782, %v470
  %v486 = vshrl.u32 1326507024, %v471
  %v487 = vor.u32 %v485, %v486
  %vm488 = vcmp.lt.s32.totalorder %v469, 1
  %vm489 = vcmp.lt.s32.totalorder %v469, 2
  %vm490 = vcmp.lt.s32.totalorder %v469, 3
  %vm491 = vcmp.lt.s32.totalorder %v469, 4
  %v492 = vsel %vm488, %v472, %v475
  %v493 = vsel %vm491, %v481, 2102212464
  %v494 = vsel %vm490, %v478, %v493
  %v495 = vsel %vm489, %v492, %v494
  %v496 = vsel %vm488, %v475, %v478
  %v497 = vsel %vm491, %v484, 920167782
  %v498 = vsel %vm490, %v481, %v497
  %v499 = vsel %vm489, %v496, %v498
  %v500 = vsel %vm488, %v478, %v481
  %v501 = vsel %vm491, %v487, 1326507024
  %v502 = vsel %vm490, %v484, %v501
  %v503 = vsel %vm489, %v500, %v502
  %v504 = vshll.u32 %v464, 8
  %v505 = vmul.u32.u64.compose %v504, %v503
  %v506 = vextract.low.u32 %v505
  %v507 = vextract.high.u32 %v505
  %v508 = vmul.u32.u64.compose %v504, %v499
  %v509 = vextract.low.u32 %v508
  %v510 = vextract.high.u32 %v508
  %v511 = vmul.u32 %v504, %v495
  %v512 = vadd.s32 %v507, %v509
  %vm513 = vc.u32 %v507, %v509
  %v514 = vadd.s32 %v510, 1
  %v515 = vsel %vm513, %v514, %v510
  %v516 = vadd.s32 %v511, %v515
  %v517 = vadd.s32 %v516, 536870912
  %v518 = vshrl.u32 %v517, 30
  %v519 = vshll.u32 %v518, 30
  %v520 = vsub.s32 %v516, %v519
  %vm521 = vcmp.lt.s32.totalorder %v520, 0
  %v522 = vsub.s32 0, %v520
  %v523 = vsel %vm521, %v522, %v520
  %v524 = vclz %v523
  %v525 = vsub.s32 %v524, 2
  %vm526 = vcmp.gt.s32.totalorder 0, %v525
  %v527 = vsel %vm526, 0, %v525
  %v528 = vsub.s32 32, %v527
  %v529 = vshll.u32 %v520, %v527
  %v530 = vshrl.u32 %v512, %v528
  %v531 = vor.u32 %v529, %v530
  %v532 = vsub.s32 4294967266, %v527
  %v533 = vadd.s32 %v532, 127
  %v534 = vshll.u32 %v533, 23
  %v535 = vor.u32 4788187, %v534
  %v536 = vand.u32 2147483647, %v535
  %v538 = vcvt.s32.f32 %v531
  %v539 = vmul.f32 %v538, %v536
  %v540 = vxor.u32 %v539, 2147483648
  %v541 = vsel %vm458, %v540, %v539
  %v542 = vsub.s32 4, %v518
  %v543 = vsel %vm458, %v542, %v518
  %v544 = vsel %vm457, %v28, %v541
  %v545 = vsel %vm457, 0, %v543
  %v546 = vcosq.f32.pop %v544
  %v547 = vsinq.f32.pop %v544
  %vm548 = vweird.f32 %v28
  %v549 = vadd.s32 %v545, 3
  %v550 = vand.u32 %v549, 3
  %vm551 = vcmp.lt.s32.totalorder %v550, 2
  %vm552 = vcmp.eq.s32.totalorder %v550, 0
  %v553 = vxor.u32 %v547, 2147483648
  %v554 = vsel %vm552, %v546, %v553
  %vm555 = vcmp.eq.s32.totalorder %v550, 2
  %v556 = vxor.u32 %v546, 2147483648
  %v557 = vsel %vm555, %v556, %v547
  %v558 = vsel %vm551, %v554, %v557
  %v559 = vsel %vm548, nan, %v558
  %v560 = vand.u32 2147483647, %v29
  %vm561 = vcmp.le.f32.partialorder %v560, 0.7853982
  %vm562 = vcmp.lt.s32.totalorder %v29, 0
  %v563 = vand.u32 %v29, 2139095040
  %v564 = vshrl.u32 %v563, 23
  %v565 = vsub.s32 %v564, 127
  %v566 = vand.u32 2147483647, %v29
  %v567 = vand.u32 %v566, 8388607
  %v568 = vor.u32 %v567, 8388608
  %v569 = vsub.s32 0, %v568
  %v570 = vadd.s32 %v565, 1
  %vm571 = vcmp.gt.s32.totalorder %v570, 0
  %v572 = vsel %vm571, %v570, 0
  %v573 = vshrl.u32 %v572, 5
  %v574 = vand.u32 %v572, 31
  %v575 = vsub.s32 32, %v574
  %v576 = vshrl.u32 683565275, %v575
  %v577 = vshll.u32 683565275, %v574
  %v578 = vshrl.u32 2475754826, %v575
  %v579 = vor.u32 %v577, %v578
  %v580 = vshll.u32 2475754826, %v574
  %v581 = vshrl.u32 2131351028, %v575
  %v582 = vor.u32 %v580, %v581
  %v583 = vshll.u32 2131351028, %v574
  %v584 = vshrl.u32 2102212464, %v575
  %v585 = vor.u32 %v583, %v584
  %v586 = vshll.u32 2102212464, %v574
  %v587 = vshrl.u32 920167782, %v575
  %v588 = vor.u32 %v586, %v587
  %v589 = vshll.u32 920167782, %v574
  %v590 = vshrl.u32 1326507024, %v575
  %v591 = vor.u32 %v589, %v590
  %vm592 = vcmp.lt.s32.totalorder %v573, 1
  %vm593 = vcmp.lt.s32.totalorder %v573, 2
  %vm594 = vcmp.lt.s32.totalorder %v573, 3
  %vm595 = vcmp.lt.s32.totalorder %v573, 4
  %v596 = vsel %vm592, %v576, %v579
  %v597 = vsel %vm595, %v585, 2102212464
  %v598 = vsel %vm594, %v582, %v597
  %v599 = vsel %vm593, %v596, %v598
  %v600 = vsel %vm592, %v579, %v582
  %v601 = vsel %vm595, %v588, 920167782
  %v602 = vsel %vm594, %v585, %v601
  %v603 = vsel %vm593, %v600, %v602
  %v604 = vsel %vm592, %v582, %v585
  %v605 = vsel %vm595, %v591, 1326507024
  %v606 = vsel %vm594, %v588, %v605
  %v607 = vsel %vm593, %v604, %v606
  %v608 = vshll.u32 %v568, 8
  %v609 = vmul.u32.u64.compose %v608, %v607
  %v610 = vextract.low.u32 %v609
  %v611 = vextract.high.u32 %v609
  %v612 = vmul.u32.u64.compose %v608, %v603
  %v613 = vextract.low.u32 %v612
  %v614 = vextract.high.u32 %v612
  %v615 = vmul.u32 %v608, %v599
  %v616 = vadd.s32 %v611, %v613
  %vm617 = vc.u32 %v611, %v613
  %v618 = vadd.s32 %v614, 1
  %v619 = vsel %vm617, %v618, %v614
  %v620 = vadd.s32 %v615, %v619
  %v621 = vadd.s32 %v620, 536870912
  %v622 = vshrl.u32 %v621, 30
  %v623 = vshll.u32 %v622, 30
  %v624 = vsub.s32 %v620, %v623
  %vm625 = vcmp.lt.s32.totalorder %v624, 0
  %v626 = vsub.s32 0, %v624
  %v627 = vsel %vm625, %v626, %v624
  %v628 = vclz %v627
  %v629 = vsub.s32 %v628, 2
  %vm630 = vcmp.gt.s32.totalorder 0, %v629
  %v631 = vsel %vm630, 0, %v629
  %v632 = vsub.s32 32, %v631
  %v633 = vshll.u32 %v624, %v631
  %v634 = vshrl.u32 %v616, %v632
  %v635 = vor.u32 %v633, %v634
  %v636 = vsub.s32 4294967266, %v631
  %v637 = vadd.s32 %v636, 127
  %v638 = vshll.u32 %v637, 23
  %v639 = vor.u32 4788187, %v638
  %v640 = vand.u32 2147483647, %v639
  %v642 = vcvt.s32.f32 %v635
  %v643 = vmul.f32 %v642, %v640
  %v644 = vxor.u32 %v643, 2147483648
  %v645 = vsel %vm562, %v644, %v643
  %v646 = vsub.s32 4, %v622
  %v647 = vsel %vm562, %v646, %v622
  %v648 = vsel %vm561, %v29, %v645
  %v649 = vsel %vm561, 0, %v647
  %v650 = vcosq.f32.pop %v648
  %v651 = vsinq.f32.pop %v648
  %vm652 = vweird.f32 %v29
  %v653 = vadd.s32 %v649, 3
  %v654 = vand.u32 %v653, 3
  %vm655 = vcmp.lt.s32.totalorder %v654, 2
  %vm656 = vcmp.eq.s32.totalorder %v654, 0
  %v657 = vxor.u32 %v651, 2147483648
  %v658 = vsel %vm656, %v650, %v657
  %vm659 = vcmp.eq.s32.totalorder %v654, 2
  %v660 = vxor.u32 %v650, 2147483648
  %v661 = vsel %vm659, %v660, %v651
  %v662 = vsel %vm655, %v658, %v661
  %v663 = vsel %vm652, nan, %v662
  %v664 = vand.u32 2147483647, %v30
  %vm665 = vcmp.le.f32.partialorder %v664, 0.7853982
  %vm666 = vcmp.lt.s32.totalorder %v30, 0
  %v667 = vand.u32 %v30, 2139095040
  %v668 = vshrl.u32 %v667, 23
  %v669 = vsub.s32 %v668, 127
  %v670 = vand.u32 2147483647, %v30
  %v671 = vand.u32 %v670, 8388607
  %v672 = vor.u32 %v671, 8388608
  %v673 = vsub.s32 0, %v672
  %v674 = vadd.s32 %v669, 1
  %vm675 = vcmp.gt.s32.totalorder %v674, 0
  %v676 = vsel %vm675, %v674, 0
  %v677 = vshrl.u32 %v676, 5
  %v678 = vand.u32 %v676, 31
  %v679 = vsub.s32 32, %v678
  %v680 = vshrl.u32 683565275, %v679
  %v681 = vshll.u32 683565275, %v678
  %v682 = vshrl.u32 2475754826, %v679
  %v683 = vor.u32 %v681, %v682
  %v684 = vshll.u32 2475754826, %v678
  %v685 = vshrl.u32 2131351028, %v679
  %v686 = vor.u32 %v684, %v685
  %v687 = vshll.u32 2131351028, %v678
  %v688 = vshrl.u32 2102212464, %v679
  %v689 = vor.u32 %v687, %v688
  %v690 = vshll.u32 2102212464, %v678
  %v691 = vshrl.u32 920167782, %v679
  %v692 = vor.u32 %v690, %v691
  %v693 = vshll.u32 920167782, %v678
  %v694 = vshrl.u32 1326507024, %v679
  %v695 = vor.u32 %v693, %v694
  %vm696 = vcmp.lt.s32.totalorder %v677, 1
  %vm697 = vcmp.lt.s32.totalorder %v677, 2
  %vm698 = vcmp.lt.s32.totalorder %v677, 3
  %vm699 = vcmp.lt.s32.totalorder %v677, 4
  %v700 = vsel %vm696, %v680, %v683
  %v701 = vsel %vm699, %v689, 2102212464
  %v702 = vsel %vm698, %v686, %v701
  %v703 = vsel %vm697, %v700, %v702
  %v704 = vsel %vm696, %v683, %v686
  %v705 = vsel %vm699, %v692, 920167782
  %v706 = vsel %vm698, %v689, %v705
  %v707 = vsel %vm697, %v704, %v706
  %v708 = vsel %vm696, %v686, %v689
  %v709 = vsel %vm699, %v695, 1326507024
  %v710 = vsel %vm698, %v692, %v709
  %v711 = vsel %vm697, %v708, %v710
  %v712 = vshll.u32 %v672, 8
  %v713 = vmul.u32.u64.compose %v712, %v711
  %v714 = vextract.low.u32 %v713
  %v715 = vextract.high.u32 %v713
  %v716 = vmul.u32.u64.compose %v712, %v707
  %v717 = vextract.low.u32 %v716
  %v718 = vextract.high.u32 %v716
  %v719 = vmul.u32 %v712, %v703
  %v720 = vadd.s32 %v715, %v717
  %vm721 = vc.u32 %v715, %v717
  %v722 = vadd.s32 %v718, 1
  %v723 = vsel %vm721, %v722, %v718
  %v724 = vadd.s32 %v719, %v723
  %v725 = vadd.s32 %v724, 536870912
  %v726 = vshrl.u32 %v725, 30
  %v727 = vshll.u32 %v726, 30
  %v728 = vsub.s32 %v724, %v727
  %vm729 = vcmp.lt.s32.totalorder %v728, 0
  %v730 = vsub.s32 0, %v728
  %v731 = vsel %vm729, %v730, %v728
  %v732 = vclz %v731
  %v733 = vsub.s32 %v732, 2
  %vm734 = vcmp.gt.s32.totalorder 0, %v733
  %v735 = vsel %vm734, 0, %v733
  %v736 = vsub.s32 32, %v735
  %v737 = vshll.u32 %v728, %v735
  %v738 = vshrl.u32 %v720, %v736
  %v739 = vor.u32 %v737, %v738
  %v740 = vsub.s32 4294967266, %v735
  %v741 = vadd.s32 %v740, 127
  %v742 = vshll.u32 %v741, 23
  %v743 = vor.u32 4788187, %v742
  %v744 = vand.u32 2147483647, %v743
  %v746 = vcvt.s32.f32 %v739
  %v747 = vmul.f32 %v746, %v744
  %v748 = vxor.u32 %v747, 2147483648
  %v749 = vsel %vm666, %v748, %v747
  %v750 = vsub.s32 4, %v726
  %v751 = vsel %vm666, %v750, %v726
  %v752 = vsel %vm665, %v30, %v749
  %v753 = vsel %vm665, 0, %v751
  %v754 = vcosq.f32.pop %v752
  %v755 = vsinq.f32.pop %v752
  %vm756 = vweird.f32 %v30
  %v757 = vadd.s32 %v753, 3
  %v758 = vand.u32 %v757, 3
  %vm759 = vcmp.lt.s32.totalorder %v758, 2
  %vm760 = vcmp.eq.s32.totalorder %v758, 0
  %v761 = vxor.u32 %v755, 2147483648
  %v762 = vsel %vm760, %v754, %v761
  %vm763 = vcmp.eq.s32.totalorder %v758, 2
  %v764 = vxor.u32 %v754, 2147483648
  %v765 = vsel %vm763, %v764, %v755
  %v766 = vsel %vm759, %v762, %v765
  %v767 = vsel %vm756, nan, %v766
  %v768 = vand.u32 2147483647, %v31
  %vm769 = vcmp.le.f32.partialorder %v768, 0.7853982
  %vm770 = vcmp.lt.s32.totalorder %v31, 0
  %v771 = vand.u32 %v31, 2139095040
  %v772 = vshrl.u32 %v771, 23
  %v773 = vsub.s32 %v772, 127
  %v774 = vand.u32 2147483647, %v31
  %v775 = vand.u32 %v774, 8388607
  %v776 = vor.u32 %v775, 8388608
  %v777 = vsub.s32 0, %v776
  %v778 = vadd.s32 %v773, 1
  %vm779 = vcmp.gt.s32.totalorder %v778, 0
  %v780 = vsel %vm779, %v778, 0
  %v781 = vshrl.u32 %v780, 5
  %v782 = vand.u32 %v780, 31
  %v783 = vsub.s32 32, %v782
  %v784 = vshrl.u32 683565275, %v783
  %v785 = vshll.u32 683565275, %v782
  %v786 = vshrl.u32 2475754826, %v783
  %v787 = vor.u32 %v785, %v786
  %v788 = vshll.u32 2475754826, %v782
  %v789 = vshrl.u32 2131351028, %v783
  %v790 = vor.u32 %v788, %v789
  %v791 = vshll.u32 2131351028, %v782
  %v792 = vshrl.u32 2102212464, %v783
  %v793 = vor.u32 %v791, %v792
  %v794 = vshll.u32 2102212464, %v782
  %v795 = vshrl.u32 920167782, %v783
  %v796 = vor.u32 %v794, %v795
  %v797 = vshll.u32 920167782, %v782
  %v798 = vshrl.u32 1326507024, %v783
  %v799 = vor.u32 %v797, %v798
  %vm800 = vcmp.lt.s32.totalorder %v781, 1
  %vm801 = vcmp.lt.s32.totalorder %v781, 2
  %vm802 = vcmp.lt.s32.totalorder %v781, 3
  %vm803 = vcmp.lt.s32.totalorder %v781, 4
  %v804 = vsel %vm800, %v784, %v787
  %v805 = vsel %vm803, %v793, 2102212464
  %v806 = vsel %vm802, %v790, %v805
  %v807 = vsel %vm801, %v804, %v806
  %v808 = vsel %vm800, %v787, %v790
  %v809 = vsel %vm803, %v796, 920167782
  %v810 = vsel %vm802, %v793, %v809
  %v811 = vsel %vm801, %v808, %v810
  %v812 = vsel %vm800, %v790, %v793
  %v813 = vsel %vm803, %v799, 1326507024
  %v814 = vsel %vm802, %v796, %v813
  %v815 = vsel %vm801, %v812, %v814
  %v816 = vshll.u32 %v776, 8
  %v817 = vmul.u32.u64.compose %v816, %v815
  %v818 = vextract.low.u32 %v817
  %v819 = vextract.high.u32 %v817
  %v820 = vmul.u32.u64.compose %v816, %v811
  %v821 = vextract.low.u32 %v820
  %v822 = vextract.high.u32 %v820
  %v823 = vmul.u32 %v816, %v807
  %v824 = vadd.s32 %v819, %v821
  %vm825 = vc.u32 %v819, %v821
  %v826 = vadd.s32 %v822, 1
  %v827 = vsel %vm825, %v826, %v822
  %v828 = vadd.s32 %v823, %v827
  %v829 = vadd.s32 %v828, 536870912
  %v830 = vshrl.u32 %v829, 30
  %v831 = vshll.u32 %v830, 30
  %v832 = vsub.s32 %v828, %v831
  %vm833 = vcmp.lt.s32.totalorder %v832, 0
  %v834 = vsub.s32 0, %v832
  %v835 = vsel %vm833, %v834, %v832
  %v836 = vclz %v835
  %v837 = vsub.s32 %v836, 2
  %vm838 = vcmp.gt.s32.totalorder 0, %v837
  %v839 = vsel %vm838, 0, %v837
  %v840 = vsub.s32 32, %v839
  %v841 = vshll.u32 %v832, %v839
  %v842 = vshrl.u32 %v824, %v840
  %v843 = vor.u32 %v841, %v842
  %v844 = vsub.s32 4294967266, %v839
  %v845 = vadd.s32 %v844, 127
  %v846 = vshll.u32 %v845, 23
  %v847 = vor.u32 4788187, %v846
  %v848 = vand.u32 2147483647, %v847
  %v850 = vcvt.s32.f32 %v843
  %v851 = vmul.f32 %v850, %v848
  %v852 = vxor.u32 %v851, 2147483648
  %v853 = vsel %vm770, %v852, %v851
  %v854 = vsub.s32 4, %v830
  %v855 = vsel %vm770, %v854, %v830
  %v856 = vsel %vm769, %v31, %v853
  %v857 = vsel %vm769, 0, %v855
  %v858 = vcosq.f32.pop %v856
  %v859 = vsinq.f32.pop %v856
  %vm860 = vweird.f32 %v31
  %v861 = vadd.s32 %v857, 3
  %v862 = vand.u32 %v861, 3
  %vm863 = vcmp.lt.s32.totalorder %v862, 2
  %vm864 = vcmp.eq.s32.totalorder %v862, 0
  %v865 = vxor.u32 %v859, 2147483648
  %v866 = vsel %vm864, %v858, %v865
  %vm867 = vcmp.eq.s32.totalorder %v862, 2
  %v868 = vxor.u32 %v858, 2147483648
  %v869 = vsel %vm867, %v868, %v859
  %v870 = vsel %vm863, %v866, %v869
  %v871 = vsel %vm860, nan, %v870
  %v872 = vand.u32 2147483647, %v32
  %vm873 = vcmp.le.f32.partialorder %v872, 0.7853982
  %vm874 = vcmp.lt.s32.totalorder %v32, 0
  %v875 = vand.u32 %v32, 2139095040
  %v876 = vshrl.u32 %v875, 23
  %v877 = vsub.s32 %v876, 127
  %v878 = vand.u32 2147483647, %v32
  %v879 = vand.u32 %v878, 8388607
  %v880 = vor.u32 %v879, 8388608
  %v881 = vsub.s32 0, %v880
  %v882 = vadd.s32 %v877, 1
  %vm883 = vcmp.gt.s32.totalorder %v882, 0
  %v884 = vsel %vm883, %v882, 0
  %v885 = vshrl.u32 %v884, 5
  %v886 = vand.u32 %v884, 31
  %v887 = vsub.s32 32, %v886
  %v888 = vshrl.u32 683565275, %v887
  %v889 = vshll.u32 683565275, %v886
  %v890 = vshrl.u32 2475754826, %v887
  %v891 = vor.u32 %v889, %v890
  %v892 = vshll.u32 2475754826, %v886
  %v893 = vshrl.u32 2131351028, %v887
  %v894 = vor.u32 %v892, %v893
  %v895 = vshll.u32 2131351028, %v886
  %v896 = vshrl.u32 2102212464, %v887
  %v897 = vor.u32 %v895, %v896
  %v898 = vshll.u32 2102212464, %v886
  %v899 = vshrl.u32 920167782, %v887
  %v900 = vor.u32 %v898, %v899
  %v901 = vshll.u32 920167782, %v886
  %v902 = vshrl.u32 1326507024, %v887
  %v903 = vor.u32 %v901, %v902
  %vm904 = vcmp.lt.s32.totalorder %v885, 1
  %vm905 = vcmp.lt.s32.totalorder %v885, 2
  %vm906 = vcmp.lt.s32.totalorder %v885, 3
  %vm907 = vcmp.lt.s32.totalorder %v885, 4
  %v908 = vsel %vm904, %v888, %v891
  %v909 = vsel %vm907, %v897, 2102212464
  %v910 = vsel %vm906, %v894, %v909
  %v911 = vsel %vm905, %v908, %v910
  %v912 = vsel %vm904, %v891, %v894
  %v913 = vsel %vm907, %v900, 920167782
  %v914 = vsel %vm906, %v897, %v913
  %v915 = vsel %vm905, %v912, %v914
  %v916 = vsel %vm904, %v894, %v897
  %v917 = vsel %vm907, %v903, 1326507024
  %v918 = vsel %vm906, %v900, %v917
  %v919 = vsel %vm905, %v916, %v918
  %v920 = vshll.u32 %v880, 8
  %v921 = vmul.u32.u64.compose %v920, %v919
  %v922 = vextract.low.u32 %v921
  %v923 = vextract.high.u32 %v921
  %v924 = vmul.u32.u64.compose %v920, %v915
  %v925 = vextract.low.u32 %v924
  %v926 = vextract.high.u32 %v924
  %v927 = vmul.u32 %v920, %v911
  %v928 = vadd.s32 %v923, %v925
  %vm929 = vc.u32 %v923, %v925
  %v930 = vadd.s32 %v926, 1
  %v931 = vsel %vm929, %v930, %v926
  %v932 = vadd.s32 %v927, %v931
  %v933 = vadd.s32 %v932, 536870912
  %v934 = vshrl.u32 %v933, 30
  %v935 = vshll.u32 %v934, 30
  %v936 = vsub.s32 %v932, %v935
  %vm937 = vcmp.lt.s32.totalorder %v936, 0
  %v938 = vsub.s32 0, %v936
  %v939 = vsel %vm937, %v938, %v936
  %v940 = vclz %v939
  %v941 = vsub.s32 %v940, 2
  %vm942 = vcmp.gt.s32.totalorder 0, %v941
  %v943 = vsel %vm942, 0, %v941
  %v944 = vsub.s32 32, %v943
  %v945 = vshll.u32 %v936, %v943
  %v946 = vshrl.u32 %v928, %v944
  %v947 = vor.u32 %v945, %v946
  %v948 = vsub.s32 4294967266, %v943
  %v949 = vadd.s32 %v948, 127
  %v950 = vshll.u32 %v949, 23
  %v951 = vor.u32 4788187, %v950
  %v952 = vand.u32 2147483647, %v951
  %v954 = vcvt.s32.f32 %v947
  %v955 = vmul.f32 %v954, %v952
  %v956 = vxor.u32 %v955, 2147483648
  %v957 = vsel %vm874, %v956, %v955
  %v958 = vsub.s32 4, %v934
  %v959 = vsel %vm874, %v958, %v934
  %v960 = vsel %vm873, %v32, %v957
  %v961 = vsel %vm873, 0, %v959
  %v962 = vcosq.f32.pop %v960
  %v963 = vsinq.f32.pop %v960
  %vm964 = vweird.f32 %v32
  %v965 = vadd.s32 %v961, 3
  %v966 = vand.u32 %v965, 3
  %vm967 = vcmp.lt.s32.totalorder %v966, 2
  %vm968 = vcmp.eq.s32.totalorder %v966, 0
  %v969 = vxor.u32 %v963, 2147483648
  %v970 = vsel %vm968, %v962, %v969
  %vm971 = vcmp.eq.s32.totalorder %v966, 2
  %v972 = vxor.u32 %v962, 2147483648
  %v973 = vsel %vm971, %v972, %v963
  %v974 = vsel %vm967, %v970, %v973
  %v975 = vsel %vm964, nan, %v974
  %v976 = vand.u32 2147483647, %v33
  %vm977 = vcmp.le.f32.partialorder %v976, 0.7853982
  %vm978 = vcmp.lt.s32.totalorder %v33, 0
  %v979 = vand.u32 %v33, 2139095040
  %v980 = vshrl.u32 %v979, 23
  %v981 = vsub.s32 %v980, 127
  %v982 = vand.u32 2147483647, %v33
  %v983 = vand.u32 %v982, 8388607
  %v984 = vor.u32 %v983, 8388608
  %v985 = vsub.s32 0, %v984
  %v986 = vadd.s32 %v981, 1
  %vm987 = vcmp.gt.s32.totalorder %v986, 0
  %v988 = vsel %vm987, %v986, 0
  %v989 = vshrl.u32 %v988, 5
  %v990 = vand.u32 %v988, 31
  %v991 = vsub.s32 32, %v990
  %v992 = vshrl.u32 683565275, %v991
  %v993 = vshll.u32 683565275, %v990
  %v994 = vshrl.u32 2475754826, %v991
  %v995 = vor.u32 %v993, %v994
  %v996 = vshll.u32 2475754826, %v990
  %v997 = vshrl.u32 2131351028, %v991
  %v998 = vor.u32 %v996, %v997
  %v999 = vshll.u32 2131351028, %v990
  %v1000 = vshrl.u32 2102212464, %v991
  %v1001 = vor.u32 %v999, %v1000
  %v1002 = vshll.u32 2102212464, %v990
  %v1003 = vshrl.u32 920167782, %v991
  %v1004 = vor.u32 %v1002, %v1003
  %v1005 = vshll.u32 920167782, %v990
  %v1006 = vshrl.u32 1326507024, %v991
  %v1007 = vor.u32 %v1005, %v1006
  %vm1008 = vcmp.lt.s32.totalorder %v989, 1
  %vm1009 = vcmp.lt.s32.totalorder %v989, 2
  %vm1010 = vcmp.lt.s32.totalorder %v989, 3
  %vm1011 = vcmp.lt.s32.totalorder %v989, 4
  %v1012 = vsel %vm1008, %v992, %v995
  %v1013 = vsel %vm1011, %v1001, 2102212464
  %v1014 = vsel %vm1010, %v998, %v1013
  %v1015 = vsel %vm1009, %v1012, %v1014
  %v1016 = vsel %vm1008, %v995, %v998
  %v1017 = vsel %vm1011, %v1004, 920167782
  %v1018 = vsel %vm1010, %v1001, %v1017
  %v1019 = vsel %vm1009, %v1016, %v1018
  %v1020 = vsel %vm1008, %v998, %v1001
  %v1021 = vsel %vm1011, %v1007, 1326507024
  %v1022 = vsel %vm1010, %v1004, %v1021
  %v1023 = vsel %vm1009, %v1020, %v1022
  %v1024 = vshll.u32 %v984, 8
  %v1025 = vmul.u32.u64.compose %v1024, %v1023
  %v1026 = vextract.low.u32 %v1025
  %v1027 = vextract.high.u32 %v1025
  %v1028 = vmul.u32.u64.compose %v1024, %v1019
  %v1029 = vextract.low.u32 %v1028
  %v1030 = vextract.high.u32 %v1028
  %v1031 = vmul.u32 %v1024, %v1015
  %v1032 = vadd.s32 %v1027, %v1029
  %vm1033 = vc.u32 %v1027, %v1029
  %v1034 = vadd.s32 %v1030, 1
  %v1035 = vsel %vm1033, %v1034, %v1030
  %v1036 = vadd.s32 %v1031, %v1035
  %v1037 = vadd.s32 %v1036, 536870912
  %v1038 = vshrl.u32 %v1037, 30
  %v1039 = vshll.u32 %v1038, 30
  %v1040 = vsub.s32 %v1036, %v1039
  %vm1041 = vcmp.lt.s32.totalorder %v1040, 0
  %v1042 = vsub.s32 0, %v1040
  %v1043 = vsel %vm1041, %v1042, %v1040
  %v1044 = vclz %v1043
  %v1045 = vsub.s32 %v1044, 2
  %vm1046 = vcmp.gt.s32.totalorder 0, %v1045
  %v1047 = vsel %vm1046, 0, %v1045
  %v1048 = vsub.s32 32, %v1047
  %v1049 = vshll.u32 %v1040, %v1047
  %v1050 = vshrl.u32 %v1032, %v1048
  %v1051 = vor.u32 %v1049, %v1050
  %v1052 = vsub.s32 4294967266, %v1047
  %v1053 = vadd.s32 %v1052, 127
  %v1054 = vshll.u32 %v1053, 23
  %v1055 = vor.u32 4788187, %v1054
  %v1056 = vand.u32 2147483647, %v1055
  %v1058 = vcvt.s32.f32 %v1051
  %v1059 = vmul.f32 %v1058, %v1056
  %v1060 = vxor.u32 %v1059, 2147483648
  %v1061 = vsel %vm978, %v1060, %v1059
  %v1062 = vsub.s32 4, %v1038
  %v1063 = vsel %vm978, %v1062, %v1038
  %v1064 = vsel %vm977, %v33, %v1061
  %v1065 = vsel %vm977, 0, %v1063
  %v1066 = vcosq.f32.pop %v1064
  %v1067 = vsinq.f32.pop %v1064
  %vm1068 = vweird.f32 %v33
  %v1069 = vadd.s32 %v1065, 3
  %v1070 = vand.u32 %v1069, 3
  %vm1071 = vcmp.lt.s32.totalorder %v1070, 2
  %vm1072 = vcmp.eq.s32.totalorder %v1070, 0
  %v1073 = vxor.u32 %v1067, 2147483648
  %v1074 = vsel %vm1072, %v1066, %v1073
  %vm1075 = vcmp.eq.s32.totalorder %v1070, 2
  %v1076 = vxor.u32 %v1066, 2147483648
  %v1077 = vsel %vm1075, %v1076, %v1067
  %v1078 = vsel %vm1071, %v1074, %v1077
  %v1079 = vsel %vm1068, nan, %v1078
  %v1080 = vand.u32 2147483647, %v34
  %vm1081 = vcmp.le.f32.partialorder %v1080, 0.7853982
  %vm1082 = vcmp.lt.s32.totalorder %v34, 0
  %v1083 = vand.u32 %v34, 2139095040
  %v1084 = vshrl.u32 %v1083, 23
  %v1085 = vsub.s32 %v1084, 127
  %v1086 = vand.u32 2147483647, %v34
  %v1087 = vand.u32 %v1086, 8388607
  %v1088 = vor.u32 %v1087, 8388608
  %v1089 = vsub.s32 0, %v1088
  %v1090 = vadd.s32 %v1085, 1
  %vm1091 = vcmp.gt.s32.totalorder %v1090, 0
  %v1092 = vsel %vm1091, %v1090, 0
  %v1093 = vshrl.u32 %v1092, 5
  %v1094 = vand.u32 %v1092, 31
  %v1095 = vsub.s32 32, %v1094
  %v1096 = vshrl.u32 683565275, %v1095
  %v1097 = vshll.u32 683565275, %v1094
  %v1098 = vshrl.u32 2475754826, %v1095
  %v1099 = vor.u32 %v1097, %v1098
  %v1100 = vshll.u32 2475754826, %v1094
  %v1101 = vshrl.u32 2131351028, %v1095
  %v1102 = vor.u32 %v1100, %v1101
  %v1103 = vshll.u32 2131351028, %v1094
  %v1104 = vshrl.u32 2102212464, %v1095
  %v1105 = vor.u32 %v1103, %v1104
  %v1106 = vshll.u32 2102212464, %v1094
  %v1107 = vshrl.u32 920167782, %v1095
  %v1108 = vor.u32 %v1106, %v1107
  %v1109 = vshll.u32 920167782, %v1094
  %v1110 = vshrl.u32 1326507024, %v1095
  %v1111 = vor.u32 %v1109, %v1110
  %vm1112 = vcmp.lt.s32.totalorder %v1093, 1
  %vm1113 = vcmp.lt.s32.totalorder %v1093, 2
  %vm1114 = vcmp.lt.s32.totalorder %v1093, 3
  %vm1115 = vcmp.lt.s32.totalorder %v1093, 4
  %v1116 = vsel %vm1112, %v1096, %v1099
  %v1117 = vsel %vm1115, %v1105, 2102212464
  %v1118 = vsel %vm1114, %v1102, %v1117
  %v1119 = vsel %vm1113, %v1116, %v1118
  %v1120 = vsel %vm1112, %v1099, %v1102
  %v1121 = vsel %vm1115, %v1108, 920167782
  %v1122 = vsel %vm1114, %v1105, %v1121
  %v1123 = vsel %vm1113, %v1120, %v1122
  %v1124 = vsel %vm1112, %v1102, %v1105
  %v1125 = vsel %vm1115, %v1111, 1326507024
  %v1126 = vsel %vm1114, %v1108, %v1125
  %v1127 = vsel %vm1113, %v1124, %v1126
  %v1128 = vshll.u32 %v1088, 8
  %v1129 = vmul.u32.u64.compose %v1128, %v1127
  %v1130 = vextract.low.u32 %v1129
  %v1131 = vextract.high.u32 %v1129
  %v1132 = vmul.u32.u64.compose %v1128, %v1123
  %v1133 = vextract.low.u32 %v1132
  %v1134 = vextract.high.u32 %v1132
  %v1135 = vmul.u32 %v1128, %v1119
  %v1136 = vadd.s32 %v1131, %v1133
  %vm1137 = vc.u32 %v1131, %v1133
  %v1138 = vadd.s32 %v1134, 1
  %v1139 = vsel %vm1137, %v1138, %v1134
  %v1140 = vadd.s32 %v1135, %v1139
  %v1141 = vadd.s32 %v1140, 536870912
  %v1142 = vshrl.u32 %v1141, 30
  %v1143 = vshll.u32 %v1142, 30
  %v1144 = vsub.s32 %v1140, %v1143
  %vm1145 = vcmp.lt.s32.totalorder %v1144, 0
  %v1146 = vsub.s32 0, %v1144
  %v1147 = vsel %vm1145, %v1146, %v1144
  %v1148 = vclz %v1147
  %v1149 = vsub.s32 %v1148, 2
  %vm1150 = vcmp.gt.s32.totalorder 0, %v1149
  %v1151 = vsel %vm1150, 0, %v1149
  %v1152 = vsub.s32 32, %v1151
  %v1153 = vshll.u32 %v1144, %v1151
  %v1154 = vshrl.u32 %v1136, %v1152
  %v1155 = vor.u32 %v1153, %v1154
  %v1156 = vsub.s32 4294967266, %v1151
  %v1157 = vadd.s32 %v1156, 127
  %v1158 = vshll.u32 %v1157, 23
  %v1159 = vor.u32 4788187, %v1158
  %v1160 = vand.u32 2147483647, %v1159
  %v1162 = vcvt.s32.f32 %v1155
  %v1163 = vmul.f32 %v1162, %v1160
  %v1164 = vxor.u32 %v1163, 2147483648
  %v1165 = vsel %vm1082, %v1164, %v1163
  %v1166 = vsub.s32 4, %v1142
  %v1167 = vsel %vm1082, %v1166, %v1142
  %v1168 = vsel %vm1081, %v34, %v1165
  %v1169 = vsel %vm1081, 0, %v1167
  %v1170 = vcosq.f32.pop %v1168
  %v1171 = vsinq.f32.pop %v1168
  %vm1172 = vweird.f32 %v34
  %v1173 = vadd.s32 %v1169, 3
  %v1174 = vand.u32 %v1173, 3
  %vm1175 = vcmp.lt.s32.totalorder %v1174, 2
  %vm1176 = vcmp.eq.s32.totalorder %v1174, 0
  %v1177 = vxor.u32 %v1171, 2147483648
  %v1178 = vsel %vm1176, %v1170, %v1177
  %vm1179 = vcmp.eq.s32.totalorder %v1174, 2
  %v1180 = vxor.u32 %v1170, 2147483648
  %v1181 = vsel %vm1179, %v1180, %v1171
  %v1182 = vsel %vm1175, %v1178, %v1181
  %v1183 = vsel %vm1172, nan, %v1182
  %v1184 = vand.u32 2147483647, %v35
  %vm1185 = vcmp.le.f32.partialorder %v1184, 0.7853982
  %vm1186 = vcmp.lt.s32.totalorder %v35, 0
  %v1187 = vand.u32 %v35, 2139095040
  %v1188 = vshrl.u32 %v1187, 23
  %v1189 = vsub.s32 %v1188, 127
  %v1190 = vand.u32 2147483647, %v35
  %v1191 = vand.u32 %v1190, 8388607
  %v1192 = vor.u32 %v1191, 8388608
  %v1193 = vsub.s32 0, %v1192
  %v1194 = vadd.s32 %v1189, 1
  %vm1195 = vcmp.gt.s32.totalorder %v1194, 0
  %v1196 = vsel %vm1195, %v1194, 0
  %v1197 = vshrl.u32 %v1196, 5
  %v1198 = vand.u32 %v1196, 31
  %v1199 = vsub.s32 32, %v1198
  %v1200 = vshrl.u32 683565275, %v1199
  %v1201 = vshll.u32 683565275, %v1198
  %v1202 = vshrl.u32 2475754826, %v1199
  %v1203 = vor.u32 %v1201, %v1202
  %v1204 = vshll.u32 2475754826, %v1198
  %v1205 = vshrl.u32 2131351028, %v1199
  %v1206 = vor.u32 %v1204, %v1205
  %v1207 = vshll.u32 2131351028, %v1198
  %v1208 = vshrl.u32 2102212464, %v1199
  %v1209 = vor.u32 %v1207, %v1208
  %v1210 = vshll.u32 2102212464, %v1198
  %v1211 = vshrl.u32 920167782, %v1199
  %v1212 = vor.u32 %v1210, %v1211
  %v1213 = vshll.u32 920167782, %v1198
  %v1214 = vshrl.u32 1326507024, %v1199
  %v1215 = vor.u32 %v1213, %v1214
  %vm1216 = vcmp.lt.s32.totalorder %v1197, 1
  %vm1217 = vcmp.lt.s32.totalorder %v1197, 2
  %vm1218 = vcmp.lt.s32.totalorder %v1197, 3
  %vm1219 = vcmp.lt.s32.totalorder %v1197, 4
  %v1220 = vsel %vm1216, %v1200, %v1203
  %v1221 = vsel %vm1219, %v1209, 2102212464
  %v1222 = vsel %vm1218, %v1206, %v1221
  %v1223 = vsel %vm1217, %v1220, %v1222
  %v1224 = vsel %vm1216, %v1203, %v1206
  %v1225 = vsel %vm1219, %v1212, 920167782
  %v1226 = vsel %vm1218, %v1209, %v1225
  %v1227 = vsel %vm1217, %v1224, %v1226
  %v1228 = vsel %vm1216, %v1206, %v1209
  %v1229 = vsel %vm1219, %v1215, 1326507024
  %v1230 = vsel %vm1218, %v1212, %v1229
  %v1231 = vsel %vm1217, %v1228, %v1230
  %v1232 = vshll.u32 %v1192, 8
  %v1233 = vmul.u32.u64.compose %v1232, %v1231
  %v1234 = vextract.low.u32 %v1233
  %v1235 = vextract.high.u32 %v1233
  %v1236 = vmul.u32.u64.compose %v1232, %v1227
  %v1237 = vextract.low.u32 %v1236
  %v1238 = vextract.high.u32 %v1236
  %v1239 = vmul.u32 %v1232, %v1223
  %v1240 = vadd.s32 %v1235, %v1237
  %vm1241 = vc.u32 %v1235, %v1237
  %v1242 = vadd.s32 %v1238, 1
  %v1243 = vsel %vm1241, %v1242, %v1238
  %v1244 = vadd.s32 %v1239, %v1243
  %v1245 = vadd.s32 %v1244, 536870912
  %v1246 = vshrl.u32 %v1245, 30
  %v1247 = vshll.u32 %v1246, 30
  %v1248 = vsub.s32 %v1244, %v1247
  %vm1249 = vcmp.lt.s32.totalorder %v1248, 0
  %v1250 = vsub.s32 0, %v1248
  %v1251 = vsel %vm1249, %v1250, %v1248
  %v1252 = vclz %v1251
  %v1253 = vsub.s32 %v1252, 2
  %vm1254 = vcmp.gt.s32.totalorder 0, %v1253
  %v1255 = vsel %vm1254, 0, %v1253
  %v1256 = vsub.s32 32, %v1255
  %v1257 = vshll.u32 %v1248, %v1255
  %v1258 = vshrl.u32 %v1240, %v1256
  %v1259 = vor.u32 %v1257, %v1258
  %v1260 = vsub.s32 4294967266, %v1255
  %v1261 = vadd.s32 %v1260, 127
  %v1262 = vshll.u32 %v1261, 23
  %v1263 = vor.u32 4788187, %v1262
  %v1264 = vand.u32 2147483647, %v1263
  %v1266 = vcvt.s32.f32 %v1259
  %v1267 = vmul.f32 %v1266, %v1264
  %v1268 = vxor.u32 %v1267, 2147483648
  %v1269 = vsel %vm1186, %v1268, %v1267
  %v1270 = vsub.s32 4, %v1246
  %v1271 = vsel %vm1186, %v1270, %v1246
  %v1272 = vsel %vm1185, %v35, %v1269
  %v1273 = vsel %vm1185, 0, %v1271
  %v1274 = vcosq.f32.pop %v1272
  %v1275 = vsinq.f32.pop %v1272
  %vm1276 = vweird.f32 %v35
  %v1277 = vadd.s32 %v1273, 3
  %v1278 = vand.u32 %v1277, 3
  %vm1279 = vcmp.lt.s32.totalorder %v1278, 2
  %vm1280 = vcmp.eq.s32.totalorder %v1278, 0
  %v1281 = vxor.u32 %v1275, 2147483648
  %v1282 = vsel %vm1280, %v1274, %v1281
  %vm1283 = vcmp.eq.s32.totalorder %v1278, 2
  %v1284 = vxor.u32 %v1274, 2147483648
  %v1285 = vsel %vm1283, %v1284, %v1275
  %v1286 = vsel %vm1279, %v1282, %v1285
  %v1287 = vsel %vm1276, nan, %v1286
  %v1288 = vand.u32 2147483647, %v36
  %vm1289 = vcmp.le.f32.partialorder %v1288, 0.7853982
  %vm1290 = vcmp.lt.s32.totalorder %v36, 0
  %v1291 = vand.u32 %v36, 2139095040
  %v1292 = vshrl.u32 %v1291, 23
  %v1293 = vsub.s32 %v1292, 127
  %v1294 = vand.u32 2147483647, %v36
  %v1295 = vand.u32 %v1294, 8388607
  %v1296 = vor.u32 %v1295, 8388608
  %v1297 = vsub.s32 0, %v1296
  %v1298 = vadd.s32 %v1293, 1
  %vm1299 = vcmp.gt.s32.totalorder %v1298, 0
  %v1300 = vsel %vm1299, %v1298, 0
  %v1301 = vshrl.u32 %v1300, 5
  %v1302 = vand.u32 %v1300, 31
  %v1303 = vsub.s32 32, %v1302
  %v1304 = vshrl.u32 683565275, %v1303
  %v1305 = vshll.u32 683565275, %v1302
  %v1306 = vshrl.u32 2475754826, %v1303
  %v1307 = vor.u32 %v1305, %v1306
  %v1308 = vshll.u32 2475754826, %v1302
  %v1309 = vshrl.u32 2131351028, %v1303
  %v1310 = vor.u32 %v1308, %v1309
  %v1311 = vshll.u32 2131351028, %v1302
  %v1312 = vshrl.u32 2102212464, %v1303
  %v1313 = vor.u32 %v1311, %v1312
  %v1314 = vshll.u32 2102212464, %v1302
  %v1315 = vshrl.u32 920167782, %v1303
  %v1316 = vor.u32 %v1314, %v1315
  %v1317 = vshll.u32 920167782, %v1302
  %v1318 = vshrl.u32 1326507024, %v1303
  %v1319 = vor.u32 %v1317, %v1318
  %vm1320 = vcmp.lt.s32.totalorder %v1301, 1
  %vm1321 = vcmp.lt.s32.totalorder %v1301, 2
  %vm1322 = vcmp.lt.s32.totalorder %v1301, 3
  %vm1323 = vcmp.lt.s32.totalorder %v1301, 4
  %v1324 = vsel %vm1320, %v1304, %v1307
  %v1325 = vsel %vm1323, %v1313, 2102212464
  %v1326 = vsel %vm1322, %v1310, %v1325
  %v1327 = vsel %vm1321, %v1324, %v1326
  %v1328 = vsel %vm1320, %v1307, %v1310
  %v1329 = vsel %vm1323, %v1316, 920167782
  %v1330 = vsel %vm1322, %v1313, %v1329
  %v1331 = vsel %vm1321, %v1328, %v1330
  %v1332 = vsel %vm1320, %v1310, %v1313
  %v1333 = vsel %vm1323, %v1319, 1326507024
  %v1334 = vsel %vm1322, %v1316, %v1333
  %v1335 = vsel %vm1321, %v1332, %v1334
  %v1336 = vshll.u32 %v1296, 8
  %v1337 = vmul.u32.u64.compose %v1336, %v1335
  %v1338 = vextract.low.u32 %v1337
  %v1339 = vextract.high.u32 %v1337
  %v1340 = vmul.u32.u64.compose %v1336, %v1331
  %v1341 = vextract.low.u32 %v1340
  %v1342 = vextract.high.u32 %v1340
  %v1343 = vmul.u32 %v1336, %v1327
  %v1344 = vadd.s32 %v1339, %v1341
  %vm1345 = vc.u32 %v1339, %v1341
  %v1346 = vadd.s32 %v1342, 1
  %v1347 = vsel %vm1345, %v1346, %v1342
  %v1348 = vadd.s32 %v1343, %v1347
  %v1349 = vadd.s32 %v1348, 536870912
  %v1350 = vshrl.u32 %v1349, 30
  %v1351 = vshll.u32 %v1350, 30
  %v1352 = vsub.s32 %v1348, %v1351
  %vm1353 = vcmp.lt.s32.totalorder %v1352, 0
  %v1354 = vsub.s32 0, %v1352
  %v1355 = vsel %vm1353, %v1354, %v1352
  %v1356 = vclz %v1355
  %v1357 = vsub.s32 %v1356, 2
  %vm1358 = vcmp.gt.s32.totalorder 0, %v1357
  %v1359 = vsel %vm1358, 0, %v1357
  %v1360 = vsub.s32 32, %v1359
  %v1361 = vshll.u32 %v1352, %v1359
  %v1362 = vshrl.u32 %v1344, %v1360
  %v1363 = vor.u32 %v1361, %v1362
  %v1364 = vsub.s32 4294967266, %v1359
  %v1365 = vadd.s32 %v1364, 127
  %v1366 = vshll.u32 %v1365, 23
  %v1367 = vor.u32 4788187, %v1366
  %v1368 = vand.u32 2147483647, %v1367
  %v1370 = vcvt.s32.f32 %v1363
  %v1371 = vmul.f32 %v1370, %v1368
  %v1372 = vxor.u32 %v1371, 2147483648
  %v1373 = vsel %vm1290, %v1372, %v1371
  %v1374 = vsub.s32 4, %v1350
  %v1375 = vsel %vm1290, %v1374, %v1350
  %v1376 = vsel %vm1289, %v36, %v1373
  %v1377 = vsel %vm1289, 0, %v1375
  %v1378 = vcosq.f32.pop %v1376
  %v1379 = vsinq.f32.pop %v1376
  %vm1380 = vweird.f32 %v36
  %v1381 = vadd.s32 %v1377, 3
  %v1382 = vand.u32 %v1381, 3
  %vm1383 = vcmp.lt.s32.totalorder %v1382, 2
  %vm1384 = vcmp.eq.s32.totalorder %v1382, 0
  %v1385 = vxor.u32 %v1379, 2147483648
  %v1386 = vsel %vm1384, %v1378, %v1385
  %vm1387 = vcmp.eq.s32.totalorder %v1382, 2
  %v1388 = vxor.u32 %v1378, 2147483648
  %v1389 = vsel %vm1387, %v1388, %v1379
  %v1390 = vsel %vm1383, %v1386, %v1389
  %v1391 = vsel %vm1380, nan, %v1390
  %v1392 = vand.u32 2147483647, %v37
  %vm1393 = vcmp.le.f32.partialorder %v1392, 0.7853982
  %vm1394 = vcmp.lt.s32.totalorder %v37, 0
  %v1395 = vand.u32 %v37, 2139095040
  %v1396 = vshrl.u32 %v1395, 23
  %v1397 = vsub.s32 %v1396, 127
  %v1398 = vand.u32 2147483647, %v37
  %v1399 = vand.u32 %v1398, 8388607
  %v1400 = vor.u32 %v1399, 8388608
  %v1401 = vsub.s32 0, %v1400
  %v1402 = vadd.s32 %v1397, 1
  %vm1403 = vcmp.gt.s32.totalorder %v1402, 0
  %v1404 = vsel %vm1403, %v1402, 0
  %v1405 = vshrl.u32 %v1404, 5
  %v1406 = vand.u32 %v1404, 31
  %v1407 = vsub.s32 32, %v1406
  %v1408 = vshrl.u32 683565275, %v1407
  %v1409 = vshll.u32 683565275, %v1406
  %v1410 = vshrl.u32 2475754826, %v1407
  %v1411 = vor.u32 %v1409, %v1410
  %v1412 = vshll.u32 2475754826, %v1406
  %v1413 = vshrl.u32 2131351028, %v1407
  %v1414 = vor.u32 %v1412, %v1413
  %v1415 = vshll.u32 2131351028, %v1406
  %v1416 = vshrl.u32 2102212464, %v1407
  %v1417 = vor.u32 %v1415, %v1416
  %v1418 = vshll.u32 2102212464, %v1406
  %v1419 = vshrl.u32 920167782, %v1407
  %v1420 = vor.u32 %v1418, %v1419
  %v1421 = vshll.u32 920167782, %v1406
  %v1422 = vshrl.u32 1326507024, %v1407
  %v1423 = vor.u32 %v1421, %v1422
  %vm1424 = vcmp.lt.s32.totalorder %v1405, 1
  %vm1425 = vcmp.lt.s32.totalorder %v1405, 2
  %vm1426 = vcmp.lt.s32.totalorder %v1405, 3
  %vm1427 = vcmp.lt.s32.totalorder %v1405, 4
  %v1428 = vsel %vm1424, %v1408, %v1411
  %v1429 = vsel %vm1427, %v1417, 2102212464
  %v1430 = vsel %vm1426, %v1414, %v1429
  %v1431 = vsel %vm1425, %v1428, %v1430
  %v1432 = vsel %vm1424, %v1411, %v1414
  %v1433 = vsel %vm1427, %v1420, 920167782
  %v1434 = vsel %vm1426, %v1417, %v1433
  %v1435 = vsel %vm1425, %v1432, %v1434
  %v1436 = vsel %vm1424, %v1414, %v1417
  %v1437 = vsel %vm1427, %v1423, 1326507024
  %v1438 = vsel %vm1426, %v1420, %v1437
  %v1439 = vsel %vm1425, %v1436, %v1438
  %v1440 = vshll.u32 %v1400, 8
  %v1441 = vmul.u32.u64.compose %v1440, %v1439
  %v1442 = vextract.low.u32 %v1441
  %v1443 = vextract.high.u32 %v1441
  %v1444 = vmul.u32.u64.compose %v1440, %v1435
  %v1445 = vextract.low.u32 %v1444
  %v1446 = vextract.high.u32 %v1444
  %v1447 = vmul.u32 %v1440, %v1431
  %v1448 = vadd.s32 %v1443, %v1445
  %vm1449 = vc.u32 %v1443, %v1445
  %v1450 = vadd.s32 %v1446, 1
  %v1451 = vsel %vm1449, %v1450, %v1446
  %v1452 = vadd.s32 %v1447, %v1451
  %v1453 = vadd.s32 %v1452, 536870912
  %v1454 = vshrl.u32 %v1453, 30
  %v1455 = vshll.u32 %v1454, 30
  %v1456 = vsub.s32 %v1452, %v1455
  %vm1457 = vcmp.lt.s32.totalorder %v1456, 0
  %v1458 = vsub.s32 0, %v1456
  %v1459 = vsel %vm1457, %v1458, %v1456
  %v1460 = vclz %v1459
  %v1461 = vsub.s32 %v1460, 2
  %vm1462 = vcmp.gt.s32.totalorder 0, %v1461
  %v1463 = vsel %vm1462, 0, %v1461
  %v1464 = vsub.s32 32, %v1463
  %v1465 = vshll.u32 %v1456, %v1463
  %v1466 = vshrl.u32 %v1448, %v1464
  %v1467 = vor.u32 %v1465, %v1466
  %v1468 = vsub.s32 4294967266, %v1463
  %v1469 = vadd.s32 %v1468, 127
  %v1470 = vshll.u32 %v1469, 23
  %v1471 = vor.u32 4788187, %v1470
  %v1472 = vand.u32 2147483647, %v1471
  %v1474 = vcvt.s32.f32 %v1467
  %v1475 = vmul.f32 %v1474, %v1472
  %v1476 = vxor.u32 %v1475, 2147483648
  %v1477 = vsel %vm1394, %v1476, %v1475
  %v1478 = vsub.s32 4, %v1454
  %v1479 = vsel %vm1394, %v1478, %v1454
  %v1480 = vsel %vm1393, %v37, %v1477
  %v1481 = vsel %vm1393, 0, %v1479
  %v1482 = vcosq.f32.pop %v1480
  %v1483 = vsinq.f32.pop %v1480
  %vm1484 = vweird.f32 %v37
  %v1485 = vadd.s32 %v1481, 3
  %v1486 = vand.u32 %v1485, 3
  %vm1487 = vcmp.lt.s32.totalorder %v1486, 2
  %vm1488 = vcmp.eq.s32.totalorder %v1486, 0
  %v1489 = vxor.u32 %v1483, 2147483648
  %v1490 = vsel %vm1488, %v1482, %v1489
  %vm1491 = vcmp.eq.s32.totalorder %v1486, 2
  %v1492 = vxor.u32 %v1482, 2147483648
  %v1493 = vsel %vm1491, %v1492, %v1483
  %v1494 = vsel %vm1487, %v1490, %v1493
  %v1495 = vsel %vm1484, nan, %v1494
  %v1496 = vand.u32 2147483647, %v38
  %vm1497 = vcmp.le.f32.partialorder %v1496, 0.7853982
  %vm1498 = vcmp.lt.s32.totalorder %v38, 0
  %v1499 = vand.u32 %v38, 2139095040
  %v1500 = vshrl.u32 %v1499, 23
  %v1501 = vsub.s32 %v1500, 127
  %v1502 = vand.u32 2147483647, %v38
  %v1503 = vand.u32 %v1502, 8388607
  %v1504 = vor.u32 %v1503, 8388608
  %v1505 = vsub.s32 0, %v1504
  %v1506 = vadd.s32 %v1501, 1
  %vm1507 = vcmp.gt.s32.totalorder %v1506, 0
  %v1508 = vsel %vm1507, %v1506, 0
  %v1509 = vshrl.u32 %v1508, 5
  %v1510 = vand.u32 %v1508, 31
  %v1511 = vsub.s32 32, %v1510
  %v1512 = vshrl.u32 683565275, %v1511
  %v1513 = vshll.u32 683565275, %v1510
  %v1514 = vshrl.u32 2475754826, %v1511
  %v1515 = vor.u32 %v1513, %v1514
  %v1516 = vshll.u32 2475754826, %v1510
  %v1517 = vshrl.u32 2131351028, %v1511
  %v1518 = vor.u32 %v1516, %v1517
  %v1519 = vshll.u32 2131351028, %v1510
  %v1520 = vshrl.u32 2102212464, %v1511
  %v1521 = vor.u32 %v1519, %v1520
  %v1522 = vshll.u32 2102212464, %v1510
  %v1523 = vshrl.u32 920167782, %v1511
  %v1524 = vor.u32 %v1522, %v1523
  %v1525 = vshll.u32 920167782, %v1510
  %v1526 = vshrl.u32 1326507024, %v1511
  %v1527 = vor.u32 %v1525, %v1526
  %vm1528 = vcmp.lt.s32.totalorder %v1509, 1
  %vm1529 = vcmp.lt.s32.totalorder %v1509, 2
  %vm1530 = vcmp.lt.s32.totalorder %v1509, 3
  %vm1531 = vcmp.lt.s32.totalorder %v1509, 4
  %v1532 = vsel %vm1528, %v1512, %v1515
  %v1533 = vsel %vm1531, %v1521, 2102212464
  %v1534 = vsel %vm1530, %v1518, %v1533
  %v1535 = vsel %vm1529, %v1532, %v1534
  %v1536 = vsel %vm1528, %v1515, %v1518
  %v1537 = vsel %vm1531, %v1524, 920167782
  %v1538 = vsel %vm1530, %v1521, %v1537
  %v1539 = vsel %vm1529, %v1536, %v1538
  %v1540 = vsel %vm1528, %v1518, %v1521
  %v1541 = vsel %vm1531, %v1527, 1326507024
  %v1542 = vsel %vm1530, %v1524, %v1541
  %v1543 = vsel %vm1529, %v1540, %v1542
  %v1544 = vshll.u32 %v1504, 8
  %v1545 = vmul.u32.u64.compose %v1544, %v1543
  %v1546 = vextract.low.u32 %v1545
  %v1547 = vextract.high.u32 %v1545
  %v1548 = vmul.u32.u64.compose %v1544, %v1539
  %v1549 = vextract.low.u32 %v1548
  %v1550 = vextract.high.u32 %v1548
  %v1551 = vmul.u32 %v1544, %v1535
  %v1552 = vadd.s32 %v1547, %v1549
  %vm1553 = vc.u32 %v1547, %v1549
  %v1554 = vadd.s32 %v1550, 1
  %v1555 = vsel %vm1553, %v1554, %v1550
  %v1556 = vadd.s32 %v1551, %v1555
  %v1557 = vadd.s32 %v1556, 536870912
  %v1558 = vshrl.u32 %v1557, 30
  %v1559 = vshll.u32 %v1558, 30
  %v1560 = vsub.s32 %v1556, %v1559
  %vm1561 = vcmp.lt.s32.totalorder %v1560, 0
  %v1562 = vsub.s32 0, %v1560
  %v1563 = vsel %vm1561, %v1562, %v1560
  %v1564 = vclz %v1563
  %v1565 = vsub.s32 %v1564, 2
  %vm1566 = vcmp.gt.s32.totalorder 0, %v1565
  %v1567 = vsel %vm1566, 0, %v1565
  %v1568 = vsub.s32 32, %v1567
  %v1569 = vshll.u32 %v1560, %v1567
  %v1570 = vshrl.u32 %v1552, %v1568
  %v1571 = vor.u32 %v1569, %v1570
  %v1572 = vsub.s32 4294967266, %v1567
  %v1573 = vadd.s32 %v1572, 127
  %v1574 = vshll.u32 %v1573, 23
  %v1575 = vor.u32 4788187, %v1574
  %v1576 = vand.u32 2147483647, %v1575
  %v1578 = vcvt.s32.f32 %v1571
  %v1579 = vmul.f32 %v1578, %v1576
  %v1580 = vxor.u32 %v1579, 2147483648
  %v1581 = vsel %vm1498, %v1580, %v1579
  %v1582 = vsub.s32 4, %v1558
  %v1583 = vsel %vm1498, %v1582, %v1558
  %v1584 = vsel %vm1497, %v38, %v1581
  %v1585 = vsel %vm1497, 0, %v1583
  %v1586 = vcosq.f32.pop %v1584
  %v1587 = vsinq.f32.pop %v1584
  %vm1588 = vweird.f32 %v38
  %v1589 = vadd.s32 %v1585, 3
  %v1590 = vand.u32 %v1589, 3
  %vm1591 = vcmp.lt.s32.totalorder %v1590, 2
  %vm1592 = vcmp.eq.s32.totalorder %v1590, 0
  %v1593 = vxor.u32 %v1587, 2147483648
  %v1594 = vsel %vm1592, %v1586, %v1593
  %vm1595 = vcmp.eq.s32.totalorder %v1590, 2
  %v1596 = vxor.u32 %v1586, 2147483648
  %v1597 = vsel %vm1595, %v1596, %v1587
  %v1598 = vsel %vm1591, %v1594, %v1597
  %v1599 = vsel %vm1588, nan, %v1598
  %v1600 = vand.u32 2147483647, %v39
  %vm1601 = vcmp.le.f32.partialorder %v1600, 0.7853982
  %vm1602 = vcmp.lt.s32.totalorder %v39, 0
  %v1603 = vand.u32 %v39, 2139095040
  %v1604 = vshrl.u32 %v1603, 23
  %v1605 = vsub.s32 %v1604, 127
  %v1606 = vand.u32 2147483647, %v39
  %v1607 = vand.u32 %v1606, 8388607
  %v1608 = vor.u32 %v1607, 8388608
  %v1609 = vsub.s32 0, %v1608
  %v1610 = vadd.s32 %v1605, 1
  %vm1611 = vcmp.gt.s32.totalorder %v1610, 0
  %v1612 = vsel %vm1611, %v1610, 0
  %v1613 = vshrl.u32 %v1612, 5
  %v1614 = vand.u32 %v1612, 31
  %v1615 = vsub.s32 32, %v1614
  %v1616 = vshrl.u32 683565275, %v1615
  %v1617 = vshll.u32 683565275, %v1614
  %v1618 = vshrl.u32 2475754826, %v1615
  %v1619 = vor.u32 %v1617, %v1618
  %v1620 = vshll.u32 2475754826, %v1614
  %v1621 = vshrl.u32 2131351028, %v1615
  %v1622 = vor.u32 %v1620, %v1621
  %v1623 = vshll.u32 2131351028, %v1614
  %v1624 = vshrl.u32 2102212464, %v1615
  %v1625 = vor.u32 %v1623, %v1624
  %v1626 = vshll.u32 2102212464, %v1614
  %v1627 = vshrl.u32 920167782, %v1615
  %v1628 = vor.u32 %v1626, %v1627
  %v1629 = vshll.u32 920167782, %v1614
  %v1630 = vshrl.u32 1326507024, %v1615
  %v1631 = vor.u32 %v1629, %v1630
  %vm1632 = vcmp.lt.s32.totalorder %v1613, 1
  %vm1633 = vcmp.lt.s32.totalorder %v1613, 2
  %vm1634 = vcmp.lt.s32.totalorder %v1613, 3
  %vm1635 = vcmp.lt.s32.totalorder %v1613, 4
  %v1636 = vsel %vm1632, %v1616, %v1619
  %v1637 = vsel %vm1635, %v1625, 2102212464
  %v1638 = vsel %vm1634, %v1622, %v1637
  %v1639 = vsel %vm1633, %v1636, %v1638
  %v1640 = vsel %vm1632, %v1619, %v1622
  %v1641 = vsel %vm1635, %v1628, 920167782
  %v1642 = vsel %vm1634, %v1625, %v1641
  %v1643 = vsel %vm1633, %v1640, %v1642
  %v1644 = vsel %vm1632, %v1622, %v1625
  %v1645 = vsel %vm1635, %v1631, 1326507024
  %v1646 = vsel %vm1634, %v1628, %v1645
  %v1647 = vsel %vm1633, %v1644, %v1646
  %v1648 = vshll.u32 %v1608, 8
  %v1649 = vmul.u32.u64.compose %v1648, %v1647
  %v1650 = vextract.low.u32 %v1649
  %v1651 = vextract.high.u32 %v1649
  %v1652 = vmul.u32.u64.compose %v1648, %v1643
  %v1653 = vextract.low.u32 %v1652
  %v1654 = vextract.high.u32 %v1652
  %v1655 = vmul.u32 %v1648, %v1639
  %v1656 = vadd.s32 %v1651, %v1653
  %vm1657 = vc.u32 %v1651, %v1653
  %v1658 = vadd.s32 %v1654, 1
  %v1659 = vsel %vm1657, %v1658, %v1654
  %v1660 = vadd.s32 %v1655, %v1659
  %v1661 = vadd.s32 %v1660, 536870912
  %v1662 = vshrl.u32 %v1661, 30
  %v1663 = vshll.u32 %v1662, 30
  %v1664 = vsub.s32 %v1660, %v1663
  %vm1665 = vcmp.lt.s32.totalorder %v1664, 0
  %v1666 = vsub.s32 0, %v1664
  %v1667 = vsel %vm1665, %v1666, %v1664
  %v1668 = vclz %v1667
  %v1669 = vsub.s32 %v1668, 2
  %vm1670 = vcmp.gt.s32.totalorder 0, %v1669
  %v1671 = vsel %vm1670, 0, %v1669
  %v1672 = vsub.s32 32, %v1671
  %v1673 = vshll.u32 %v1664, %v1671
  %v1674 = vshrl.u32 %v1656, %v1672
  %v1675 = vor.u32 %v1673, %v1674
  %v1676 = vsub.s32 4294967266, %v1671
  %v1677 = vadd.s32 %v1676, 127
  %v1678 = vshll.u32 %v1677, 23
  %v1679 = vor.u32 4788187, %v1678
  %v1680 = vand.u32 2147483647, %v1679
  %v1682 = vcvt.s32.f32 %v1675
  %v1683 = vmul.f32 %v1682, %v1680
  %v1684 = vxor.u32 %v1683, 2147483648
  %v1685 = vsel %vm1602, %v1684, %v1683
  %v1686 = vsub.s32 4, %v1662
  %v1687 = vsel %vm1602, %v1686, %v1662
  %v1688 = vsel %vm1601, %v39, %v1685
  %v1689 = vsel %vm1601, 0, %v1687
  %v1690 = vcosq.f32.pop %v1688
  %v1691 = vsinq.f32.pop %v1688
  %vm1692 = vweird.f32 %v39
  %v1693 = vadd.s32 %v1689, 3
  %v1694 = vand.u32 %v1693, 3
  %vm1695 = vcmp.lt.s32.totalorder %v1694, 2
  %vm1696 = vcmp.eq.s32.totalorder %v1694, 0
  %v1697 = vxor.u32 %v1691, 2147483648
  %v1698 = vsel %vm1696, %v1690, %v1697
  %vm1699 = vcmp.eq.s32.totalorder %v1694, 2
  %v1700 = vxor.u32 %v1690, 2147483648
  %v1701 = vsel %vm1699, %v1700, %v1691
  %v1702 = vsel %vm1695, %v1698, %v1701
  %v1703 = vsel %vm1692, nan, %v1702
  %v1704 = vand.u32 2147483647, %v24
  %vm1705 = vcmp.le.f32.partialorder %v1704, 0.7853982
  %vm1706 = vcmp.lt.s32.totalorder %v24, 0
  %v1707 = vand.u32 %v24, 2139095040
  %v1708 = vshrl.u32 %v1707, 23
  %v1709 = vsub.s32 %v1708, 127
  %v1710 = vand.u32 2147483647, %v24
  %v1711 = vand.u32 %v1710, 8388607
  %v1712 = vor.u32 %v1711, 8388608
  %v1713 = vsub.s32 0, %v1712
  %v1714 = vadd.s32 %v1709, 1
  %vm1715 = vcmp.gt.s32.totalorder %v1714, 0
  %v1716 = vsel %vm1715, %v1714, 0
  %v1717 = vshrl.u32 %v1716, 5
  %v1718 = vand.u32 %v1716, 31
  %v1719 = vsub.s32 32, %v1718
  %v1720 = vshrl.u32 683565275, %v1719
  %v1721 = vshll.u32 683565275, %v1718
  %v1722 = vshrl.u32 2475754826, %v1719
  %v1723 = vor.u32 %v1721, %v1722
  %v1724 = vshll.u32 2475754826, %v1718
  %v1725 = vshrl.u32 2131351028, %v1719
  %v1726 = vor.u32 %v1724, %v1725
  %v1727 = vshll.u32 2131351028, %v1718
  %v1728 = vshrl.u32 2102212464, %v1719
  %v1729 = vor.u32 %v1727, %v1728
  %v1730 = vshll.u32 2102212464, %v1718
  %v1731 = vshrl.u32 920167782, %v1719
  %v1732 = vor.u32 %v1730, %v1731
  %v1733 = vshll.u32 920167782, %v1718
  %v1734 = vshrl.u32 1326507024, %v1719
  %v1735 = vor.u32 %v1733, %v1734
  %vm1736 = vcmp.lt.s32.totalorder %v1717, 1
  %vm1737 = vcmp.lt.s32.totalorder %v1717, 2
  %vm1738 = vcmp.lt.s32.totalorder %v1717, 3
  %vm1739 = vcmp.lt.s32.totalorder %v1717, 4
  %v1740 = vsel %vm1736, %v1720, %v1723
  %v1741 = vsel %vm1739, %v1729, 2102212464
  %v1742 = vsel %vm1738, %v1726, %v1741
  %v1743 = vsel %vm1737, %v1740, %v1742
  %v1744 = vsel %vm1736, %v1723, %v1726
  %v1745 = vsel %vm1739, %v1732, 920167782
  %v1746 = vsel %vm1738, %v1729, %v1745
  %v1747 = vsel %vm1737, %v1744, %v1746
  %v1748 = vsel %vm1736, %v1726, %v1729
  %v1749 = vsel %vm1739, %v1735, 1326507024
  %v1750 = vsel %vm1738, %v1732, %v1749
  %v1751 = vsel %vm1737, %v1748, %v1750
  %v1752 = vshll.u32 %v1712, 8
  %v1753 = vmul.u32.u64.compose %v1752, %v1751
  %v1754 = vextract.low.u32 %v1753
  %v1755 = vextract.high.u32 %v1753
  %v1756 = vmul.u32.u64.compose %v1752, %v1747
  %v1757 = vextract.low.u32 %v1756
  %v1758 = vextract.high.u32 %v1756
  %v1759 = vmul.u32 %v1752, %v1743
  %v1760 = vadd.s32 %v1755, %v1757
  %vm1761 = vc.u32 %v1755, %v1757
  %v1762 = vadd.s32 %v1758, 1
  %v1763 = vsel %vm1761, %v1762, %v1758
  %v1764 = vadd.s32 %v1759, %v1763
  %v1765 = vadd.s32 %v1764, 536870912
  %v1766 = vshrl.u32 %v1765, 30
  %v1767 = vshll.u32 %v1766, 30
  %v1768 = vsub.s32 %v1764, %v1767
  %vm1769 = vcmp.lt.s32.totalorder %v1768, 0
  %v1770 = vsub.s32 0, %v1768
  %v1771 = vsel %vm1769, %v1770, %v1768
  %v1772 = vclz %v1771
  %v1773 = vsub.s32 %v1772, 2
  %vm1774 = vcmp.gt.s32.totalorder 0, %v1773
  %v1775 = vsel %vm1774, 0, %v1773
  %v1776 = vsub.s32 32, %v1775
  %v1777 = vshll.u32 %v1768, %v1775
  %v1778 = vshrl.u32 %v1760, %v1776
  %v1779 = vor.u32 %v1777, %v1778
  %v1780 = vsub.s32 4294967266, %v1775
  %v1781 = vadd.s32 %v1780, 127
  %v1782 = vshll.u32 %v1781, 23
  %v1783 = vor.u32 4788187, %v1782
  %v1784 = vand.u32 2147483647, %v1783
  %v1786 = vcvt.s32.f32 %v1779
  %v1787 = vmul.f32 %v1786, %v1784
  %v1788 = vxor.u32 %v1787, 2147483648
  %v1789 = vsel %vm1706, %v1788, %v1787
  %v1790 = vsub.s32 4, %v1766
  %v1791 = vsel %vm1706, %v1790, %v1766
  %v1792 = vsel %vm1705, %v24, %v1789
  %v1793 = vsel %vm1705, 0, %v1791
  %v1794 = vcosq.f32.pop %v1792
  %v1795 = vsinq.f32.pop %v1792
  %vm1796 = vweird.f32 %v24
  %v1797 = vand.u32 %v1793, 3
  %vm1798 = vcmp.lt.s32.totalorder %v1797, 2
  %vm1799 = vcmp.eq.s32.totalorder %v1797, 0
  %v1800 = vxor.u32 %v1795, 2147483648
  %v1801 = vsel %vm1799, %v1794, %v1800
  %vm1802 = vcmp.eq.s32.totalorder %v1797, 2
  %v1803 = vxor.u32 %v1794, 2147483648
  %v1804 = vsel %vm1802, %v1803, %v1795
  %v1805 = vsel %vm1798, %v1801, %v1804
  %v1806 = vsel %vm1796, nan, %v1805
  %v1807 = vand.u32 2147483647, %v25
  %vm1808 = vcmp.le.f32.partialorder %v1807, 0.7853982
  %vm1809 = vcmp.lt.s32.totalorder %v25, 0
  %v1810 = vand.u32 %v25, 2139095040
  %v1811 = vshrl.u32 %v1810, 23
  %v1812 = vsub.s32 %v1811, 127
  %v1813 = vand.u32 2147483647, %v25
  %v1814 = vand.u32 %v1813, 8388607
  %v1815 = vor.u32 %v1814, 8388608
  %v1816 = vsub.s32 0, %v1815
  %v1817 = vadd.s32 %v1812, 1
  %vm1818 = vcmp.gt.s32.totalorder %v1817, 0
  %v1819 = vsel %vm1818, %v1817, 0
  %v1820 = vshrl.u32 %v1819, 5
  %v1821 = vand.u32 %v1819, 31
  %v1822 = vsub.s32 32, %v1821
  %v1823 = vshrl.u32 683565275, %v1822
  %v1824 = vshll.u32 683565275, %v1821
  %v1825 = vshrl.u32 2475754826, %v1822
  %v1826 = vor.u32 %v1824, %v1825
  %v1827 = vshll.u32 2475754826, %v1821
  %v1828 = vshrl.u32 2131351028, %v1822
  %v1829 = vor.u32 %v1827, %v1828
  %v1830 = vshll.u32 2131351028, %v1821
  %v1831 = vshrl.u32 2102212464, %v1822
  %v1832 = vor.u32 %v1830, %v1831
  %v1833 = vshll.u32 2102212464, %v1821
  %v1834 = vshrl.u32 920167782, %v1822
  %v1835 = vor.u32 %v1833, %v1834
  %v1836 = vshll.u32 920167782, %v1821
  %v1837 = vshrl.u32 1326507024, %v1822
  %v1838 = vor.u32 %v1836, %v1837
  %vm1839 = vcmp.lt.s32.totalorder %v1820, 1
  %vm1840 = vcmp.lt.s32.totalorder %v1820, 2
  %vm1841 = vcmp.lt.s32.totalorder %v1820, 3
  %vm1842 = vcmp.lt.s32.totalorder %v1820, 4
  %v1843 = vsel %vm1839, %v1823, %v1826
  %v1844 = vsel %vm1842, %v1832, 2102212464
  %v1845 = vsel %vm1841, %v1829, %v1844
  %v1846 = vsel %vm1840, %v1843, %v1845
  %v1847 = vsel %vm1839, %v1826, %v1829
  %v1848 = vsel %vm1842, %v1835, 920167782
  %v1849 = vsel %vm1841, %v1832, %v1848
  %v1850 = vsel %vm1840, %v1847, %v1849
  %v1851 = vsel %vm1839, %v1829, %v1832
  %v1852 = vsel %vm1842, %v1838, 1326507024
  %v1853 = vsel %vm1841, %v1835, %v1852
  %v1854 = vsel %vm1840, %v1851, %v1853
  %v1855 = vshll.u32 %v1815, 8
  %v1856 = vmul.u32.u64.compose %v1855, %v1854
  %v1857 = vextract.low.u32 %v1856
  %v1858 = vextract.high.u32 %v1856
  %v1859 = vmul.u32.u64.compose %v1855, %v1850
  %v1860 = vextract.low.u32 %v1859
  %v1861 = vextract.high.u32 %v1859
  %v1862 = vmul.u32 %v1855, %v1846
  %v1863 = vadd.s32 %v1858, %v1860
  %vm1864 = vc.u32 %v1858, %v1860
  %v1865 = vadd.s32 %v1861, 1
  %v1866 = vsel %vm1864, %v1865, %v1861
  %v1867 = vadd.s32 %v1862, %v1866
  %v1868 = vadd.s32 %v1867, 536870912
  %v1869 = vshrl.u32 %v1868, 30
  %v1870 = vshll.u32 %v1869, 30
  %v1871 = vsub.s32 %v1867, %v1870
  %vm1872 = vcmp.lt.s32.totalorder %v1871, 0
  %v1873 = vsub.s32 0, %v1871
  %v1874 = vsel %vm1872, %v1873, %v1871
  %v1875 = vclz %v1874
  %v1876 = vsub.s32 %v1875, 2
  %vm1877 = vcmp.gt.s32.totalorder 0, %v1876
  %v1878 = vsel %vm1877, 0, %v1876
  %v1879 = vsub.s32 32, %v1878
  %v1880 = vshll.u32 %v1871, %v1878
  %v1881 = vshrl.u32 %v1863, %v1879
  %v1882 = vor.u32 %v1880, %v1881
  %v1883 = vsub.s32 4294967266, %v1878
  %v1884 = vadd.s32 %v1883, 127
  %v1885 = vshll.u32 %v1884, 23
  %v1886 = vor.u32 4788187, %v1885
  %v1887 = vand.u32 2147483647, %v1886
  %v1889 = vcvt.s32.f32 %v1882
  %v1890 = vmul.f32 %v1889, %v1887
  %v1891 = vxor.u32 %v1890, 2147483648
  %v1892 = vsel %vm1809, %v1891, %v1890
  %v1893 = vsub.s32 4, %v1869
  %v1894 = vsel %vm1809, %v1893, %v1869
  %v1895 = vsel %vm1808, %v25, %v1892
  %v1896 = vsel %vm1808, 0, %v1894
  %v1897 = vcosq.f32.pop %v1895
  %v1898 = vsinq.f32.pop %v1895
  %vm1899 = vweird.f32 %v25
  %v1900 = vand.u32 %v1896, 3
  %vm1901 = vcmp.lt.s32.totalorder %v1900, 2
  %vm1902 = vcmp.eq.s32.totalorder %v1900, 0
  %v1903 = vxor.u32 %v1898, 2147483648
  %v1904 = vsel %vm1902, %v1897, %v1903
  %vm1905 = vcmp.eq.s32.totalorder %v1900, 2
  %v1906 = vxor.u32 %v1897, 2147483648
  %v1907 = vsel %vm1905, %v1906, %v1898
  %v1908 = vsel %vm1901, %v1904, %v1907
  %v1909 = vsel %vm1899, nan, %v1908
  %v1910 = vand.u32 2147483647, %v26
  %vm1911 = vcmp.le.f32.partialorder %v1910, 0.7853982
  %vm1912 = vcmp.lt.s32.totalorder %v26, 0
  %v1913 = vand.u32 %v26, 2139095040
  %v1914 = vshrl.u32 %v1913, 23
  %v1915 = vsub.s32 %v1914, 127
  %v1916 = vand.u32 2147483647, %v26
  %v1917 = vand.u32 %v1916, 8388607
  %v1918 = vor.u32 %v1917, 8388608
  %v1919 = vsub.s32 0, %v1918
  %v1920 = vadd.s32 %v1915, 1
  %vm1921 = vcmp.gt.s32.totalorder %v1920, 0
  %v1922 = vsel %vm1921, %v1920, 0
  %v1923 = vshrl.u32 %v1922, 5
  %v1924 = vand.u32 %v1922, 31
  %v1925 = vsub.s32 32, %v1924
  %v1926 = vshrl.u32 683565275, %v1925
  %v1927 = vshll.u32 683565275, %v1924
  %v1928 = vshrl.u32 2475754826, %v1925
  %v1929 = vor.u32 %v1927, %v1928
  %v1930 = vshll.u32 2475754826, %v1924
  %v1931 = vshrl.u32 2131351028, %v1925
  %v1932 = vor.u32 %v1930, %v1931
  %v1933 = vshll.u32 2131351028, %v1924
  %v1934 = vshrl.u32 2102212464, %v1925
  %v1935 = vor.u32 %v1933, %v1934
  %v1936 = vshll.u32 2102212464, %v1924
  %v1937 = vshrl.u32 920167782, %v1925
  %v1938 = vor.u32 %v1936, %v1937
  %v1939 = vshll.u32 920167782, %v1924
  %v1940 = vshrl.u32 1326507024, %v1925
  %v1941 = vor.u32 %v1939, %v1940
  %vm1942 = vcmp.lt.s32.totalorder %v1923, 1
  %vm1943 = vcmp.lt.s32.totalorder %v1923, 2
  %vm1944 = vcmp.lt.s32.totalorder %v1923, 3
  %vm1945 = vcmp.lt.s32.totalorder %v1923, 4
  %v1946 = vsel %vm1942, %v1926, %v1929
  %v1947 = vsel %vm1945, %v1935, 2102212464
  %v1948 = vsel %vm1944, %v1932, %v1947
  %v1949 = vsel %vm1943, %v1946, %v1948
  %v1950 = vsel %vm1942, %v1929, %v1932
  %v1951 = vsel %vm1945, %v1938, 920167782
  %v1952 = vsel %vm1944, %v1935, %v1951
  %v1953 = vsel %vm1943, %v1950, %v1952
  %v1954 = vsel %vm1942, %v1932, %v1935
  %v1955 = vsel %vm1945, %v1941, 1326507024
  %v1956 = vsel %vm1944, %v1938, %v1955
  %v1957 = vsel %vm1943, %v1954, %v1956
  %v1958 = vshll.u32 %v1918, 8
  %v1959 = vmul.u32.u64.compose %v1958, %v1957
  %v1960 = vextract.low.u32 %v1959
  %v1961 = vextract.high.u32 %v1959
  %v1962 = vmul.u32.u64.compose %v1958, %v1953
  %v1963 = vextract.low.u32 %v1962
  %v1964 = vextract.high.u32 %v1962
  %v1965 = vmul.u32 %v1958, %v1949
  %v1966 = vadd.s32 %v1961, %v1963
  %vm1967 = vc.u32 %v1961, %v1963
  %v1968 = vadd.s32 %v1964, 1
  %v1969 = vsel %vm1967, %v1968, %v1964
  %v1970 = vadd.s32 %v1965, %v1969
  %v1971 = vadd.s32 %v1970, 536870912
  %v1972 = vshrl.u32 %v1971, 30
  %v1973 = vshll.u32 %v1972, 30
  %v1974 = vsub.s32 %v1970, %v1973
  %vm1975 = vcmp.lt.s32.totalorder %v1974, 0
  %v1976 = vsub.s32 0, %v1974
  %v1977 = vsel %vm1975, %v1976, %v1974
  %v1978 = vclz %v1977
  %v1979 = vsub.s32 %v1978, 2
  %vm1980 = vcmp.gt.s32.totalorder 0, %v1979
  %v1981 = vsel %vm1980, 0, %v1979
  %v1982 = vsub.s32 32, %v1981
  %v1983 = vshll.u32 %v1974, %v1981
  %v1984 = vshrl.u32 %v1966, %v1982
  %v1985 = vor.u32 %v1983, %v1984
  %v1986 = vsub.s32 4294967266, %v1981
  %v1987 = vadd.s32 %v1986, 127
  %v1988 = vshll.u32 %v1987, 23
  %v1989 = vor.u32 4788187, %v1988
  %v1990 = vand.u32 2147483647, %v1989
  %v1992 = vcvt.s32.f32 %v1985
  %v1993 = vmul.f32 %v1992, %v1990
  %v1994 = vxor.u32 %v1993, 2147483648
  %v1995 = vsel %vm1912, %v1994, %v1993
  %v1996 = vsub.s32 4, %v1972
  %v1997 = vsel %vm1912, %v1996, %v1972
  %v1998 = vsel %vm1911, %v26, %v1995
  %v1999 = vsel %vm1911, 0, %v1997
  %v2000 = vcosq.f32.pop %v1998
  %v2001 = vsinq.f32.pop %v1998
  %vm2002 = vweird.f32 %v26
  %v2003 = vand.u32 %v1999, 3
  %vm2004 = vcmp.lt.s32.totalorder %v2003, 2
  %vm2005 = vcmp.eq.s32.totalorder %v2003, 0
  %v2006 = vxor.u32 %v2001, 2147483648
  %v2007 = vsel %vm2005, %v2000, %v2006
  %vm2008 = vcmp.eq.s32.totalorder %v2003, 2
  %v2009 = vxor.u32 %v2000, 2147483648
  %v2010 = vsel %vm2008, %v2009, %v2001
  %v2011 = vsel %vm2004, %v2007, %v2010
  %v2012 = vsel %vm2002, nan, %v2011
  %v2013 = vand.u32 2147483647, %v27
  %vm2014 = vcmp.le.f32.partialorder %v2013, 0.7853982
  %vm2015 = vcmp.lt.s32.totalorder %v27, 0
  %v2016 = vand.u32 %v27, 2139095040
  %v2017 = vshrl.u32 %v2016, 23
  %v2018 = vsub.s32 %v2017, 127
  %v2019 = vand.u32 2147483647, %v27
  %v2020 = vand.u32 %v2019, 8388607
  %v2021 = vor.u32 %v2020, 8388608
  %v2022 = vsub.s32 0, %v2021
  %v2023 = vadd.s32 %v2018, 1
  %vm2024 = vcmp.gt.s32.totalorder %v2023, 0
  %v2025 = vsel %vm2024, %v2023, 0
  %v2026 = vshrl.u32 %v2025, 5
  %v2027 = vand.u32 %v2025, 31
  %v2028 = vsub.s32 32, %v2027
  %v2029 = vshrl.u32 683565275, %v2028
  %v2030 = vshll.u32 683565275, %v2027
  %v2031 = vshrl.u32 2475754826, %v2028
  %v2032 = vor.u32 %v2030, %v2031
  %v2033 = vshll.u32 2475754826, %v2027
  %v2034 = vshrl.u32 2131351028, %v2028
  %v2035 = vor.u32 %v2033, %v2034
  %v2036 = vshll.u32 2131351028, %v2027
  %v2037 = vshrl.u32 2102212464, %v2028
  %v2038 = vor.u32 %v2036, %v2037
  %v2039 = vshll.u32 2102212464, %v2027
  %v2040 = vshrl.u32 920167782, %v2028
  %v2041 = vor.u32 %v2039, %v2040
  %v2042 = vshll.u32 920167782, %v2027
  %v2043 = vshrl.u32 1326507024, %v2028
  %v2044 = vor.u32 %v2042, %v2043
  %vm2045 = vcmp.lt.s32.totalorder %v2026, 1
  %vm2046 = vcmp.lt.s32.totalorder %v2026, 2
  %vm2047 = vcmp.lt.s32.totalorder %v2026, 3
  %vm2048 = vcmp.lt.s32.totalorder %v2026, 4
  %v2049 = vsel %vm2045, %v2029, %v2032
  %v2050 = vsel %vm2048, %v2038, 2102212464
  %v2051 = vsel %vm2047, %v2035, %v2050
  %v2052 = vsel %vm2046, %v2049, %v2051
  %v2053 = vsel %vm2045, %v2032, %v2035
  %v2054 = vsel %vm2048, %v2041, 920167782
  %v2055 = vsel %vm2047, %v2038, %v2054
  %v2056 = vsel %vm2046, %v2053, %v2055
  %v2057 = vsel %vm2045, %v2035, %v2038
  %v2058 = vsel %vm2048, %v2044, 1326507024
  %v2059 = vsel %vm2047, %v2041, %v2058
  %v2060 = vsel %vm2046, %v2057, %v2059
  %v2061 = vshll.u32 %v2021, 8
  %v2062 = vmul.u32.u64.compose %v2061, %v2060
  %v2063 = vextract.low.u32 %v2062
  %v2064 = vextract.high.u32 %v2062
  %v2065 = vmul.u32.u64.compose %v2061, %v2056
  %v2066 = vextract.low.u32 %v2065
  %v2067 = vextract.high.u32 %v2065
  %v2068 = vmul.u32 %v2061, %v2052
  %v2069 = vadd.s32 %v2064, %v2066
  %vm2070 = vc.u32 %v2064, %v2066
  %v2071 = vadd.s32 %v2067, 1
  %v2072 = vsel %vm2070, %v2071, %v2067
  %v2073 = vadd.s32 %v2068, %v2072
  %v2074 = vadd.s32 %v2073, 536870912
  %v2075 = vshrl.u32 %v2074, 30
  %v2076 = vshll.u32 %v2075, 30
  %v2077 = vsub.s32 %v2073, %v2076
  %vm2078 = vcmp.lt.s32.totalorder %v2077, 0
  %v2079 = vsub.s32 0, %v2077
  %v2080 = vsel %vm2078, %v2079, %v2077
  %v2081 = vclz %v2080
  %v2082 = vsub.s32 %v2081, 2
  %vm2083 = vcmp.gt.s32.totalorder 0, %v2082
  %v2084 = vsel %vm2083, 0, %v2082
  %v2085 = vsub.s32 32, %v2084
  %v2086 = vshll.u32 %v2077, %v2084
  %v2087 = vshrl.u32 %v2069, %v2085
  %v2088 = vor.u32 %v2086, %v2087
  %v2089 = vsub.s32 4294967266, %v2084
  %v2090 = vadd.s32 %v2089, 127
  %v2091 = vshll.u32 %v2090, 23
  %v2092 = vor.u32 4788187, %v2091
  %v2093 = vand.u32 2147483647, %v2092
  %v2095 = vcvt.s32.f32 %v2088
  %v2096 = vmul.f32 %v2095, %v2093
  %v2097 = vxor.u32 %v2096, 2147483648
  %v2098 = vsel %vm2015, %v2097, %v2096
  %v2099 = vsub.s32 4, %v2075
  %v2100 = vsel %vm2015, %v2099, %v2075
  %v2101 = vsel %vm2014, %v27, %v2098
  %v2102 = vsel %vm2014, 0, %v2100
  %v2103 = vcosq.f32.pop %v2101
  %v2104 = vsinq.f32.pop %v2101
  %vm2105 = vweird.f32 %v27
  %v2106 = vand.u32 %v2102, 3
  %vm2107 = vcmp.lt.s32.totalorder %v2106, 2
  %vm2108 = vcmp.eq.s32.totalorder %v2106, 0
  %v2109 = vxor.u32 %v2104, 2147483648
  %v2110 = vsel %vm2108, %v2103, %v2109
  %vm2111 = vcmp.eq.s32.totalorder %v2106, 2
  %v2112 = vxor.u32 %v2103, 2147483648
  %v2113 = vsel %vm2111, %v2112, %v2104
  %v2114 = vsel %vm2107, %v2110, %v2113
  %v2115 = vsel %vm2105, nan, %v2114
  %v2116 = vand.u32 2147483647, %v28
  %vm2117 = vcmp.le.f32.partialorder %v2116, 0.7853982
  %vm2118 = vcmp.lt.s32.totalorder %v28, 0
  %v2119 = vand.u32 %v28, 2139095040
  %v2120 = vshrl.u32 %v2119, 23
  %v2121 = vsub.s32 %v2120, 127
  %v2122 = vand.u32 2147483647, %v28
  %v2123 = vand.u32 %v2122, 8388607
  %v2124 = vor.u32 %v2123, 8388608
  %v2125 = vsub.s32 0, %v2124
  %v2126 = vadd.s32 %v2121, 1
  %vm2127 = vcmp.gt.s32.totalorder %v2126, 0
  %v2128 = vsel %vm2127, %v2126, 0
  %v2129 = vshrl.u32 %v2128, 5
  %v2130 = vand.u32 %v2128, 31
  %v2131 = vsub.s32 32, %v2130
  %v2132 = vshrl.u32 683565275, %v2131
  %v2133 = vshll.u32 683565275, %v2130
  %v2134 = vshrl.u32 2475754826, %v2131
  %v2135 = vor.u32 %v2133, %v2134
  %v2136 = vshll.u32 2475754826, %v2130
  %v2137 = vshrl.u32 2131351028, %v2131
  %v2138 = vor.u32 %v2136, %v2137
  %v2139 = vshll.u32 2131351028, %v2130
  %v2140 = vshrl.u32 2102212464, %v2131
  %v2141 = vor.u32 %v2139, %v2140
  %v2142 = vshll.u32 2102212464, %v2130
  %v2143 = vshrl.u32 920167782, %v2131
  %v2144 = vor.u32 %v2142, %v2143
  %v2145 = vshll.u32 920167782, %v2130
  %v2146 = vshrl.u32 1326507024, %v2131
  %v2147 = vor.u32 %v2145, %v2146
  %vm2148 = vcmp.lt.s32.totalorder %v2129, 1
  %vm2149 = vcmp.lt.s32.totalorder %v2129, 2
  %vm2150 = vcmp.lt.s32.totalorder %v2129, 3
  %vm2151 = vcmp.lt.s32.totalorder %v2129, 4
  %v2152 = vsel %vm2148, %v2132, %v2135
  %v2153 = vsel %vm2151, %v2141, 2102212464
  %v2154 = vsel %vm2150, %v2138, %v2153
  %v2155 = vsel %vm2149, %v2152, %v2154
  %v2156 = vsel %vm2148, %v2135, %v2138
  %v2157 = vsel %vm2151, %v2144, 920167782
  %v2158 = vsel %vm2150, %v2141, %v2157
  %v2159 = vsel %vm2149, %v2156, %v2158
  %v2160 = vsel %vm2148, %v2138, %v2141
  %v2161 = vsel %vm2151, %v2147, 1326507024
  %v2162 = vsel %vm2150, %v2144, %v2161
  %v2163 = vsel %vm2149, %v2160, %v2162
  %v2164 = vshll.u32 %v2124, 8
  %v2165 = vmul.u32.u64.compose %v2164, %v2163
  %v2166 = vextract.low.u32 %v2165
  %v2167 = vextract.high.u32 %v2165
  %v2168 = vmul.u32.u64.compose %v2164, %v2159
  %v2169 = vextract.low.u32 %v2168
  %v2170 = vextract.high.u32 %v2168
  %v2171 = vmul.u32 %v2164, %v2155
  %v2172 = vadd.s32 %v2167, %v2169
  %vm2173 = vc.u32 %v2167, %v2169
  %v2174 = vadd.s32 %v2170, 1
  %v2175 = vsel %vm2173, %v2174, %v2170
  %v2176 = vadd.s32 %v2171, %v2175
  %v2177 = vadd.s32 %v2176, 536870912
  %v2178 = vshrl.u32 %v2177, 30
  %v2179 = vshll.u32 %v2178, 30
  %v2180 = vsub.s32 %v2176, %v2179
  %vm2181 = vcmp.lt.s32.totalorder %v2180, 0
  %v2182 = vsub.s32 0, %v2180
  %v2183 = vsel %vm2181, %v2182, %v2180
  %v2184 = vclz %v2183
  %v2185 = vsub.s32 %v2184, 2
  %vm2186 = vcmp.gt.s32.totalorder 0, %v2185
  %v2187 = vsel %vm2186, 0, %v2185
  %v2188 = vsub.s32 32, %v2187
  %v2189 = vshll.u32 %v2180, %v2187
  %v2190 = vshrl.u32 %v2172, %v2188
  %v2191 = vor.u32 %v2189, %v2190
  %v2192 = vsub.s32 4294967266, %v2187
  %v2193 = vadd.s32 %v2192, 127
  %v2194 = vshll.u32 %v2193, 23
  %v2195 = vor.u32 4788187, %v2194
  %v2196 = vand.u32 2147483647, %v2195
  %v2198 = vcvt.s32.f32 %v2191
  %v2199 = vmul.f32 %v2198, %v2196
  %v2200 = vxor.u32 %v2199, 2147483648
  %v2201 = vsel %vm2118, %v2200, %v2199
  %v2202 = vsub.s32 4, %v2178
  %v2203 = vsel %vm2118, %v2202, %v2178
  %v2204 = vsel %vm2117, %v28, %v2201
  %v2205 = vsel %vm2117, 0, %v2203
  %v2206 = vcosq.f32.pop %v2204
  %v2207 = vsinq.f32.pop %v2204
  %vm2208 = vweird.f32 %v28
  %v2209 = vand.u32 %v2205, 3
  %vm2210 = vcmp.lt.s32.totalorder %v2209, 2
  %vm2211 = vcmp.eq.s32.totalorder %v2209, 0
  %v2212 = vxor.u32 %v2207, 2147483648
  %v2213 = vsel %vm2211, %v2206, %v2212
  %vm2214 = vcmp.eq.s32.totalorder %v2209, 2
  %v2215 = vxor.u32 %v2206, 2147483648
  %v2216 = vsel %vm2214, %v2215, %v2207
  %v2217 = vsel %vm2210, %v2213, %v2216
  %v2218 = vsel %vm2208, nan, %v2217
  %v2219 = vand.u32 2147483647, %v29
  %vm2220 = vcmp.le.f32.partialorder %v2219, 0.7853982
  %vm2221 = vcmp.lt.s32.totalorder %v29, 0
  %v2222 = vand.u32 %v29, 2139095040
  %v2223 = vshrl.u32 %v2222, 23
  %v2224 = vsub.s32 %v2223, 127
  %v2225 = vand.u32 2147483647, %v29
  %v2226 = vand.u32 %v2225, 8388607
  %v2227 = vor.u32 %v2226, 8388608
  %v2228 = vsub.s32 0, %v2227
  %v2229 = vadd.s32 %v2224, 1
  %vm2230 = vcmp.gt.s32.totalorder %v2229, 0
  %v2231 = vsel %vm2230, %v2229, 0
  %v2232 = vshrl.u32 %v2231, 5
  %v2233 = vand.u32 %v2231, 31
  %v2234 = vsub.s32 32, %v2233
  %v2235 = vshrl.u32 683565275, %v2234
  %v2236 = vshll.u32 683565275, %v2233
  %v2237 = vshrl.u32 2475754826, %v2234
  %v2238 = vor.u32 %v2236, %v2237
  %v2239 = vshll.u32 2475754826, %v2233
  %v2240 = vshrl.u32 2131351028, %v2234
  %v2241 = vor.u32 %v2239, %v2240
  %v2242 = vshll.u32 2131351028, %v2233
  %v2243 = vshrl.u32 2102212464, %v2234
  %v2244 = vor.u32 %v2242, %v2243
  %v2245 = vshll.u32 2102212464, %v2233
  %v2246 = vshrl.u32 920167782, %v2234
  %v2247 = vor.u32 %v2245, %v2246
  %v2248 = vshll.u32 920167782, %v2233
  %v2249 = vshrl.u32 1326507024, %v2234
  %v2250 = vor.u32 %v2248, %v2249
  %vm2251 = vcmp.lt.s32.totalorder %v2232, 1
  %vm2252 = vcmp.lt.s32.totalorder %v2232, 2
  %vm2253 = vcmp.lt.s32.totalorder %v2232, 3
  %vm2254 = vcmp.lt.s32.totalorder %v2232, 4
  %v2255 = vsel %vm2251, %v2235, %v2238
  %v2256 = vsel %vm2254, %v2244, 2102212464
  %v2257 = vsel %vm2253, %v2241, %v2256
  %v2258 = vsel %vm2252, %v2255, %v2257
  %v2259 = vsel %vm2251, %v2238, %v2241
  %v2260 = vsel %vm2254, %v2247, 920167782
  %v2261 = vsel %vm2253, %v2244, %v2260
  %v2262 = vsel %vm2252, %v2259, %v2261
  %v2263 = vsel %vm2251, %v2241, %v2244
  %v2264 = vsel %vm2254, %v2250, 1326507024
  %v2265 = vsel %vm2253, %v2247, %v2264
  %v2266 = vsel %vm2252, %v2263, %v2265
  %v2267 = vshll.u32 %v2227, 8
  %v2268 = vmul.u32.u64.compose %v2267, %v2266
  %v2269 = vextract.low.u32 %v2268
  %v2270 = vextract.high.u32 %v2268
  %v2271 = vmul.u32.u64.compose %v2267, %v2262
  %v2272 = vextract.low.u32 %v2271
  %v2273 = vextract.high.u32 %v2271
  %v2274 = vmul.u32 %v2267, %v2258
  %v2275 = vadd.s32 %v2270, %v2272
  %vm2276 = vc.u32 %v2270, %v2272
  %v2277 = vadd.s32 %v2273, 1
  %v2278 = vsel %vm2276, %v2277, %v2273
  %v2279 = vadd.s32 %v2274, %v2278
  %v2280 = vadd.s32 %v2279, 536870912
  %v2281 = vshrl.u32 %v2280, 30
  %v2282 = vshll.u32 %v2281, 30
  %v2283 = vsub.s32 %v2279, %v2282
  %vm2284 = vcmp.lt.s32.totalorder %v2283, 0
  %v2285 = vsub.s32 0, %v2283
  %v2286 = vsel %vm2284, %v2285, %v2283
  %v2287 = vclz %v2286
  %v2288 = vsub.s32 %v2287, 2
  %vm2289 = vcmp.gt.s32.totalorder 0, %v2288
  %v2290 = vsel %vm2289, 0, %v2288
  %v2291 = vsub.s32 32, %v2290
  %v2292 = vshll.u32 %v2283, %v2290
  %v2293 = vshrl.u32 %v2275, %v2291
  %v2294 = vor.u32 %v2292, %v2293
  %v2295 = vsub.s32 4294967266, %v2290
  %v2296 = vadd.s32 %v2295, 127
  %v2297 = vshll.u32 %v2296, 23
  %v2298 = vor.u32 4788187, %v2297
  %v2299 = vand.u32 2147483647, %v2298
  %v2301 = vcvt.s32.f32 %v2294
  %v2302 = vmul.f32 %v2301, %v2299
  %v2303 = vxor.u32 %v2302, 2147483648
  %v2304 = vsel %vm2221, %v2303, %v2302
  %v2305 = vsub.s32 4, %v2281
  %v2306 = vsel %vm2221, %v2305, %v2281
  %v2307 = vsel %vm2220, %v29, %v2304
  %v2308 = vsel %vm2220, 0, %v2306
  %v2309 = vcosq.f32.pop %v2307
  %v2310 = vsinq.f32.pop %v2307
  %vm2311 = vweird.f32 %v29
  %v2312 = vand.u32 %v2308, 3
  %vm2313 = vcmp.lt.s32.totalorder %v2312, 2
  %vm2314 = vcmp.eq.s32.totalorder %v2312, 0
  %v2315 = vxor.u32 %v2310, 2147483648
  %v2316 = vsel %vm2314, %v2309, %v2315
  %vm2317 = vcmp.eq.s32.totalorder %v2312, 2
  %v2318 = vxor.u32 %v2309, 2147483648
  %v2319 = vsel %vm2317, %v2318, %v2310
  %v2320 = vsel %vm2313, %v2316, %v2319
  %v2321 = vsel %vm2311, nan, %v2320
  %v2322 = vand.u32 2147483647, %v30
  %vm2323 = vcmp.le.f32.partialorder %v2322, 0.7853982
  %vm2324 = vcmp.lt.s32.totalorder %v30, 0
  %v2325 = vand.u32 %v30, 2139095040
  %v2326 = vshrl.u32 %v2325, 23
  %v2327 = vsub.s32 %v2326, 127
  %v2328 = vand.u32 2147483647, %v30
  %v2329 = vand.u32 %v2328, 8388607
  %v2330 = vor.u32 %v2329, 8388608
  %v2331 = vsub.s32 0, %v2330
  %v2332 = vadd.s32 %v2327, 1
  %vm2333 = vcmp.gt.s32.totalorder %v2332, 0
  %v2334 = vsel %vm2333, %v2332, 0
  %v2335 = vshrl.u32 %v2334, 5
  %v2336 = vand.u32 %v2334, 31
  %v2337 = vsub.s32 32, %v2336
  %v2338 = vshrl.u32 683565275, %v2337
  %v2339 = vshll.u32 683565275, %v2336
  %v2340 = vshrl.u32 2475754826, %v2337
  %v2341 = vor.u32 %v2339, %v2340
  %v2342 = vshll.u32 2475754826, %v2336
  %v2343 = vshrl.u32 2131351028, %v2337
  %v2344 = vor.u32 %v2342, %v2343
  %v2345 = vshll.u32 2131351028, %v2336
  %v2346 = vshrl.u32 2102212464, %v2337
  %v2347 = vor.u32 %v2345, %v2346
  %v2348 = vshll.u32 2102212464, %v2336
  %v2349 = vshrl.u32 920167782, %v2337
  %v2350 = vor.u32 %v2348, %v2349
  %v2351 = vshll.u32 920167782, %v2336
  %v2352 = vshrl.u32 1326507024, %v2337
  %v2353 = vor.u32 %v2351, %v2352
  %vm2354 = vcmp.lt.s32.totalorder %v2335, 1
  %vm2355 = vcmp.lt.s32.totalorder %v2335, 2
  %vm2356 = vcmp.lt.s32.totalorder %v2335, 3
  %vm2357 = vcmp.lt.s32.totalorder %v2335, 4
  %v2358 = vsel %vm2354, %v2338, %v2341
  %v2359 = vsel %vm2357, %v2347, 2102212464
  %v2360 = vsel %vm2356, %v2344, %v2359
  %v2361 = vsel %vm2355, %v2358, %v2360
  %v2362 = vsel %vm2354, %v2341, %v2344
  %v2363 = vsel %vm2357, %v2350, 920167782
  %v2364 = vsel %vm2356, %v2347, %v2363
  %v2365 = vsel %vm2355, %v2362, %v2364
  %v2366 = vsel %vm2354, %v2344, %v2347
  %v2367 = vsel %vm2357, %v2353, 1326507024
  %v2368 = vsel %vm2356, %v2350, %v2367
  %v2369 = vsel %vm2355, %v2366, %v2368
  %v2370 = vshll.u32 %v2330, 8
  %v2371 = vmul.u32.u64.compose %v2370, %v2369
  %v2372 = vextract.low.u32 %v2371
  %v2373 = vextract.high.u32 %v2371
  %v2374 = vmul.u32.u64.compose %v2370, %v2365
  %v2375 = vextract.low.u32 %v2374
  %v2376 = vextract.high.u32 %v2374
  %v2377 = vmul.u32 %v2370, %v2361
  %v2378 = vadd.s32 %v2373, %v2375
  %vm2379 = vc.u32 %v2373, %v2375
  %v2380 = vadd.s32 %v2376, 1
  %v2381 = vsel %vm2379, %v2380, %v2376
  %v2382 = vadd.s32 %v2377, %v2381
  %v2383 = vadd.s32 %v2382, 536870912
  %v2384 = vshrl.u32 %v2383, 30
  %v2385 = vshll.u32 %v2384, 30
  %v2386 = vsub.s32 %v2382, %v2385
  %vm2387 = vcmp.lt.s32.totalorder %v2386, 0
  %v2388 = vsub.s32 0, %v2386
  %v2389 = vsel %vm2387, %v2388, %v2386
  %v2390 = vclz %v2389
  %v2391 = vsub.s32 %v2390, 2
  %vm2392 = vcmp.gt.s32.totalorder 0, %v2391
  %v2393 = vsel %vm2392, 0, %v2391
  %v2394 = vsub.s32 32, %v2393
  %v2395 = vshll.u32 %v2386, %v2393
  %v2396 = vshrl.u32 %v2378, %v2394
  %v2397 = vor.u32 %v2395, %v2396
  %v2398 = vsub.s32 4294967266, %v2393
  %v2399 = vadd.s32 %v2398, 127
  %v2400 = vshll.u32 %v2399, 23
  %v2401 = vor.u32 4788187, %v2400
  %v2402 = vand.u32 2147483647, %v2401
  %v2404 = vcvt.s32.f32 %v2397
  %v2405 = vmul.f32 %v2404, %v2402
  %v2406 = vxor.u32 %v2405, 2147483648
  %v2407 = vsel %vm2324, %v2406, %v2405
  %v2408 = vsub.s32 4, %v2384
  %v2409 = vsel %vm2324, %v2408, %v2384
  %v2410 = vsel %vm2323, %v30, %v2407
  %v2411 = vsel %vm2323, 0, %v2409
  %v2412 = vcosq.f32.pop %v2410
  %v2413 = vsinq.f32.pop %v2410
  %vm2414 = vweird.f32 %v30
  %v2415 = vand.u32 %v2411, 3
  %vm2416 = vcmp.lt.s32.totalorder %v2415, 2
  %vm2417 = vcmp.eq.s32.totalorder %v2415, 0
  %v2418 = vxor.u32 %v2413, 2147483648
  %v2419 = vsel %vm2417, %v2412, %v2418
  %vm2420 = vcmp.eq.s32.totalorder %v2415, 2
  %v2421 = vxor.u32 %v2412, 2147483648
  %v2422 = vsel %vm2420, %v2421, %v2413
  %v2423 = vsel %vm2416, %v2419, %v2422
  %v2424 = vsel %vm2414, nan, %v2423
  %v2425 = vand.u32 2147483647, %v31
  %vm2426 = vcmp.le.f32.partialorder %v2425, 0.7853982
  %vm2427 = vcmp.lt.s32.totalorder %v31, 0
  %v2428 = vand.u32 %v31, 2139095040
  %v2429 = vshrl.u32 %v2428, 23
  %v2430 = vsub.s32 %v2429, 127
  %v2431 = vand.u32 2147483647, %v31
  %v2432 = vand.u32 %v2431, 8388607
  %v2433 = vor.u32 %v2432, 8388608
  %v2434 = vsub.s32 0, %v2433
  %v2435 = vadd.s32 %v2430, 1
  %vm2436 = vcmp.gt.s32.totalorder %v2435, 0
  %v2437 = vsel %vm2436, %v2435, 0
  %v2438 = vshrl.u32 %v2437, 5
  %v2439 = vand.u32 %v2437, 31
  %v2440 = vsub.s32 32, %v2439
  %v2441 = vshrl.u32 683565275, %v2440
  %v2442 = vshll.u32 683565275, %v2439
  %v2443 = vshrl.u32 2475754826, %v2440
  %v2444 = vor.u32 %v2442, %v2443
  %v2445 = vshll.u32 2475754826, %v2439
  %v2446 = vshrl.u32 2131351028, %v2440
  %v2447 = vor.u32 %v2445, %v2446
  %v2448 = vshll.u32 2131351028, %v2439
  %v2449 = vshrl.u32 2102212464, %v2440
  %v2450 = vor.u32 %v2448, %v2449
  %v2451 = vshll.u32 2102212464, %v2439
  %v2452 = vshrl.u32 920167782, %v2440
  %v2453 = vor.u32 %v2451, %v2452
  %v2454 = vshll.u32 920167782, %v2439
  %v2455 = vshrl.u32 1326507024, %v2440
  %v2456 = vor.u32 %v2454, %v2455
  %vm2457 = vcmp.lt.s32.totalorder %v2438, 1
  %vm2458 = vcmp.lt.s32.totalorder %v2438, 2
  %vm2459 = vcmp.lt.s32.totalorder %v2438, 3
  %vm2460 = vcmp.lt.s32.totalorder %v2438, 4
  %v2461 = vsel %vm2457, %v2441, %v2444
  %v2462 = vsel %vm2460, %v2450, 2102212464
  %v2463 = vsel %vm2459, %v2447, %v2462
  %v2464 = vsel %vm2458, %v2461, %v2463
  %v2465 = vsel %vm2457, %v2444, %v2447
  %v2466 = vsel %vm2460, %v2453, 920167782
  %v2467 = vsel %vm2459, %v2450, %v2466
  %v2468 = vsel %vm2458, %v2465, %v2467
  %v2469 = vsel %vm2457, %v2447, %v2450
  %v2470 = vsel %vm2460, %v2456, 1326507024
  %v2471 = vsel %vm2459, %v2453, %v2470
  %v2472 = vsel %vm2458, %v2469, %v2471
  %v2473 = vshll.u32 %v2433, 8
  %v2474 = vmul.u32.u64.compose %v2473, %v2472
  %v2475 = vextract.low.u32 %v2474
  %v2476 = vextract.high.u32 %v2474
  %v2477 = vmul.u32.u64.compose %v2473, %v2468
  %v2478 = vextract.low.u32 %v2477
  %v2479 = vextract.high.u32 %v2477
  %v2480 = vmul.u32 %v2473, %v2464
  %v2481 = vadd.s32 %v2476, %v2478
  %vm2482 = vc.u32 %v2476, %v2478
  %v2483 = vadd.s32 %v2479, 1
  %v2484 = vsel %vm2482, %v2483, %v2479
  %v2485 = vadd.s32 %v2480, %v2484
  %v2486 = vadd.s32 %v2485, 536870912
  %v2487 = vshrl.u32 %v2486, 30
  %v2488 = vshll.u32 %v2487, 30
  %v2489 = vsub.s32 %v2485, %v2488
  %vm2490 = vcmp.lt.s32.totalorder %v2489, 0
  %v2491 = vsub.s32 0, %v2489
  %v2492 = vsel %vm2490, %v2491, %v2489
  %v2493 = vclz %v2492
  %v2494 = vsub.s32 %v2493, 2
  %vm2495 = vcmp.gt.s32.totalorder 0, %v2494
  %v2496 = vsel %vm2495, 0, %v2494
  %v2497 = vsub.s32 32, %v2496
  %v2498 = vshll.u32 %v2489, %v2496
  %v2499 = vshrl.u32 %v2481, %v2497
  %v2500 = vor.u32 %v2498, %v2499
  %v2501 = vsub.s32 4294967266, %v2496
  %v2502 = vadd.s32 %v2501, 127
  %v2503 = vshll.u32 %v2502, 23
  %v2504 = vor.u32 4788187, %v2503
  %v2505 = vand.u32 2147483647, %v2504
  %v2507 = vcvt.s32.f32 %v2500
  %v2508 = vmul.f32 %v2507, %v2505
  %v2509 = vxor.u32 %v2508, 2147483648
  %v2510 = vsel %vm2427, %v2509, %v2508
  %v2511 = vsub.s32 4, %v2487
  %v2512 = vsel %vm2427, %v2511, %v2487
  %v2513 = vsel %vm2426, %v31, %v2510
  %v2514 = vsel %vm2426, 0, %v2512
  %v2515 = vcosq.f32.pop %v2513
  %v2516 = vsinq.f32.pop %v2513
  %vm2517 = vweird.f32 %v31
  %v2518 = vand.u32 %v2514, 3
  %vm2519 = vcmp.lt.s32.totalorder %v2518, 2
  %vm2520 = vcmp.eq.s32.totalorder %v2518, 0
  %v2521 = vxor.u32 %v2516, 2147483648
  %v2522 = vsel %vm2520, %v2515, %v2521
  %vm2523 = vcmp.eq.s32.totalorder %v2518, 2
  %v2524 = vxor.u32 %v2515, 2147483648
  %v2525 = vsel %vm2523, %v2524, %v2516
  %v2526 = vsel %vm2519, %v2522, %v2525
  %v2527 = vsel %vm2517, nan, %v2526
  %v2528 = vand.u32 2147483647, %v32
  %vm2529 = vcmp.le.f32.partialorder %v2528, 0.7853982
  %vm2530 = vcmp.lt.s32.totalorder %v32, 0
  %v2531 = vand.u32 %v32, 2139095040
  %v2532 = vshrl.u32 %v2531, 23
  %v2533 = vsub.s32 %v2532, 127
  %v2534 = vand.u32 2147483647, %v32
  %v2535 = vand.u32 %v2534, 8388607
  %v2536 = vor.u32 %v2535, 8388608
  %v2537 = vsub.s32 0, %v2536
  %v2538 = vadd.s32 %v2533, 1
  %vm2539 = vcmp.gt.s32.totalorder %v2538, 0
  %v2540 = vsel %vm2539, %v2538, 0
  %v2541 = vshrl.u32 %v2540, 5
  %v2542 = vand.u32 %v2540, 31
  %v2543 = vsub.s32 32, %v2542
  %v2544 = vshrl.u32 683565275, %v2543
  %v2545 = vshll.u32 683565275, %v2542
  %v2546 = vshrl.u32 2475754826, %v2543
  %v2547 = vor.u32 %v2545, %v2546
  %v2548 = vshll.u32 2475754826, %v2542
  %v2549 = vshrl.u32 2131351028, %v2543
  %v2550 = vor.u32 %v2548, %v2549
  %v2551 = vshll.u32 2131351028, %v2542
  %v2552 = vshrl.u32 2102212464, %v2543
  %v2553 = vor.u32 %v2551, %v2552
  %v2554 = vshll.u32 2102212464, %v2542
  %v2555 = vshrl.u32 920167782, %v2543
  %v2556 = vor.u32 %v2554, %v2555
  %v2557 = vshll.u32 920167782, %v2542
  %v2558 = vshrl.u32 1326507024, %v2543
  %v2559 = vor.u32 %v2557, %v2558
  %vm2560 = vcmp.lt.s32.totalorder %v2541, 1
  %vm2561 = vcmp.lt.s32.totalorder %v2541, 2
  %vm2562 = vcmp.lt.s32.totalorder %v2541, 3
  %vm2563 = vcmp.lt.s32.totalorder %v2541, 4
  %v2564 = vsel %vm2560, %v2544, %v2547
  %v2565 = vsel %vm2563, %v2553, 2102212464
  %v2566 = vsel %vm2562, %v2550, %v2565
  %v2567 = vsel %vm2561, %v2564, %v2566
  %v2568 = vsel %vm2560, %v2547, %v2550
  %v2569 = vsel %vm2563, %v2556, 920167782
  %v2570 = vsel %vm2562, %v2553, %v2569
  %v2571 = vsel %vm2561, %v2568, %v2570
  %v2572 = vsel %vm2560, %v2550, %v2553
  %v2573 = vsel %vm2563, %v2559, 1326507024
  %v2574 = vsel %vm2562, %v2556, %v2573
  %v2575 = vsel %vm2561, %v2572, %v2574
  %v2576 = vshll.u32 %v2536, 8
  %v2577 = vmul.u32.u64.compose %v2576, %v2575
  %v2578 = vextract.low.u32 %v2577
  %v2579 = vextract.high.u32 %v2577
  %v2580 = vmul.u32.u64.compose %v2576, %v2571
  %v2581 = vextract.low.u32 %v2580
  %v2582 = vextract.high.u32 %v2580
  %v2583 = vmul.u32 %v2576, %v2567
  %v2584 = vadd.s32 %v2579, %v2581
  %vm2585 = vc.u32 %v2579, %v2581
  %v2586 = vadd.s32 %v2582, 1
  %v2587 = vsel %vm2585, %v2586, %v2582
  %v2588 = vadd.s32 %v2583, %v2587
  %v2589 = vadd.s32 %v2588, 536870912
  %v2590 = vshrl.u32 %v2589, 30
  %v2591 = vshll.u32 %v2590, 30
  %v2592 = vsub.s32 %v2588, %v2591
  %vm2593 = vcmp.lt.s32.totalorder %v2592, 0
  %v2594 = vsub.s32 0, %v2592
  %v2595 = vsel %vm2593, %v2594, %v2592
  %v2596 = vclz %v2595
  %v2597 = vsub.s32 %v2596, 2
  %vm2598 = vcmp.gt.s32.totalorder 0, %v2597
  %v2599 = vsel %vm2598, 0, %v2597
  %v2600 = vsub.s32 32, %v2599
  %v2601 = vshll.u32 %v2592, %v2599
  %v2602 = vshrl.u32 %v2584, %v2600
  %v2603 = vor.u32 %v2601, %v2602
  %v2604 = vsub.s32 4294967266, %v2599
  %v2605 = vadd.s32 %v2604, 127
  %v2606 = vshll.u32 %v2605, 23
  %v2607 = vor.u32 4788187, %v2606
  %v2608 = vand.u32 2147483647, %v2607
  %v2610 = vcvt.s32.f32 %v2603
  %v2611 = vmul.f32 %v2610, %v2608
  %v2612 = vxor.u32 %v2611, 2147483648
  %v2613 = vsel %vm2530, %v2612, %v2611
  %v2614 = vsub.s32 4, %v2590
  %v2615 = vsel %vm2530, %v2614, %v2590
  %v2616 = vsel %vm2529, %v32, %v2613
  %v2617 = vsel %vm2529, 0, %v2615
  %v2618 = vcosq.f32.pop %v2616
  %v2619 = vsinq.f32.pop %v2616
  %vm2620 = vweird.f32 %v32
  %v2621 = vand.u32 %v2617, 3
  %vm2622 = vcmp.lt.s32.totalorder %v2621, 2
  %vm2623 = vcmp.eq.s32.totalorder %v2621, 0
  %v2624 = vxor.u32 %v2619, 2147483648
  %v2625 = vsel %vm2623, %v2618, %v2624
  %vm2626 = vcmp.eq.s32.totalorder %v2621, 2
  %v2627 = vxor.u32 %v2618, 2147483648
  %v2628 = vsel %vm2626, %v2627, %v2619
  %v2629 = vsel %vm2622, %v2625, %v2628
  %v2630 = vsel %vm2620, nan, %v2629
  %v2631 = vand.u32 2147483647, %v33
  %vm2632 = vcmp.le.f32.partialorder %v2631, 0.7853982
  %vm2633 = vcmp.lt.s32.totalorder %v33, 0
  %v2634 = vand.u32 %v33, 2139095040
  %v2635 = vshrl.u32 %v2634, 23
  %v2636 = vsub.s32 %v2635, 127
  %v2637 = vand.u32 2147483647, %v33
  %v2638 = vand.u32 %v2637, 8388607
  %v2639 = vor.u32 %v2638, 8388608
  %v2640 = vsub.s32 0, %v2639
  %v2641 = vadd.s32 %v2636, 1
  %vm2642 = vcmp.gt.s32.totalorder %v2641, 0
  %v2643 = vsel %vm2642, %v2641, 0
  %v2644 = vshrl.u32 %v2643, 5
  %v2645 = vand.u32 %v2643, 31
  %v2646 = vsub.s32 32, %v2645
  %v2647 = vshrl.u32 683565275, %v2646
  %v2648 = vshll.u32 683565275, %v2645
  %v2649 = vshrl.u32 2475754826, %v2646
  %v2650 = vor.u32 %v2648, %v2649
  %v2651 = vshll.u32 2475754826, %v2645
  %v2652 = vshrl.u32 2131351028, %v2646
  %v2653 = vor.u32 %v2651, %v2652
  %v2654 = vshll.u32 2131351028, %v2645
  %v2655 = vshrl.u32 2102212464, %v2646
  %v2656 = vor.u32 %v2654, %v2655
  %v2657 = vshll.u32 2102212464, %v2645
  %v2658 = vshrl.u32 920167782, %v2646
  %v2659 = vor.u32 %v2657, %v2658
  %v2660 = vshll.u32 920167782, %v2645
  %v2661 = vshrl.u32 1326507024, %v2646
  %v2662 = vor.u32 %v2660, %v2661
  %vm2663 = vcmp.lt.s32.totalorder %v2644, 1
  %vm2664 = vcmp.lt.s32.totalorder %v2644, 2
  %vm2665 = vcmp.lt.s32.totalorder %v2644, 3
  %vm2666 = vcmp.lt.s32.totalorder %v2644, 4
  %v2667 = vsel %vm2663, %v2647, %v2650
  %v2668 = vsel %vm2666, %v2656, 2102212464
  %v2669 = vsel %vm2665, %v2653, %v2668
  %v2670 = vsel %vm2664, %v2667, %v2669
  %v2671 = vsel %vm2663, %v2650, %v2653
  %v2672 = vsel %vm2666, %v2659, 920167782
  %v2673 = vsel %vm2665, %v2656, %v2672
  %v2674 = vsel %vm2664, %v2671, %v2673
  %v2675 = vsel %vm2663, %v2653, %v2656
  %v2676 = vsel %vm2666, %v2662, 1326507024
  %v2677 = vsel %vm2665, %v2659, %v2676
  %v2678 = vsel %vm2664, %v2675, %v2677
  %v2679 = vshll.u32 %v2639, 8
  %v2680 = vmul.u32.u64.compose %v2679, %v2678
  %v2681 = vextract.low.u32 %v2680
  %v2682 = vextract.high.u32 %v2680
  %v2683 = vmul.u32.u64.compose %v2679, %v2674
  %v2684 = vextract.low.u32 %v2683
  %v2685 = vextract.high.u32 %v2683
  %v2686 = vmul.u32 %v2679, %v2670
  %v2687 = vadd.s32 %v2682, %v2684
  %vm2688 = vc.u32 %v2682, %v2684
  %v2689 = vadd.s32 %v2685, 1
  %v2690 = vsel %vm2688, %v2689, %v2685
  %v2691 = vadd.s32 %v2686, %v2690
  %v2692 = vadd.s32 %v2691, 536870912
  %v2693 = vshrl.u32 %v2692, 30
  %v2694 = vshll.u32 %v2693, 30
  %v2695 = vsub.s32 %v2691, %v2694
  %vm2696 = vcmp.lt.s32.totalorder %v2695, 0
  %v2697 = vsub.s32 0, %v2695
  %v2698 = vsel %vm2696, %v2697, %v2695
  %v2699 = vclz %v2698
  %v2700 = vsub.s32 %v2699, 2
  %vm2701 = vcmp.gt.s32.totalorder 0, %v2700
  %v2702 = vsel %vm2701, 0, %v2700
  %v2703 = vsub.s32 32, %v2702
  %v2704 = vshll.u32 %v2695, %v2702
  %v2705 = vshrl.u32 %v2687, %v2703
  %v2706 = vor.u32 %v2704, %v2705
  %v2707 = vsub.s32 4294967266, %v2702
  %v2708 = vadd.s32 %v2707, 127
  %v2709 = vshll.u32 %v2708, 23
  %v2710 = vor.u32 4788187, %v2709
  %v2711 = vand.u32 2147483647, %v2710
  %v2713 = vcvt.s32.f32 %v2706
  %v2714 = vmul.f32 %v2713, %v2711
  %v2715 = vxor.u32 %v2714, 2147483648
  %v2716 = vsel %vm2633, %v2715, %v2714
  %v2717 = vsub.s32 4, %v2693
  %v2718 = vsel %vm2633, %v2717, %v2693
  %v2719 = vsel %vm2632, %v33, %v2716
  %v2720 = vsel %vm2632, 0, %v2718
  %v2721 = vcosq.f32.pop %v2719
  %v2722 = vsinq.f32.pop %v2719
  %vm2723 = vweird.f32 %v33
  %v2724 = vand.u32 %v2720, 3
  %vm2725 = vcmp.lt.s32.totalorder %v2724, 2
  %vm2726 = vcmp.eq.s32.totalorder %v2724, 0
  %v2727 = vxor.u32 %v2722, 2147483648
  %v2728 = vsel %vm2726, %v2721, %v2727
  %vm2729 = vcmp.eq.s32.totalorder %v2724, 2
  %v2730 = vxor.u32 %v2721, 2147483648
  %v2731 = vsel %vm2729, %v2730, %v2722
  %v2732 = vsel %vm2725, %v2728, %v2731
  %v2733 = vsel %vm2723, nan, %v2732
  %v2734 = vand.u32 2147483647, %v34
  %vm2735 = vcmp.le.f32.partialorder %v2734, 0.7853982
  %vm2736 = vcmp.lt.s32.totalorder %v34, 0
  %v2737 = vand.u32 %v34, 2139095040
  %v2738 = vshrl.u32 %v2737, 23
  %v2739 = vsub.s32 %v2738, 127
  %v2740 = vand.u32 2147483647, %v34
  %v2741 = vand.u32 %v2740, 8388607
  %v2742 = vor.u32 %v2741, 8388608
  %v2743 = vsub.s32 0, %v2742
  %v2744 = vadd.s32 %v2739, 1
  %vm2745 = vcmp.gt.s32.totalorder %v2744, 0
  %v2746 = vsel %vm2745, %v2744, 0
  %v2747 = vshrl.u32 %v2746, 5
  %v2748 = vand.u32 %v2746, 31
  %v2749 = vsub.s32 32, %v2748
  %v2750 = vshrl.u32 683565275, %v2749
  %v2751 = vshll.u32 683565275, %v2748
  %v2752 = vshrl.u32 2475754826, %v2749
  %v2753 = vor.u32 %v2751, %v2752
  %v2754 = vshll.u32 2475754826, %v2748
  %v2755 = vshrl.u32 2131351028, %v2749
  %v2756 = vor.u32 %v2754, %v2755
  %v2757 = vshll.u32 2131351028, %v2748
  %v2758 = vshrl.u32 2102212464, %v2749
  %v2759 = vor.u32 %v2757, %v2758
  %v2760 = vshll.u32 2102212464, %v2748
  %v2761 = vshrl.u32 920167782, %v2749
  %v2762 = vor.u32 %v2760, %v2761
  %v2763 = vshll.u32 920167782, %v2748
  %v2764 = vshrl.u32 1326507024, %v2749
  %v2765 = vor.u32 %v2763, %v2764
  %vm2766 = vcmp.lt.s32.totalorder %v2747, 1
  %vm2767 = vcmp.lt.s32.totalorder %v2747, 2
  %vm2768 = vcmp.lt.s32.totalorder %v2747, 3
  %vm2769 = vcmp.lt.s32.totalorder %v2747, 4
  %v2770 = vsel %vm2766, %v2750, %v2753
  %v2771 = vsel %vm2769, %v2759, 2102212464
  %v2772 = vsel %vm2768, %v2756, %v2771
  %v2773 = vsel %vm2767, %v2770, %v2772
  %v2774 = vsel %vm2766, %v2753, %v2756
  %v2775 = vsel %vm2769, %v2762, 920167782
  %v2776 = vsel %vm2768, %v2759, %v2775
  %v2777 = vsel %vm2767, %v2774, %v2776
  %v2778 = vsel %vm2766, %v2756, %v2759
  %v2779 = vsel %vm2769, %v2765, 1326507024
  %v2780 = vsel %vm2768, %v2762, %v2779
  %v2781 = vsel %vm2767, %v2778, %v2780
  %v2782 = vshll.u32 %v2742, 8
  %v2783 = vmul.u32.u64.compose %v2782, %v2781
  %v2784 = vextract.low.u32 %v2783
  %v2785 = vextract.high.u32 %v2783
  %v2786 = vmul.u32.u64.compose %v2782, %v2777
  %v2787 = vextract.low.u32 %v2786
  %v2788 = vextract.high.u32 %v2786
  %v2789 = vmul.u32 %v2782, %v2773
  %v2790 = vadd.s32 %v2785, %v2787
  %vm2791 = vc.u32 %v2785, %v2787
  %v2792 = vadd.s32 %v2788, 1
  %v2793 = vsel %vm2791, %v2792, %v2788
  %v2794 = vadd.s32 %v2789, %v2793
  %v2795 = vadd.s32 %v2794, 536870912
  %v2796 = vshrl.u32 %v2795, 30
  %v2797 = vshll.u32 %v2796, 30
  %v2798 = vsub.s32 %v2794, %v2797
  %vm2799 = vcmp.lt.s32.totalorder %v2798, 0
  %v2800 = vsub.s32 0, %v2798
  %v2801 = vsel %vm2799, %v2800, %v2798
  %v2802 = vclz %v2801
  %v2803 = vsub.s32 %v2802, 2
  %vm2804 = vcmp.gt.s32.totalorder 0, %v2803
  %v2805 = vsel %vm2804, 0, %v2803
  %v2806 = vsub.s32 32, %v2805
  %v2807 = vshll.u32 %v2798, %v2805
  %v2808 = vshrl.u32 %v2790, %v2806
  %v2809 = vor.u32 %v2807, %v2808
  %v2810 = vsub.s32 4294967266, %v2805
  %v2811 = vadd.s32 %v2810, 127
  %v2812 = vshll.u32 %v2811, 23
  %v2813 = vor.u32 4788187, %v2812
  %v2814 = vand.u32 2147483647, %v2813
  %v2816 = vcvt.s32.f32 %v2809
  %v2817 = vmul.f32 %v2816, %v2814
  %v2818 = vxor.u32 %v2817, 2147483648
  %v2819 = vsel %vm2736, %v2818, %v2817
  %v2820 = vsub.s32 4, %v2796
  %v2821 = vsel %vm2736, %v2820, %v2796
  %v2822 = vsel %vm2735, %v34, %v2819
  %v2823 = vsel %vm2735, 0, %v2821
  %v2824 = vcosq.f32.pop %v2822
  %v2825 = vsinq.f32.pop %v2822
  %vm2826 = vweird.f32 %v34
  %v2827 = vand.u32 %v2823, 3
  %vm2828 = vcmp.lt.s32.totalorder %v2827, 2
  %vm2829 = vcmp.eq.s32.totalorder %v2827, 0
  %v2830 = vxor.u32 %v2825, 2147483648
  %v2831 = vsel %vm2829, %v2824, %v2830
  %vm2832 = vcmp.eq.s32.totalorder %v2827, 2
  %v2833 = vxor.u32 %v2824, 2147483648
  %v2834 = vsel %vm2832, %v2833, %v2825
  %v2835 = vsel %vm2828, %v2831, %v2834
  %v2836 = vsel %vm2826, nan, %v2835
  %v2837 = vand.u32 2147483647, %v35
  %vm2838 = vcmp.le.f32.partialorder %v2837, 0.7853982
  %vm2839 = vcmp.lt.s32.totalorder %v35, 0
  %v2840 = vand.u32 %v35, 2139095040
  %v2841 = vshrl.u32 %v2840, 23
  %v2842 = vsub.s32 %v2841, 127
  %v2843 = vand.u32 2147483647, %v35
  %v2844 = vand.u32 %v2843, 8388607
  %v2845 = vor.u32 %v2844, 8388608
  %v2846 = vsub.s32 0, %v2845
  %v2847 = vadd.s32 %v2842, 1
  %vm2848 = vcmp.gt.s32.totalorder %v2847, 0
  %v2849 = vsel %vm2848, %v2847, 0
  %v2850 = vshrl.u32 %v2849, 5
  %v2851 = vand.u32 %v2849, 31
  %v2852 = vsub.s32 32, %v2851
  %v2853 = vshrl.u32 683565275, %v2852
  %v2854 = vshll.u32 683565275, %v2851
  %v2855 = vshrl.u32 2475754826, %v2852
  %v2856 = vor.u32 %v2854, %v2855
  %v2857 = vshll.u32 2475754826, %v2851
  %v2858 = vshrl.u32 2131351028, %v2852
  %v2859 = vor.u32 %v2857, %v2858
  %v2860 = vshll.u32 2131351028, %v2851
  %v2861 = vshrl.u32 2102212464, %v2852
  %v2862 = vor.u32 %v2860, %v2861
  %v2863 = vshll.u32 2102212464, %v2851
  %v2864 = vshrl.u32 920167782, %v2852
  %v2865 = vor.u32 %v2863, %v2864
  %v2866 = vshll.u32 920167782, %v2851
  %v2867 = vshrl.u32 1326507024, %v2852
  %v2868 = vor.u32 %v2866, %v2867
  %vm2869 = vcmp.lt.s32.totalorder %v2850, 1
  %vm2870 = vcmp.lt.s32.totalorder %v2850, 2
  %vm2871 = vcmp.lt.s32.totalorder %v2850, 3
  %vm2872 = vcmp.lt.s32.totalorder %v2850, 4
  %v2873 = vsel %vm2869, %v2853, %v2856
  %v2874 = vsel %vm2872, %v2862, 2102212464
  %v2875 = vsel %vm2871, %v2859, %v2874
  %v2876 = vsel %vm2870, %v2873, %v2875
  %v2877 = vsel %vm2869, %v2856, %v2859
  %v2878 = vsel %vm2872, %v2865, 920167782
  %v2879 = vsel %vm2871, %v2862, %v2878
  %v2880 = vsel %vm2870, %v2877, %v2879
  %v2881 = vsel %vm2869, %v2859, %v2862
  %v2882 = vsel %vm2872, %v2868, 1326507024
  %v2883 = vsel %vm2871, %v2865, %v2882
  %v2884 = vsel %vm2870, %v2881, %v2883
  %v2885 = vshll.u32 %v2845, 8
  %v2886 = vmul.u32.u64.compose %v2885, %v2884
  %v2887 = vextract.low.u32 %v2886
  %v2888 = vextract.high.u32 %v2886
  %v2889 = vmul.u32.u64.compose %v2885, %v2880
  %v2890 = vextract.low.u32 %v2889
  %v2891 = vextract.high.u32 %v2889
  %v2892 = vmul.u32 %v2885, %v2876
  %v2893 = vadd.s32 %v2888, %v2890
  %vm2894 = vc.u32 %v2888, %v2890
  %v2895 = vadd.s32 %v2891, 1
  %v2896 = vsel %vm2894, %v2895, %v2891
  %v2897 = vadd.s32 %v2892, %v2896
  %v2898 = vadd.s32 %v2897, 536870912
  %v2899 = vshrl.u32 %v2898, 30
  %v2900 = vshll.u32 %v2899, 30
  %v2901 = vsub.s32 %v2897, %v2900
  %vm2902 = vcmp.lt.s32.totalorder %v2901, 0
  %v2903 = vsub.s32 0, %v2901
  %v2904 = vsel %vm2902, %v2903, %v2901
  %v2905 = vclz %v2904
  %v2906 = vsub.s32 %v2905, 2
  %vm2907 = vcmp.gt.s32.totalorder 0, %v2906
  %v2908 = vsel %vm2907, 0, %v2906
  %v2909 = vsub.s32 32, %v2908
  %v2910 = vshll.u32 %v2901, %v2908
  %v2911 = vshrl.u32 %v2893, %v2909
  %v2912 = vor.u32 %v2910, %v2911
  %v2913 = vsub.s32 4294967266, %v2908
  %v2914 = vadd.s32 %v2913, 127
  %v2915 = vshll.u32 %v2914, 23
  %v2916 = vor.u32 4788187, %v2915
  %v2917 = vand.u32 2147483647, %v2916
  %v2919 = vcvt.s32.f32 %v2912
  %v2920 = vmul.f32 %v2919, %v2917
  %v2921 = vxor.u32 %v2920, 2147483648
  %v2922 = vsel %vm2839, %v2921, %v2920
  %v2923 = vsub.s32 4, %v2899
  %v2924 = vsel %vm2839, %v2923, %v2899
  %v2925 = vsel %vm2838, %v35, %v2922
  %v2926 = vsel %vm2838, 0, %v2924
  %v2927 = vcosq.f32.pop %v2925
  %v2928 = vsinq.f32.pop %v2925
  %vm2929 = vweird.f32 %v35
  %v2930 = vand.u32 %v2926, 3
  %vm2931 = vcmp.lt.s32.totalorder %v2930, 2
  %vm2932 = vcmp.eq.s32.totalorder %v2930, 0
  %v2933 = vxor.u32 %v2928, 2147483648
  %v2934 = vsel %vm2932, %v2927, %v2933
  %vm2935 = vcmp.eq.s32.totalorder %v2930, 2
  %v2936 = vxor.u32 %v2927, 2147483648
  %v2937 = vsel %vm2935, %v2936, %v2928
  %v2938 = vsel %vm2931, %v2934, %v2937
  %v2939 = vsel %vm2929, nan, %v2938
  %v2940 = vand.u32 2147483647, %v36
  %vm2941 = vcmp.le.f32.partialorder %v2940, 0.7853982
  %vm2942 = vcmp.lt.s32.totalorder %v36, 0
  %v2943 = vand.u32 %v36, 2139095040
  %v2944 = vshrl.u32 %v2943, 23
  %v2945 = vsub.s32 %v2944, 127
  %v2946 = vand.u32 2147483647, %v36
  %v2947 = vand.u32 %v2946, 8388607
  %v2948 = vor.u32 %v2947, 8388608
  %v2949 = vsub.s32 0, %v2948
  %v2950 = vadd.s32 %v2945, 1
  %vm2951 = vcmp.gt.s32.totalorder %v2950, 0
  %v2952 = vsel %vm2951, %v2950, 0
  %v2953 = vshrl.u32 %v2952, 5
  %v2954 = vand.u32 %v2952, 31
  %v2955 = vsub.s32 32, %v2954
  %v2956 = vshrl.u32 683565275, %v2955
  %v2957 = vshll.u32 683565275, %v2954
  %v2958 = vshrl.u32 2475754826, %v2955
  %v2959 = vor.u32 %v2957, %v2958
  %v2960 = vshll.u32 2475754826, %v2954
  %v2961 = vshrl.u32 2131351028, %v2955
  %v2962 = vor.u32 %v2960, %v2961
  %v2963 = vshll.u32 2131351028, %v2954
  %v2964 = vshrl.u32 2102212464, %v2955
  %v2965 = vor.u32 %v2963, %v2964
  %v2966 = vshll.u32 2102212464, %v2954
  %v2967 = vshrl.u32 920167782, %v2955
  %v2968 = vor.u32 %v2966, %v2967
  %v2969 = vshll.u32 920167782, %v2954
  %v2970 = vshrl.u32 1326507024, %v2955
  %v2971 = vor.u32 %v2969, %v2970
  %vm2972 = vcmp.lt.s32.totalorder %v2953, 1
  %vm2973 = vcmp.lt.s32.totalorder %v2953, 2
  %vm2974 = vcmp.lt.s32.totalorder %v2953, 3
  %vm2975 = vcmp.lt.s32.totalorder %v2953, 4
  %v2976 = vsel %vm2972, %v2956, %v2959
  %v2977 = vsel %vm2975, %v2965, 2102212464
  %v2978 = vsel %vm2974, %v2962, %v2977
  %v2979 = vsel %vm2973, %v2976, %v2978
  %v2980 = vsel %vm2972, %v2959, %v2962
  %v2981 = vsel %vm2975, %v2968, 920167782
  %v2982 = vsel %vm2974, %v2965, %v2981
  %v2983 = vsel %vm2973, %v2980, %v2982
  %v2984 = vsel %vm2972, %v2962, %v2965
  %v2985 = vsel %vm2975, %v2971, 1326507024
  %v2986 = vsel %vm2974, %v2968, %v2985
  %v2987 = vsel %vm2973, %v2984, %v2986
  %v2988 = vshll.u32 %v2948, 8
  %v2989 = vmul.u32.u64.compose %v2988, %v2987
  %v2990 = vextract.low.u32 %v2989
  %v2991 = vextract.high.u32 %v2989
  %v2992 = vmul.u32.u64.compose %v2988, %v2983
  %v2993 = vextract.low.u32 %v2992
  %v2994 = vextract.high.u32 %v2992
  %v2995 = vmul.u32 %v2988, %v2979
  %v2996 = vadd.s32 %v2991, %v2993
  %vm2997 = vc.u32 %v2991, %v2993
  %v2998 = vadd.s32 %v2994, 1
  %v2999 = vsel %vm2997, %v2998, %v2994
  %v3000 = vadd.s32 %v2995, %v2999
  %v3001 = vadd.s32 %v3000, 536870912
  %v3002 = vshrl.u32 %v3001, 30
  %v3003 = vshll.u32 %v3002, 30
  %v3004 = vsub.s32 %v3000, %v3003
  %vm3005 = vcmp.lt.s32.totalorder %v3004, 0
  %v3006 = vsub.s32 0, %v3004
  %v3007 = vsel %vm3005, %v3006, %v3004
  %v3008 = vclz %v3007
  %v3009 = vsub.s32 %v3008, 2
  %vm3010 = vcmp.gt.s32.totalorder 0, %v3009
  %v3011 = vsel %vm3010, 0, %v3009
  %v3012 = vsub.s32 32, %v3011
  %v3013 = vshll.u32 %v3004, %v3011
  %v3014 = vshrl.u32 %v2996, %v3012
  %v3015 = vor.u32 %v3013, %v3014
  %v3016 = vsub.s32 4294967266, %v3011
  %v3017 = vadd.s32 %v3016, 127
  %v3018 = vshll.u32 %v3017, 23
  %v3019 = vor.u32 4788187, %v3018
  %v3020 = vand.u32 2147483647, %v3019
  %v3022 = vcvt.s32.f32 %v3015
  %v3023 = vmul.f32 %v3022, %v3020
  %v3024 = vxor.u32 %v3023, 2147483648
  %v3025 = vsel %vm2942, %v3024, %v3023
  %v3026 = vsub.s32 4, %v3002
  %v3027 = vsel %vm2942, %v3026, %v3002
  %v3028 = vsel %vm2941, %v36, %v3025
  %v3029 = vsel %vm2941, 0, %v3027
  %v3030 = vcosq.f32.pop %v3028
  %v3031 = vsinq.f32.pop %v3028
  %vm3032 = vweird.f32 %v36
  %v3033 = vand.u32 %v3029, 3
  %vm3034 = vcmp.lt.s32.totalorder %v3033, 2
  %vm3035 = vcmp.eq.s32.totalorder %v3033, 0
  %v3036 = vxor.u32 %v3031, 2147483648
  %v3037 = vsel %vm3035, %v3030, %v3036
  %vm3038 = vcmp.eq.s32.totalorder %v3033, 2
  %v3039 = vxor.u32 %v3030, 2147483648
  %v3040 = vsel %vm3038, %v3039, %v3031
  %v3041 = vsel %vm3034, %v3037, %v3040
  %v3042 = vsel %vm3032, nan, %v3041
  %v3043 = vand.u32 2147483647, %v37
  %vm3044 = vcmp.le.f32.partialorder %v3043, 0.7853982
  %vm3045 = vcmp.lt.s32.totalorder %v37, 0
  %v3046 = vand.u32 %v37, 2139095040
  %v3047 = vshrl.u32 %v3046, 23
  %v3048 = vsub.s32 %v3047, 127
  %v3049 = vand.u32 2147483647, %v37
  %v3050 = vand.u32 %v3049, 8388607
  %v3051 = vor.u32 %v3050, 8388608
  %v3052 = vsub.s32 0, %v3051
  %v3053 = vadd.s32 %v3048, 1
  %vm3054 = vcmp.gt.s32.totalorder %v3053, 0
  %v3055 = vsel %vm3054, %v3053, 0
  %v3056 = vshrl.u32 %v3055, 5
  %v3057 = vand.u32 %v3055, 31
  %v3058 = vsub.s32 32, %v3057
  %v3059 = vshrl.u32 683565275, %v3058
  %v3060 = vshll.u32 683565275, %v3057
  %v3061 = vshrl.u32 2475754826, %v3058
  %v3062 = vor.u32 %v3060, %v3061
  %v3063 = vshll.u32 2475754826, %v3057
  %v3064 = vshrl.u32 2131351028, %v3058
  %v3065 = vor.u32 %v3063, %v3064
  %v3066 = vshll.u32 2131351028, %v3057
  %v3067 = vshrl.u32 2102212464, %v3058
  %v3068 = vor.u32 %v3066, %v3067
  %v3069 = vshll.u32 2102212464, %v3057
  %v3070 = vshrl.u32 920167782, %v3058
  %v3071 = vor.u32 %v3069, %v3070
  %v3072 = vshll.u32 920167782, %v3057
  %v3073 = vshrl.u32 1326507024, %v3058
  %v3074 = vor.u32 %v3072, %v3073
  %vm3075 = vcmp.lt.s32.totalorder %v3056, 1
  %vm3076 = vcmp.lt.s32.totalorder %v3056, 2
  %vm3077 = vcmp.lt.s32.totalorder %v3056, 3
  %vm3078 = vcmp.lt.s32.totalorder %v3056, 4
  %v3079 = vsel %vm3075, %v3059, %v3062
  %v3080 = vsel %vm3078, %v3068, 2102212464
  %v3081 = vsel %vm3077, %v3065, %v3080
  %v3082 = vsel %vm3076, %v3079, %v3081
  %v3083 = vsel %vm3075, %v3062, %v3065
  %v3084 = vsel %vm3078, %v3071, 920167782
  %v3085 = vsel %vm3077, %v3068, %v3084
  %v3086 = vsel %vm3076, %v3083, %v3085
  %v3087 = vsel %vm3075, %v3065, %v3068
  %v3088 = vsel %vm3078, %v3074, 1326507024
  %v3089 = vsel %vm3077, %v3071, %v3088
  %v3090 = vsel %vm3076, %v3087, %v3089
  %v3091 = vshll.u32 %v3051, 8
  %v3092 = vmul.u32.u64.compose %v3091, %v3090
  %v3093 = vextract.low.u32 %v3092
  %v3094 = vextract.high.u32 %v3092
  %v3095 = vmul.u32.u64.compose %v3091, %v3086
  %v3096 = vextract.low.u32 %v3095
  %v3097 = vextract.high.u32 %v3095
  %v3098 = vmul.u32 %v3091, %v3082
  %v3099 = vadd.s32 %v3094, %v3096
  %vm3100 = vc.u32 %v3094, %v3096
  %v3101 = vadd.s32 %v3097, 1
  %v3102 = vsel %vm3100, %v3101, %v3097
  %v3103 = vadd.s32 %v3098, %v3102
  %v3104 = vadd.s32 %v3103, 536870912
  %v3105 = vshrl.u32 %v3104, 30
  %v3106 = vshll.u32 %v3105, 30
  %v3107 = vsub.s32 %v3103, %v3106
  %vm3108 = vcmp.lt.s32.totalorder %v3107, 0
  %v3109 = vsub.s32 0, %v3107
  %v3110 = vsel %vm3108, %v3109, %v3107
  %v3111 = vclz %v3110
  %v3112 = vsub.s32 %v3111, 2
  %vm3113 = vcmp.gt.s32.totalorder 0, %v3112
  %v3114 = vsel %vm3113, 0, %v3112
  %v3115 = vsub.s32 32, %v3114
  %v3116 = vshll.u32 %v3107, %v3114
  %v3117 = vshrl.u32 %v3099, %v3115
  %v3118 = vor.u32 %v3116, %v3117
  %v3119 = vsub.s32 4294967266, %v3114
  %v3120 = vadd.s32 %v3119, 127
  %v3121 = vshll.u32 %v3120, 23
  %v3122 = vor.u32 4788187, %v3121
  %v3123 = vand.u32 2147483647, %v3122
  %v3125 = vcvt.s32.f32 %v3118
  %v3126 = vmul.f32 %v3125, %v3123
  %v3127 = vxor.u32 %v3126, 2147483648
  %v3128 = vsel %vm3045, %v3127, %v3126
  %v3129 = vsub.s32 4, %v3105
  %v3130 = vsel %vm3045, %v3129, %v3105
  %v3131 = vsel %vm3044, %v37, %v3128
  %v3132 = vsel %vm3044, 0, %v3130
  %v3133 = vcosq.f32.pop %v3131
  %v3134 = vsinq.f32.pop %v3131
  %vm3135 = vweird.f32 %v37
  %v3136 = vand.u32 %v3132, 3
  %vm3137 = vcmp.lt.s32.totalorder %v3136, 2
  %vm3138 = vcmp.eq.s32.totalorder %v3136, 0
  %v3139 = vxor.u32 %v3134, 2147483648
  %v3140 = vsel %vm3138, %v3133, %v3139
  %vm3141 = vcmp.eq.s32.totalorder %v3136, 2
  %v3142 = vxor.u32 %v3133, 2147483648
  %v3143 = vsel %vm3141, %v3142, %v3134
  %v3144 = vsel %vm3137, %v3140, %v3143
  %v3145 = vsel %vm3135, nan, %v3144
  %v3146 = vand.u32 2147483647, %v38
  %vm3147 = vcmp.le.f32.partialorder %v3146, 0.7853982
  %vm3148 = vcmp.lt.s32.totalorder %v38, 0
  %v3149 = vand.u32 %v38, 2139095040
  %v3150 = vshrl.u32 %v3149, 23
  %v3151 = vsub.s32 %v3150, 127
  %v3152 = vand.u32 2147483647, %v38
  %v3153 = vand.u32 %v3152, 8388607
  %v3154 = vor.u32 %v3153, 8388608
  %v3155 = vsub.s32 0, %v3154
  %v3156 = vadd.s32 %v3151, 1
  %vm3157 = vcmp.gt.s32.totalorder %v3156, 0
  %v3158 = vsel %vm3157, %v3156, 0
  %v3159 = vshrl.u32 %v3158, 5
  %v3160 = vand.u32 %v3158, 31
  %v3161 = vsub.s32 32, %v3160
  %v3162 = vshrl.u32 683565275, %v3161
  %v3163 = vshll.u32 683565275, %v3160
  %v3164 = vshrl.u32 2475754826, %v3161
  %v3165 = vor.u32 %v3163, %v3164
  %v3166 = vshll.u32 2475754826, %v3160
  %v3167 = vshrl.u32 2131351028, %v3161
  %v3168 = vor.u32 %v3166, %v3167
  %v3169 = vshll.u32 2131351028, %v3160
  %v3170 = vshrl.u32 2102212464, %v3161
  %v3171 = vor.u32 %v3169, %v3170
  %v3172 = vshll.u32 2102212464, %v3160
  %v3173 = vshrl.u32 920167782, %v3161
  %v3174 = vor.u32 %v3172, %v3173
  %v3175 = vshll.u32 920167782, %v3160
  %v3176 = vshrl.u32 1326507024, %v3161
  %v3177 = vor.u32 %v3175, %v3176
  %vm3178 = vcmp.lt.s32.totalorder %v3159, 1
  %vm3179 = vcmp.lt.s32.totalorder %v3159, 2
  %vm3180 = vcmp.lt.s32.totalorder %v3159, 3
  %vm3181 = vcmp.lt.s32.totalorder %v3159, 4
  %v3182 = vsel %vm3178, %v3162, %v3165
  %v3183 = vsel %vm3181, %v3171, 2102212464
  %v3184 = vsel %vm3180, %v3168, %v3183
  %v3185 = vsel %vm3179, %v3182, %v3184
  %v3186 = vsel %vm3178, %v3165, %v3168
  %v3187 = vsel %vm3181, %v3174, 920167782
  %v3188 = vsel %vm3180, %v3171, %v3187
  %v3189 = vsel %vm3179, %v3186, %v3188
  %v3190 = vsel %vm3178, %v3168, %v3171
  %v3191 = vsel %vm3181, %v3177, 1326507024
  %v3192 = vsel %vm3180, %v3174, %v3191
  %v3193 = vsel %vm3179, %v3190, %v3192
  %v3194 = vshll.u32 %v3154, 8
  %v3195 = vmul.u32.u64.compose %v3194, %v3193
  %v3196 = vextract.low.u32 %v3195
  %v3197 = vextract.high.u32 %v3195
  %v3198 = vmul.u32.u64.compose %v3194, %v3189
  %v3199 = vextract.low.u32 %v3198
  %v3200 = vextract.high.u32 %v3198
  %v3201 = vmul.u32 %v3194, %v3185
  %v3202 = vadd.s32 %v3197, %v3199
  %vm3203 = vc.u32 %v3197, %v3199
  %v3204 = vadd.s32 %v3200, 1
  %v3205 = vsel %vm3203, %v3204, %v3200
  %v3206 = vadd.s32 %v3201, %v3205
  %v3207 = vadd.s32 %v3206, 536870912
  %v3208 = vshrl.u32 %v3207, 30
  %v3209 = vshll.u32 %v3208, 30
  %v3210 = vsub.s32 %v3206, %v3209
  %vm3211 = vcmp.lt.s32.totalorder %v3210, 0
  %v3212 = vsub.s32 0, %v3210
  %v3213 = vsel %vm3211, %v3212, %v3210
  %v3214 = vclz %v3213
  %v3215 = vsub.s32 %v3214, 2
  %vm3216 = vcmp.gt.s32.totalorder 0, %v3215
  %v3217 = vsel %vm3216, 0, %v3215
  %v3218 = vsub.s32 32, %v3217
  %v3219 = vshll.u32 %v3210, %v3217
  %v3220 = vshrl.u32 %v3202, %v3218
  %v3221 = vor.u32 %v3219, %v3220
  %v3222 = vsub.s32 4294967266, %v3217
  %v3223 = vadd.s32 %v3222, 127
  %v3224 = vshll.u32 %v3223, 23
  %v3225 = vor.u32 4788187, %v3224
  %v3226 = vand.u32 2147483647, %v3225
  %v3228 = vcvt.s32.f32 %v3221
  %v3229 = vmul.f32 %v3228, %v3226
  %v3230 = vxor.u32 %v3229, 2147483648
  %v3231 = vsel %vm3148, %v3230, %v3229
  %v3232 = vsub.s32 4, %v3208
  %v3233 = vsel %vm3148, %v3232, %v3208
  %v3234 = vsel %vm3147, %v38, %v3231
  %v3235 = vsel %vm3147, 0, %v3233
  %v3236 = vcosq.f32.pop %v3234
  %v3237 = vsinq.f32.pop %v3234
  %vm3238 = vweird.f32 %v38
  %v3239 = vand.u32 %v3235, 3
  %vm3240 = vcmp.lt.s32.totalorder %v3239, 2
  %vm3241 = vcmp.eq.s32.totalorder %v3239, 0
  %v3242 = vxor.u32 %v3237, 2147483648
  %v3243 = vsel %vm3241, %v3236, %v3242
  %vm3244 = vcmp.eq.s32.totalorder %v3239, 2
  %v3245 = vxor.u32 %v3236, 2147483648
  %v3246 = vsel %vm3244, %v3245, %v3237
  %v3247 = vsel %vm3240, %v3243, %v3246
  %v3248 = vsel %vm3238, nan, %v3247
  %v3249 = vand.u32 2147483647, %v39
  %vm3250 = vcmp.le.f32.partialorder %v3249, 0.7853982
  %vm3251 = vcmp.lt.s32.totalorder %v39, 0
  %v3252 = vand.u32 %v39, 2139095040
  %v3253 = vshrl.u32 %v3252, 23
  %v3254 = vsub.s32 %v3253, 127
  %v3255 = vand.u32 2147483647, %v39
  %v3256 = vand.u32 %v3255, 8388607
  %v3257 = vor.u32 %v3256, 8388608
  %v3258 = vsub.s32 0, %v3257
  %v3259 = vadd.s32 %v3254, 1
  %vm3260 = vcmp.gt.s32.totalorder %v3259, 0
  %v3261 = vsel %vm3260, %v3259, 0
  %v3262 = vshrl.u32 %v3261, 5
  %v3263 = vand.u32 %v3261, 31
  %v3264 = vsub.s32 32, %v3263
  %v3265 = vshrl.u32 683565275, %v3264
  %v3266 = vshll.u32 683565275, %v3263
  %v3267 = vshrl.u32 2475754826, %v3264
  %v3268 = vor.u32 %v3266, %v3267
  %v3269 = vshll.u32 2475754826, %v3263
  %v3270 = vshrl.u32 2131351028, %v3264
  %v3271 = vor.u32 %v3269, %v3270
  %v3272 = vshll.u32 2131351028, %v3263
  %v3273 = vshrl.u32 2102212464, %v3264
  %v3274 = vor.u32 %v3272, %v3273
  %v3275 = vshll.u32 2102212464, %v3263
  %v3276 = vshrl.u32 920167782, %v3264
  %v3277 = vor.u32 %v3275, %v3276
  %v3278 = vshll.u32 920167782, %v3263
  %v3279 = vshrl.u32 1326507024, %v3264
  %v3280 = vor.u32 %v3278, %v3279
  %vm3281 = vcmp.lt.s32.totalorder %v3262, 1
  %vm3282 = vcmp.lt.s32.totalorder %v3262, 2
  %vm3283 = vcmp.lt.s32.totalorder %v3262, 3
  %vm3284 = vcmp.lt.s32.totalorder %v3262, 4
  %v3285 = vsel %vm3281, %v3265, %v3268
  %v3286 = vsel %vm3284, %v3274, 2102212464
  %v3287 = vsel %vm3283, %v3271, %v3286
  %v3288 = vsel %vm3282, %v3285, %v3287
  %v3289 = vsel %vm3281, %v3268, %v3271
  %v3290 = vsel %vm3284, %v3277, 920167782
  %v3291 = vsel %vm3283, %v3274, %v3290
  %v3292 = vsel %vm3282, %v3289, %v3291
  %v3293 = vsel %vm3281, %v3271, %v3274
  %v3294 = vsel %vm3284, %v3280, 1326507024
  %v3295 = vsel %vm3283, %v3277, %v3294
  %v3296 = vsel %vm3282, %v3293, %v3295
  %v3297 = vshll.u32 %v3257, 8
  %v3298 = vmul.u32.u64.compose %v3297, %v3296
  %v3299 = vextract.low.u32 %v3298
  %v3300 = vextract.high.u32 %v3298
  %v3301 = vmul.u32.u64.compose %v3297, %v3292
  %v3302 = vextract.low.u32 %v3301
  %v3303 = vextract.high.u32 %v3301
  %v3304 = vmul.u32 %v3297, %v3288
  %v3305 = vadd.s32 %v3300, %v3302
  %vm3306 = vc.u32 %v3300, %v3302
  %v3307 = vadd.s32 %v3303, 1
  %v3308 = vsel %vm3306, %v3307, %v3303
  %v3309 = vadd.s32 %v3304, %v3308
  %v3310 = vadd.s32 %v3309, 536870912
  %v3311 = vshrl.u32 %v3310, 30
  %v3312 = vshll.u32 %v3311, 30
  %v3313 = vsub.s32 %v3309, %v3312
  %vm3314 = vcmp.lt.s32.totalorder %v3313, 0
  %v3315 = vsub.s32 0, %v3313
  %v3316 = vsel %vm3314, %v3315, %v3313
  %v3317 = vclz %v3316
  %v3318 = vsub.s32 %v3317, 2
  %vm3319 = vcmp.gt.s32.totalorder 0, %v3318
  %v3320 = vsel %vm3319, 0, %v3318
  %v3321 = vsub.s32 32, %v3320
  %v3322 = vshll.u32 %v3313, %v3320
  %v3323 = vshrl.u32 %v3305, %v3321
  %v3324 = vor.u32 %v3322, %v3323
  %v3325 = vsub.s32 4294967266, %v3320
  %v3326 = vadd.s32 %v3325, 127
  %v3327 = vshll.u32 %v3326, 23
  %v3328 = vor.u32 4788187, %v3327
  %v3329 = vand.u32 2147483647, %v3328
  %v3331 = vcvt.s32.f32 %v3324
  %v3332 = vmul.f32 %v3331, %v3329
  %v3333 = vxor.u32 %v3332, 2147483648
  %v3334 = vsel %vm3251, %v3333, %v3332
  %v3335 = vsub.s32 4, %v3311
  %v3336 = vsel %vm3251, %v3335, %v3311
  %v3337 = vsel %vm3250, %v39, %v3334
  %v3338 = vsel %vm3250, 0, %v3336
  %v3339 = vcosq.f32.pop %v3337
  %v3340 = vsinq.f32.pop %v3337
  %vm3341 = vweird.f32 %v39
  %v3342 = vand.u32 %v3338, 3
  %vm3343 = vcmp.lt.s32.totalorder %v3342, 2
  %vm3344 = vcmp.eq.s32.totalorder %v3342, 0
  %v3345 = vxor.u32 %v3340, 2147483648
  %v3346 = vsel %vm3344, %v3339, %v3345
  %vm3347 = vcmp.eq.s32.totalorder %v3342, 2
  %v3348 = vxor.u32 %v3339, 2147483648
  %v3349 = vsel %vm3347, %v3348, %v3340
  %v3350 = vsel %vm3343, %v3346, %v3349
  %v3351 = vsel %vm3341, nan, %v3350
  %v3352 = vmul.f32 %v143, 2.0
  %v3353 = vmul.f32 %v247, 2.0
  %v3354 = vmul.f32 %v351, 2.0
  %v3355 = vmul.f32 %v455, 2.0
  %v3356 = vmul.f32 %v559, 2.0
  %v3357 = vmul.f32 %v663, 2.0
  %v3358 = vmul.f32 %v767, 2.0
  %v3359 = vmul.f32 %v871, 2.0
  %v3360 = vmul.f32 %v975, 2.0
  %v3361 = vmul.f32 %v1079, 2.0
  %v3362 = vmul.f32 %v1183, 2.0
  %v3363 = vmul.f32 %v1287, 2.0
  %v3364 = vmul.f32 %v1391, 2.0
  %v3365 = vmul.f32 %v1495, 2.0
  %v3366 = vmul.f32 %v1599, 2.0
  %v3367 = vmul.f32 %v1703, 2.0
  %v3368 = vmul.f32 %v3352, %v1806
  %v3369 = vmul.f32 %v3353, %v1909
  %v3370 = vmul.f32 %v3354, %v2012
  %v3371 = vmul.f32 %v3355, %v2115
  %v3372 = vmul.f32 %v3356, %v2218
  %v3373 = vmul.f32 %v3357, %v2321
  %v3374 = vmul.f32 %v3358, %v2424
  %v3375 = vmul.f32 %v3359, %v2527
  %v3376 = vmul.f32 %v3360, %v2630
  %v3377 = vmul.f32 %v3361, %v2733
  %v3378 = vmul.f32 %v3362, %v2836
  %v3379 = vmul.f32 %v3363, %v2939
  %v3380 = vmul.f32 %v3364, %v3042
  %v3381 = vmul.f32 %v3365, %v3145
  %v3382 = vmul.f32 %v3366, %v3248
  %v3383 = vmul.f32 %v3367, %v3351
  %v3384 = vmul.f32 %v1806, %v1806
  %v3385 = vmul.f32 %v1909, %v1909
  %v3386 = vmul.f32 %v2012, %v2012
  %v3387 = vmul.f32 %v2115, %v2115
  %v3388 = vmul.f32 %v2218, %v2218
  %v3389 = vmul.f32 %v2321, %v2321
  %v3390 = vmul.f32 %v2424, %v2424
  %v3391 = vmul.f32 %v2527, %v2527
  %v3392 = vmul.f32 %v2630, %v2630
  %v3393 = vmul.f32 %v2733, %v2733
  %v3394 = vmul.f32 %v2836, %v2836
  %v3395 = vmul.f32 %v2939, %v2939
  %v3396 = vmul.f32 %v3042, %v3042
  %v3397 = vmul.f32 %v3145, %v3145
  %v3398 = vmul.f32 %v3248, %v3248
  %v3399 = vmul.f32 %v3351, %v3351
  %v3400 = vmul.f32 %v143, %v143
  %v3401 = vmul.f32 %v247, %v247
  %v3402 = vmul.f32 %v351, %v351
  %v3403 = vmul.f32 %v455, %v455
  %v3404 = vmul.f32 %v559, %v559
  %v3405 = vmul.f32 %v663, %v663
  %v3406 = vmul.f32 %v767, %v767
  %v3407 = vmul.f32 %v871, %v871
  %v3408 = vmul.f32 %v975, %v975
  %v3409 = vmul.f32 %v1079, %v1079
  %v3410 = vmul.f32 %v1183, %v1183
  %v3411 = vmul.f32 %v1287, %v1287
  %v3412 = vmul.f32 %v1391, %v1391
  %v3413 = vmul.f32 %v1495, %v1495
  %v3414 = vmul.f32 %v1599, %v1599
  %v3415 = vmul.f32 %v1703, %v1703
  %v3416 = vsub.f32 %v3384, %v3400
  %v3417 = vsub.f32 %v3385, %v3401
  %v3418 = vsub.f32 %v3386, %v3402
  %v3419 = vsub.f32 %v3387, %v3403
  %v3420 = vsub.f32 %v3388, %v3404
  %v3421 = vsub.f32 %v3389, %v3405
  %v3422 = vsub.f32 %v3390, %v3406
  %v3423 = vsub.f32 %v3391, %v3407
  %v3424 = vsub.f32 %v3392, %v3408
  %v3425 = vsub.f32 %v3393, %v3409
  %v3426 = vsub.f32 %v3394, %v3410
  %v3427 = vsub.f32 %v3395, %v3411
  %v3428 = vsub.f32 %v3396, %v3412
  %v3429 = vsub.f32 %v3397, %v3413
  %v3430 = vsub.f32 %v3398, %v3414
  %v3431 = vsub.f32 %v3399, %v3415
  %v3432 = vmul.f32 %v3368, 2.0
  %v3433 = vmul.f32 %v3369, 2.0
  %v3434 = vmul.f32 %v3370, 2.0
  %v3435 = vmul.f32 %v3371, 2.0
  %v3436 = vmul.f32 %v3372, 2.0
  %v3437 = vmul.f32 %v3373, 2.0
  %v3438 = vmul.f32 %v3374, 2.0
  %v3439 = vmul.f32 %v3375, 2.0
  %v3440 = vmul.f32 %v3376, 2.0
  %v3441 = vmul.f32 %v3377, 2.0
  %v3442 = vmul.f32 %v3378, 2.0
  %v3443 = vmul.f32 %v3379, 2.0
  %v3444 = vmul.f32 %v3380, 2.0
  %v3445 = vmul.f32 %v3381, 2.0
  %v3446 = vmul.f32 %v3382, 2.0
  %v3447 = vmul.f32 %v3383, 2.0
  %v3448 = vmul.f32 %v3432, %v3416
  %v3449 = vmul.f32 %v3433, %v3417
  %v3450 = vmul.f32 %v3434, %v3418
  %v3451 = vmul.f32 %v3435, %v3419
  %v3452 = vmul.f32 %v3436, %v3420
  %v3453 = vmul.f32 %v3437, %v3421
  %v3454 = vmul.f32 %v3438, %v3422
  %v3455 = vmul.f32 %v3439, %v3423
  %v3456 = vmul.f32 %v3440, %v3424
  %v3457 = vmul.f32 %v3441, %v3425
  %v3458 = vmul.f32 %v3442, %v3426
  %v3459 = vmul.f32 %v3443, %v3427
  %v3460 = vmul.f32 %v3444, %v3428
  %v3461 = vmul.f32 %v3445, %v3429
  %v3462 = vmul.f32 %v3446, %v3430
  %v3463 = vmul.f32 %v3447, %v3431
  %v3464 = vmul.f32 %v3416, %v3416
  %v3465 = vmul.f32 %v3417, %v3417
  %v3466 = vmul.f32 %v3418, %v3418
  %v3467 = vmul.f32 %v3419, %v3419
  %v3468 = vmul.f32 %v3420, %v3420
  %v3469 = vmul.f32 %v3421, %v3421
  %v3470 = vmul.f32 %v3422, %v3422
  %v3471 = vmul.f32 %v3423, %v3423
  %v3472 = vmul.f32 %v3424, %v3424
  %v3473 = vmul.f32 %v3425, %v3425
  %v3474 = vmul.f32 %v3426, %v3426
  %v3475 = vmul.f32 %v3427, %v3427
  %v3476 = vmul.f32 %v3428, %v3428
  %v3477 = vmul.f32 %v3429, %v3429
  %v3478 = vmul.f32 %v3430, %v3430
  %v3479 = vmul.f32 %v3431, %v3431
  %v3480 = vmul.f32 %v3368, %v3368
  %v3481 = vmul.f32 %v3369, %v3369
  %v3482 = vmul.f32 %v3370, %v3370
  %v3483 = vmul.f32 %v3371, %v3371
  %v3484 = vmul.f32 %v3372, %v3372
  %v3485 = vmul.f32 %v3373, %v3373
  %v3486 = vmul.f32 %v3374, %v3374
  %v3487 = vmul.f32 %v3375, %v3375
  %v3488 = vmul.f32 %v3376, %v3376
  %v3489 = vmul.f32 %v3377, %v3377
  %v3490 = vmul.f32 %v3378, %v3378
  %v3491 = vmul.f32 %v3379, %v3379
  %v3492 = vmul.f32 %v3380, %v3380
  %v3493 = vmul.f32 %v3381, %v3381
  %v3494 = vmul.f32 %v3382, %v3382
  %v3495 = vmul.f32 %v3383, %v3383
  %v3496 = vsub.f32 %v3464, %v3480
  %v3497 = vsub.f32 %v3465, %v3481
  %v3498 = vsub.f32 %v3466, %v3482
  %v3499 = vsub.f32 %v3467, %v3483
  %v3500 = vsub.f32 %v3468, %v3484
  %v3501 = vsub.f32 %v3469, %v3485
  %v3502 = vsub.f32 %v3470, %v3486
  %v3503 = vsub.f32 %v3471, %v3487
  %v3504 = vsub.f32 %v3472, %v3488
  %v3505 = vsub.f32 %v3473, %v3489
  %v3506 = vsub.f32 %v3474, %v3490
  %v3507 = vsub.f32 %v3475, %v3491
  %v3508 = vsub.f32 %v3476, %v3492
  %v3509 = vsub.f32 %v3477, %v3493
  %v3510 = vsub.f32 %v3478, %v3494
  %v3511 = vsub.f32 %v3479, %v3495
  %v3512 = vmul.f32 %v3448, 2.0
  %v3513 = vmul.f32 %v3449, 2.0
  %v3514 = vmul.f32 %v3450, 2.0
  %v3515 = vmul.f32 %v3451, 2.0
  %v3516 = vmul.f32 %v3452, 2.0
  %v3517 = vmul.f32 %v3453, 2.0
  %v3518 = vmul.f32 %v3454, 2.0
  %v3519 = vmul.f32 %v3455, 2.0
  %v3520 = vmul.f32 %v3456, 2.0
  %v3521 = vmul.f32 %v3457, 2.0
  %v3522 = vmul.f32 %v3458, 2.0
  %v3523 = vmul.f32 %v3459, 2.0
  %v3524 = vmul.f32 %v3460, 2.0
  %v3525 = vmul.f32 %v3461, 2.0
  %v3526 = vmul.f32 %v3462, 2.0
  %v3527 = vmul.f32 %v3463, 2.0
  %v3528 = vmul.f32 %v3512, %v3496
  %v3529 = vmul.f32 %v3513, %v3497
  %v3530 = vmul.f32 %v3514, %v3498
  %v3531 = vmul.f32 %v3515, %v3499
  %v3532 = vmul.f32 %v3516, %v3500
  %v3533 = vmul.f32 %v3517, %v3501
  %v3534 = vmul.f32 %v3518, %v3502
  %v3535 = vmul.f32 %v3519, %v3503
  %v3536 = vmul.f32 %v3520, %v3504
  %v3537 = vmul.f32 %v3521, %v3505
  %v3538 = vmul.f32 %v3522, %v3506
  %v3539 = vmul.f32 %v3523, %v3507
  %v3540 = vmul.f32 %v3524, %v3508
  %v3541 = vmul.f32 %v3525, %v3509
  %v3542 = vmul.f32 %v3526, %v3510
  %v3543 = vmul.f32 %v3527, %v3511
  %v3544 = vmul.f32 %v3496, %v3496
  %v3545 = vmul.f32 %v3497, %v3497
  %v3546 = vmul.f32 %v3498, %v3498
  %v3547 = vmul.f32 %v3499, %v3499
  %v3548 = vmul.f32 %v3500, %v3500
  %v3549 = vmul.f32 %v3501, %v3501
  %v3550 = vmul.f32 %v3502, %v3502
  %v3551 = vmul.f32 %v3503, %v3503
  %v3552 = vmul.f32 %v3504, %v3504
  %v3553 = vmul.f32 %v3505, %v3505
  %v3554 = vmul.f32 %v3506, %v3506
  %v3555 = vmul.f32 %v3507, %v3507
  %v3556 = vmul.f32 %v3508, %v3508
  %v3557 = vmul.f32 %v3509, %v3509
  %v3558 = vmul.f32 %v3510, %v3510
  %v3559 = vmul.f32 %v3511, %v3511
  %v3560 = vmul.f32 %v3448, %v3448
  %v3561 = vmul.f32 %v3449, %v3449
  %v3562 = vmul.f32 %v3450, %v3450
  %v3563 = vmul.f32 %v3451, %v3451
  %v3564 = vmul.f32 %v3452, %v3452
  %v3565 = vmul.f32 %v3453, %v3453
  %v3566 = vmul.f32 %v3454, %v3454
  %v3567 = vmul.f32 %v3455, %v3455
  %v3568 = vmul.f32 %v3456, %v3456
  %v3569 = vmul.f32 %v3457, %v3457
  %v3570 = vmul.f32 %v3458, %v3458
  %v3571 = vmul.f32 %v3459, %v3459
  %v3572 = vmul.f32 %v3460, %v3460
  %v3573 = vmul.f32 %v3461, %v3461
  %v3574 = vmul.f32 %v3462, %v3462
  %v3575 = vmul.f32 %v3463, %v3463
  %v3576 = vsub.f32 %v3544, %v3560
  %v3577 = vsub.f32 %v3545, %v3561
  %v3578 = vsub.f32 %v3546, %v3562
  %v3579 = vsub.f32 %v3547, %v3563
  %v3580 = vsub.f32 %v3548, %v3564
  %v3581 = vsub.f32 %v3549, %v3565
  %v3582 = vsub.f32 %v3550, %v3566
  %v3583 = vsub.f32 %v3551, %v3567
  %v3584 = vsub.f32 %v3552, %v3568
  %v3585 = vsub.f32 %v3553, %v3569
  %v3586 = vsub.f32 %v3554, %v3570
  %v3587 = vsub.f32 %v3555, %v3571
  %v3588 = vsub.f32 %v3556, %v3572
  %v3589 = vsub.f32 %v3557, %v3573
  %v3590 = vsub.f32 %v3558, %v3574
  %v3591 = vsub.f32 %v3559, %v3575
  %3608 = vrot.lane.b32.xlu0 %v143, 32
  %v3609 = vpop.permute.xlu0 %3608
  %3610 = vrot.lane.b32.xlu0 %v247, 32
  %v3611 = vpop.permute.xlu0 %3610
  %3612 = vrot.lane.b32.xlu0 %v351, 32
  %v3613 = vpop.permute.xlu0 %3612
  %3614 = vrot.lane.b32.xlu0 %v455, 32
  %v3615 = vpop.permute.xlu0 %3614
  %3616 = vrot.lane.b32.xlu0 %v559, 32
  %v3617 = vpop.permute.xlu0 %3616
  %3618 = vrot.lane.b32.xlu0 %v663, 32
  %v3619 = vpop.permute.xlu0 %3618
  %3620 = vrot.lane.b32.xlu0 %v767, 32
  %v3621 = vpop.permute.xlu0 %3620
  %3622 = vrot.lane.b32.xlu0 %v871, 32
  %v3623 = vpop.permute.xlu0 %3622
  %3624 = vrot.lane.b32.xlu0 %v975, 32
  %v3625 = vpop.permute.xlu0 %3624
  %3626 = vrot.lane.b32.xlu0 %v1079, 32
  %v3627 = vpop.permute.xlu0 %3626
  %3628 = vrot.lane.b32.xlu0 %v1183, 32
  %v3629 = vpop.permute.xlu0 %3628
  %3630 = vrot.lane.b32.xlu0 %v1287, 32
  %v3631 = vpop.permute.xlu0 %3630
  %3632 = vrot.lane.b32.xlu0 %v1391, 32
  %v3633 = vpop.permute.xlu0 %3632
  %3634 = vrot.lane.b32.xlu0 %v1495, 32
  %v3635 = vpop.permute.xlu0 %3634
  %3636 = vrot.lane.b32.xlu0 %v1599, 32
  %v3637 = vpop.permute.xlu0 %3636
  %3638 = vrot.lane.b32.xlu0 %v1703, 32
  %v3639 = vpop.permute.xlu0 %3638
  %3672 = vrot.lane.b32.xlu0 %v1806, 64
  %v3673 = vpop.permute.xlu0 %3672
  %3674 = vrot.lane.b32.xlu0 %v1909, 64
  %v3675 = vpop.permute.xlu0 %3674
  %3676 = vrot.lane.b32.xlu0 %v2012, 64
  %v3677 = vpop.permute.xlu0 %3676
  %3678 = vrot.lane.b32.xlu0 %v2115, 64
  %v3679 = vpop.permute.xlu0 %3678
  %3680 = vrot.lane.b32.xlu0 %v2218, 64
  %v3681 = vpop.permute.xlu0 %3680
  %3682 = vrot.lane.b32.xlu0 %v2321, 64
  %v3683 = vpop.permute.xlu0 %3682
  %3684 = vrot.lane.b32.xlu0 %v2424, 64
  %v3685 = vpop.permute.xlu0 %3684
  %3686 = vrot.lane.b32.xlu0 %v2527, 64
  %v3687 = vpop.permute.xlu0 %3686
  %3688 = vrot.lane.b32.xlu0 %v2630, 64
  %v3689 = vpop.permute.xlu0 %3688
  %3690 = vrot.lane.b32.xlu0 %v2733, 64
  %v3691 = vpop.permute.xlu0 %3690
  %3692 = vrot.lane.b32.xlu0 %v2836, 64
  %v3693 = vpop.permute.xlu0 %3692
  %3694 = vrot.lane.b32.xlu0 %v2939, 64
  %v3695 = vpop.permute.xlu0 %3694
  %3696 = vrot.lane.b32.xlu0 %v3042, 64
  %v3697 = vpop.permute.xlu0 %3696
  %3698 = vrot.lane.b32.xlu0 %v3145, 64
  %v3699 = vpop.permute.xlu0 %3698
  %3700 = vrot.lane.b32.xlu0 %v3248, 64
  %v3701 = vpop.permute.xlu0 %3700
  %3702 = vrot.lane.b32.xlu0 %v3351, 64
  %v3703 = vpop.permute.xlu0 %3702
  %3736 = vrot.lane.b32.xlu0 %v3368, 96
  %v3737 = vpop.permute.xlu0 %3736
  %3738 = vrot.lane.b32.xlu0 %v3369, 96
  %v3739 = vpop.permute.xlu0 %3738
  %3740 = vrot.lane.b32.xlu0 %v3370, 96
  %v3741 = vpop.permute.xlu0 %3740
  %3742 = vrot.lane.b32.xlu0 %v3371, 96
  %v3743 = vpop.permute.xlu0 %3742
  %3744 = vrot.lane.b32.xlu0 %v3372, 96
  %v3745 = vpop.permute.xlu0 %3744
  %3746 = vrot.lane.b32.xlu0 %v3373, 96
  %v3747 = vpop.permute.xlu0 %3746
  %3748 = vrot.lane.b32.xlu0 %v3374, 96
  %v3749 = vpop.permute.xlu0 %3748
  %3750 = vrot.lane.b32.xlu0 %v3375, 96
  %v3751 = vpop.permute.xlu0 %3750
  %3752 = vrot.lane.b32.xlu0 %v3376, 96
  %v3753 = vpop.permute.xlu0 %3752
  %3754 = vrot.lane.b32.xlu0 %v3377, 96
  %v3755 = vpop.permute.xlu0 %3754
  %3756 = vrot.lane.b32.xlu0 %v3378, 96
  %v3757 = vpop.permute.xlu0 %3756
  %3758 = vrot.lane.b32.xlu0 %v3379, 96
  %v3759 = vpop.permute.xlu0 %3758
  %3760 = vrot.lane.b32.xlu0 %v3380, 96
  %v3761 = vpop.permute.xlu0 %3760
  %3762 = vrot.lane.b32.xlu0 %v3381, 96
  %v3763 = vpop.permute.xlu0 %3762
  %3764 = vrot.lane.b32.xlu0 %v3382, 96
  %v3765 = vpop.permute.xlu0 %3764
  %3766 = vrot.lane.b32.xlu0 %v3383, 96
  %v3767 = vpop.permute.xlu0 %3766
  %3800 = vrot.lane.b32.xlu0 %v3448, 32
  %v3801 = vpop.permute.xlu0 %3800
  %3802 = vrot.lane.b32.xlu0 %v3449, 32
  %v3803 = vpop.permute.xlu0 %3802
  %3804 = vrot.lane.b32.xlu0 %v3450, 32
  %v3805 = vpop.permute.xlu0 %3804
  %3806 = vrot.lane.b32.xlu0 %v3451, 32
  %v3807 = vpop.permute.xlu0 %3806
  %3808 = vrot.lane.b32.xlu0 %v3452, 32
  %v3809 = vpop.permute.xlu0 %3808
  %3810 = vrot.lane.b32.xlu0 %v3453, 32
  %v3811 = vpop.permute.xlu0 %3810
  %3812 = vrot.lane.b32.xlu0 %v3454, 32
  %v3813 = vpop.permute.xlu0 %3812
  %3814 = vrot.lane.b32.xlu0 %v3455, 32
  %v3815 = vpop.permute.xlu0 %3814
  %3816 = vrot.lane.b32.xlu0 %v3456, 32
  %v3817 = vpop.permute.xlu0 %3816
  %3818 = vrot.lane.b32.xlu0 %v3457, 32
  %v3819 = vpop.permute.xlu0 %3818
  %3820 = vrot.lane.b32.xlu0 %v3458, 32
  %v3821 = vpop.permute.xlu0 %3820
  %3822 = vrot.lane.b32.xlu0 %v3459, 32
  %v3823 = vpop.permute.xlu0 %3822
  %3824 = vrot.lane.b32.xlu0 %v3460, 32
  %v3825 = vpop.permute.xlu0 %3824
  %3826 = vrot.lane.b32.xlu0 %v3461, 32
  %v3827 = vpop.permute.xlu0 %3826
  %3828 = vrot.lane.b32.xlu0 %v3462, 32
  %v3829 = vpop.permute.xlu0 %3828
  %3830 = vrot.lane.b32.xlu0 %v3463, 32
  %v3831 = vpop.permute.xlu0 %3830
  %3864 = vrot.lane.b32.xlu0 %v3496, 64
  %v3865 = vpop.permute.xlu0 %3864
  %3866 = vrot.lane.b32.xlu0 %v3497, 64
  %v3867 = vpop.permute.xlu0 %3866
  %3868 = vrot.lane.b32.xlu0 %v3498, 64
  %v3869 = vpop.permute.xlu0 %3868
  %3870 = vrot.lane.b32.xlu0 %v3499, 64
  %v3871 = vpop.permute.xlu0 %3870
  %3872 = vrot.lane.b32.xlu0 %v3500, 64
  %v3873 = vpop.permute.xlu0 %3872
  %3874 = vrot.lane.b32.xlu0 %v3501, 64
  %v3875 = vpop.permute.xlu0 %3874
  %3876 = vrot.lane.b32.xlu0 %v3502, 64
  %v3877 = vpop.permute.xlu0 %3876
  %3878 = vrot.lane.b32.xlu0 %v3503, 64
  %v3879 = vpop.permute.xlu0 %3878
  %3880 = vrot.lane.b32.xlu0 %v3504, 64
  %v3881 = vpop.permute.xlu0 %3880
  %3882 = vrot.lane.b32.xlu0 %v3505, 64
  %v3883 = vpop.permute.xlu0 %3882
  %3884 = vrot.lane.b32.xlu0 %v3506, 64
  %v3885 = vpop.permute.xlu0 %3884
  %3886 = vrot.lane.b32.xlu0 %v3507, 64
  %v3887 = vpop.permute.xlu0 %3886
  %3888 = vrot.lane.b32.xlu0 %v3508, 64
  %v3889 = vpop.permute.xlu0 %3888
  %3890 = vrot.lane.b32.xlu0 %v3509, 64
  %v3891 = vpop.permute.xlu0 %3890
  %3892 = vrot.lane.b32.xlu0 %v3510, 64
  %v3893 = vpop.permute.xlu0 %3892
  %3894 = vrot.lane.b32.xlu0 %v3511, 64
  %v3895 = vpop.permute.xlu0 %3894
  %3928 = vrot.lane.b32.xlu0 %v3528, 96
  %v3929 = vpop.permute.xlu0 %3928
  %3930 = vrot.lane.b32.xlu0 %v3529, 96
  %v3931 = vpop.permute.xlu0 %3930
  %3932 = vrot.lane.b32.xlu0 %v3530, 96
  %v3933 = vpop.permute.xlu0 %3932
  %3934 = vrot.lane.b32.xlu0 %v3531, 96
  %v3935 = vpop.permute.xlu0 %3934
  %3936 = vrot.lane.b32.xlu0 %v3532, 96
  %v3937 = vpop.permute.xlu0 %3936
  %3938 = vrot.lane.b32.xlu0 %v3533, 96
  %v3939 = vpop.permute.xlu0 %3938
  %3940 = vrot.lane.b32.xlu0 %v3534, 96
  %v3941 = vpop.permute.xlu0 %3940
  %3942 = vrot.lane.b32.xlu0 %v3535, 96
  %v3943 = vpop.permute.xlu0 %3942
  %3944 = vrot.lane.b32.xlu0 %v3536, 96
  %v3945 = vpop.permute.xlu0 %3944
  %3946 = vrot.lane.b32.xlu0 %v3537, 96
  %v3947 = vpop.permute.xlu0 %3946
  %3948 = vrot.lane.b32.xlu0 %v3538, 96
  %v3949 = vpop.permute.xlu0 %3948
  %3950 = vrot.lane.b32.xlu0 %v3539, 96
  %v3951 = vpop.permute.xlu0 %3950
  %3952 = vrot.lane.b32.xlu0 %v3540, 96
  %v3953 = vpop.permute.xlu0 %3952
  %3954 = vrot.lane.b32.xlu0 %v3541, 96
  %v3955 = vpop.permute.xlu0 %3954
  %3956 = vrot.lane.b32.xlu0 %v3542, 96
  %v3957 = vpop.permute.xlu0 %3956
  %3958 = vrot.lane.b32.xlu0 %v3543, 96
  %v3959 = vpop.permute.xlu0 %3958
  %vm3976 = vcmask 261120
  %v3977 = vsel %vm3976, %v8, %v3609
  %v3978 = vsel %vm3976, %v9, %v3611
  %v3979 = vsel %vm3976, %v10, %v3613
  %v3980 = vsel %vm3976, %v11, %v3615
  %v3981 = vsel %vm3976, %v12, %v3617
  %v3982 = vsel %vm3976, %v13, %v3619
  %v3983 = vsel %vm3976, %v14, %v3621
  %v3984 = vsel %vm3976, %v15, %v3623
  %v3985 = vsel %vm3976, %v16, %v3625
  %v3986 = vsel %vm3976, %v17, %v3627
  %v3987 = vsel %vm3976, %v18, %v3629
  %v3988 = vsel %vm3976, %v19, %v3631
  %v3989 = vsel %vm3976, %v20, %v3633
  %v3990 = vsel %vm3976, %v21, %v3635
  %v3991 = vsel %vm3976, %v22, %v3637
  %v3992 = vsel %vm3976, %v23, %v3639
  %vm3993 = vcmask 523264
  %v3994 = vsel %vm3993, %v3977, %v3673
  %v3995 = vsel %vm3993, %v3978, %v3675
  %v3996 = vsel %vm3993, %v3979, %v3677
  %v3997 = vsel %vm3993, %v3980, %v3679
  %v3998 = vsel %vm3993, %v3981, %v3681
  %v3999 = vsel %vm3993, %v3982, %v3683
  %v4000 = vsel %vm3993, %v3983, %v3685
  %v4001 = vsel %vm3993, %v3984, %v3687
  %v4002 = vsel %vm3993, %v3985, %v3689
  %v4003 = vsel %vm3993, %v3986, %v3691
  %v4004 = vsel %vm3993, %v3987, %v3693
  %v4005 = vsel %vm3993, %v3988, %v3695
  %v4006 = vsel %vm3993, %v3989, %v3697
  %v4007 = vsel %vm3993, %v3990, %v3699
  %v4008 = vsel %vm3993, %v3991, %v3701
  %v4009 = vsel %vm3993, %v3992, %v3703
  %vm4010 = vcmask 785408
  %v4011 = vsel %vm4010, %v3994, %v3737
  %v4012 = vsel %vm4010, %v3995, %v3739
  %v4013 = vsel %vm4010, %v3996, %v3741
  %v4014 = vsel %vm4010, %v3997, %v3743
  %v4015 = vsel %vm4010, %v3998, %v3745
  %v4016 = vsel %vm4010, %v3999, %v3747
  %v4017 = vsel %vm4010, %v4000, %v3749
  %v4018 = vsel %vm4010, %v4001, %v3751
  %v4019 = vsel %vm4010, %v4002, %v3753
  %v4020 = vsel %vm4010, %v4003, %v3755
  %v4021 = vsel %vm4010, %v4004, %v3757
  %v4022 = vsel %vm4010, %v4005, %v3759
  %v4023 = vsel %vm4010, %v4006, %v3761
  %v4024 = vsel %vm4010, %v4007, %v3763
  %v4025 = vsel %vm4010, %v4008, %v3765
  %v4026 = vsel %vm4010, %v4009, %v3767
  %v4027 = vsel %vm3976, %v3416, %v3801
  %v4028 = vsel %vm3976, %v3417, %v3803
  %v4029 = vsel %vm3976, %v3418, %v3805
  %v4030 = vsel %vm3976, %v3419, %v3807
  %v4031 = vsel %vm3976, %v3420, %v3809
  %v4032 = vsel %vm3976, %v3421, %v3811
  %v4033 = vsel %vm3976, %v3422, %v3813
  %v4034 = vsel %vm3976, %v3423, %v3815
  %v4035 = vsel %vm3976, %v3424, %v3817
  %v4036 = vsel %vm3976, %v3425, %v3819
  %v4037 = vsel %vm3976, %v3426, %v3821
  %v4038 = vsel %vm3976, %v3427, %v3823
  %v4039 = vsel %vm3976, %v3428, %v3825
  %v4040 = vsel %vm3976, %v3429, %v3827
  %v4041 = vsel %vm3976, %v3430, %v3829
  %v4042 = vsel %vm3976, %v3431, %v3831
  %v4043 = vsel %vm3993, %v4027, %v3865
  %v4044 = vsel %vm3993, %v4028, %v3867
  %v4045 = vsel %vm3993, %v4029, %v3869
  %v4046 = vsel %vm3993, %v4030, %v3871
  %v4047 = vsel %vm3993, %v4031, %v3873
  %v4048 = vsel %vm3993, %v4032, %v3875
  %v4049 = vsel %vm3993, %v4033, %v3877
  %v4050 = vsel %vm3993, %v4034, %v3879
  %v4051 = vsel %vm3993, %v4035, %v3881
  %v4052 = vsel %vm3993, %v4036, %v3883
  %v4053 = vsel %vm3993, %v4037, %v3885
  %v4054 = vsel %vm3993, %v4038, %v3887
  %v4055 = vsel %vm3993, %v4039, %v3889
  %v4056 = vsel %vm3993, %v4040, %v3891
  %v4057 = vsel %vm3993, %v4041, %v3893
  %v4058 = vsel %vm3993, %v4042, %v3895
  %v4059 = vsel %vm4010, %v4043, %v3929
  %v4060 = vsel %vm4010, %v4044, %v3931
  %v4061 = vsel %vm4010, %v4045, %v3933
  %v4062 = vsel %vm4010, %v4046, %v3935
  %v4063 = vsel %vm4010, %v4047, %v3937
  %v4064 = vsel %vm4010, %v4048, %v3939
  %v4065 = vsel %vm4010, %v4049, %v3941
  %v4066 = vsel %vm4010, %v4050, %v3943
  %v4067 = vsel %vm4010, %v4051, %v3945
  %v4068 = vsel %vm4010, %v4052, %v3947
  %v4069 = vsel %vm4010, %v4053, %v3949
  %v4070 = vsel %vm4010, %v4054, %v3951
  %v4071 = vsel %vm4010, %v4055, %v3953
  %v4072 = vsel %vm4010, %v4056, %v3955
  %v4073 = vsel %vm4010, %v4057, %v3957
  %v4074 = vsel %vm4010, %v4058, %v3959
  %4075 = vst [vmem:[%s1] sm:$0xff] %v4011
  %4076 = vst [vmem:[%s1 + $0x8] sm:$0xff] %v4059
  %4077 = vst.msk [vmem:[%s1 + $0x10] sm:$0xff] %vm3976, %v3576
  %4078 = vst [vmem:[%s1 + $0x18] sm:$0xff] %v4012
  %4079 = vst [vmem:[%s1 + $0x20] sm:$0xff] %v4060
  %4080 = vst.msk [vmem:[%s1 + $0x28] sm:$0xff] %vm3976, %v3577
  %4081 = vst [vmem:[%s1 + $0x30] sm:$0xff] %v4013
  %4082 = vst [vmem:[%s1 + $0x38] sm:$0xff] %v4061
  %4083 = vst.msk [vmem:[%s1 + $0x40] sm:$0xff] %vm3976, %v3578
  %4084 = vst [vmem:[%s1 + $0x48] sm:$0xff] %v4014
  %4085 = vst [vmem:[%s1 + $0x50] sm:$0xff] %v4062
  %4086 = vst.msk [vmem:[%s1 + $0x58] sm:$0xff] %vm3976, %v3579
  %4087 = vst [vmem:[%s1 + $0x60] sm:$0xff] %v4015
  %4088 = vst [vmem:[%s1 + $0x68] sm:$0xff] %v4063
  %4089 = vst.msk [vmem:[%s1 + $0x70] sm:$0xff] %vm3976, %v3580
  %4090 = vst [vmem:[%s1 + $0x78] sm:$0xff] %v4016
  %4091 = vst [vmem:[%s1 + $0x80] sm:$0xff] %v4064
  %4092 = vst.msk [vmem:[%s1 + $0x88] sm:$0xff] %vm3976, %v3581
  %4093 = vst [vmem:[%s1 + $0x90] sm:$0xff] %v4017
  %4094 = vst [vmem:[%s1 + $0x98] sm:$0xff] %v4065
  %4095 = vst.msk [vmem:[%s1 + $0xa0] sm:$0xff] %vm3976, %v3582
  %4096 = vst [vmem:[%s1 + $0xa8] sm:$0xff] %v4018
  %4097 = vst [vmem:[%s1 + $0xb0] sm:$0xff] %v4066
  %4098 = vst.msk [vmem:[%s1 + $0xb8] sm:$0xff] %vm3976, %v3583
  %4099 = vst [vmem:[%s1 + $0xc0] sm:$0xff] %v4019
  %4100 = vst [vmem:[%s1 + $0xc8] sm:$0xff] %v4067
  %4101 = vst.msk [vmem:[%s1 + $0xd0] sm:$0xff] %vm3976, %v3584
  %4102 = vst [vmem:[%s1 + $0xd8] sm:$0xff] %v4020
  %4103 = vst [vmem:[%s1 + $0xe0] sm:$0xff] %v4068
  %4104 = vst.msk [vmem:[%s1 + $0xe8] sm:$0xff] %vm3976, %v3585
  %4105 = vst [vmem:[%s1 + $0xf0] sm:$0xff] %v4021
  %4106 = vst [vmem:[%s1 + $0xf8] sm:$0xff] %v4069
  %4107 = vst.msk [vmem:[%s1 + $0x100] sm:$0xff] %vm3976, %v3586
  %4108 = vst [vmem:[%s1 + $0x108] sm:$0xff] %v4022
  %4109 = vst [vmem:[%s1 + $0x110] sm:$0xff] %v4070
  %4110 = vst.msk [vmem:[%s1 + $0x118] sm:$0xff] %vm3976, %v3587
  %4111 = vst [vmem:[%s1 + $0x120] sm:$0xff] %v4023
  %4112 = vst [vmem:[%s1 + $0x128] sm:$0xff] %v4071
  %4113 = vst.msk [vmem:[%s1 + $0x130] sm:$0xff] %vm3976, %v3588
  %4114 = vst [vmem:[%s1 + $0x138] sm:$0xff] %v4024
  %4115 = vst [vmem:[%s1 + $0x140] sm:$0xff] %v4072
  %4116 = vst.msk [vmem:[%s1 + $0x148] sm:$0xff] %vm3976, %v3589
  %4117 = vst [vmem:[%s1 + $0x150] sm:$0xff] %v4025
  %4118 = vst [vmem:[%s1 + $0x158] sm:$0xff] %v4073
  %4119 = vst.msk [vmem:[%s1 + $0x160] sm:$0xff] %vm3976, %v3590
  %4120 = vst [vmem:[%s1 + $0x168] sm:$0xff] %v4026
  %4121 = vst [vmem:[%s1 + $0x170] sm:$0xff] %v4074
  %4122 = vst.msk [vmem:[%s1 + $0x178] sm:$0xff] %vm3976, %v3591
  // Predicated region
  $region6: #{tpu_custom_call.1} parent=0 // pred_check
    _
  $region7: #{tpu_custom_call.1} parent=0 // pred_check_branch
    %4124 = sbr.rel (0) target = $region9
  $region8: #{tpu_custom_call.1} parent=0 // pred_region
    _
  $region9: #{tpu_custom_call.1} parent=0 // pred_fallthru
    _
  // Predicated region
  $region10: #{tpu_custom_call.1} parent=0 // pred_check
    _
  $region11: #{tpu_custom_call.1} parent=0 // pred_check_branch
    %4126 = sbr.rel (0) target = $region13
  $region12: #{tpu_custom_call.1} parent=0 // pred_region
    _
  $region13: #{tpu_custom_call.1} parent=0 // pred_fallthru
    _

</llo_original>
